<compile_context>
chip_gen: v7x
topology: tpu7x:2x2x1
jax: 0.10.0
libtpu: 0.0.40
codegen_flags: <defaults>
</compile_context>

<pallas_src>
import functools

import jax
import jax.numpy as jnp
from jax import lax
from jax.experimental import pallas as pl
from jax.experimental.pallas import tpu as pltpu

EPS = 1e-5  # PyTorch BatchNorm2d default eps


# ---------------------------------------------------------------------------
# BlockSpec / compiler-param helpers
# ---------------------------------------------------------------------------

def _cparams():
    return pltpu.CompilerParams(
        dimension_semantics=("parallel",),       # batch axis -> both TCs on v7x
        vmem_limit_bytes=32 * 1024 * 1024)


def _batched_spec(shape):
    """One image per grid step along the leading axis, full extent elsewhere."""
    nd = len(shape)
    return pl.BlockSpec((1,) + tuple(shape[1:]),
                        lambda n, _nd=nd: (n,) + (0,) * (_nd - 1))


def _shared_spec(shape):
    """Whole (small) array visible to every grid step (weights, scales)."""
    nd = len(shape)
    return pl.BlockSpec(tuple(shape), lambda n, _nd=nd: (0,) * _nd)


# ---------------------------------------------------------------------------
# Pallas kernels
# ---------------------------------------------------------------------------

def _stats_kernel(x_ref, sum_ref, sq_ref):
    """Per-image partial sum / sum-of-squares over rows of a (M, C) tile."""
    v = x_ref[0]
    sum_ref[0] = jnp.sum(v, axis=0, keepdims=True)
    sq_ref[0] = jnp.sum(v * v, axis=0, keepdims=True)


def _conv3x3_kernel(xph_ref, w_ref, y_ref, sum_ref, sq_ref,
                    *, stride, Ho, Wo, Cin, Co):
    """3x3 conv (BN1 already folded into the padded input) as 9 in-VMEM shifted
    matmuls (bf16 operands, f32 accumulation) + fused BN2 partial statistics."""
    M = Ho * Wo
    acc = jnp.zeros((M, Co), jnp.float32)
    for kh in range(3):
        for kw in range(3):
            p, q = kh % stride, kw % stride          # phase of this tap
            ho, wo = kh // stride, kw // stride      # static offset inside the phase
            xt = xph_ref[0, p, q, ho:ho + Ho, wo:wo + Wo, :]      # (Ho, Wo, Cin) f32
            lhs = xt.reshape(M, Cin).astype(jnp.bfloat16)         # bf16 MXU operand
            acc = acc + jnp.dot(lhs, w_ref[kh * 3 + kw],
                                preferred_element_type=jnp.float32)
    y_ref[0] = acc
    sum_ref[0] = jnp.sum(acc, axis=0, keepdims=True)
    sq_ref[0] = jnp.sum(acc * acc, axis=0, keepdims=True)


def _bn_relu_stats_kernel(y_ref, s_ref, t_ref, o_ref, sum_ref, sq_ref):
    """Folded-BN2 affine + ReLU; also emits partial stats of the result, which are
    the next CNNBlock's BN1 statistics (saves a standalone stats pass)."""
    a = jnp.maximum(y_ref[0] * s_ref[...] + t_ref[...], 0.0)
    o_ref[0] = a
    sum_ref[0] = jnp.sum(a, axis=0, keepdims=True)
    sq_ref[0] = jnp.sum(a * a, axis=0, keepdims=True)


def _bn_relu_downscale_add_kernel(y_ref, s_ref, t_ref, xd_ref, wd_ref, bd_ref, o_ref):
    """Folded-BN2 affine + ReLU with the 1x1-stride-s downscale conv + bias +
    residual add fused into the epilogue (no extra HBM round trip of `out`)."""
    a = jnp.maximum(y_ref[0] * s_ref[...] + t_ref[...], 0.0)
    r = jnp.dot(xd_ref[0], wd_ref[...], preferred_element_type=jnp.float32)
    o_ref[0] = a + r + bd_ref[...]


# ---------------------------------------------------------------------------
# pallas_call wrappers
# ---------------------------------------------------------------------------

def pallas_channel_stats(x3d):
    N, M, C = x3d.shape
    return pl.pallas_call(
        _stats_kernel,
        out_shape=(jax.ShapeDtypeStruct((N, 1, C), jnp.float32),
                   jax.ShapeDtypeStruct((N, 1, C), jnp.float32)),
        grid=(N,),
        in_specs=[_batched_spec(x3d.shape)],
        out_specs=(_batched_spec((N, 1, C)), _batched_spec((N, 1, C))),
        compiler_params=_cparams(),
    )(x3d)


def pallas_conv3x3(xph, w_taps, Ho, Wo, stride):
    N = xph.shape[0]
    Cin, Co = int(w_taps.shape[1]), int(w_taps.shape[2])
    M = Ho * Wo
    kern = functools.partial(_conv3x3_kernel, stride=stride, Ho=Ho, Wo=Wo,
                             Cin=Cin, Co=Co)
    return pl.pallas_call(
        kern,
        out_shape=(jax.ShapeDtypeStruct((N, M, Co), jnp.float32),
                   jax.ShapeDtypeStruct((N, 1, Co), jnp.float32),
                   jax.ShapeDtypeStruct((N, 1, Co), jnp.float32)),
        grid=(N,),
        in_specs=[_batched_spec(xph.shape), _shared_spec(w_taps.shape)],
        out_specs=(_batched_spec((N, M, Co)),
                   _batched_spec((N, 1, Co)),
                   _batched_spec((N, 1, Co))),
        compiler_params=_cparams(),
    )(xph, w_taps)


def pallas_bn_relu_stats(y, scale, shift):
    N, M, Co = y.shape
    return pl.pallas_call(
        _bn_relu_stats_kernel,
        out_shape=(jax.ShapeDtypeStruct((N, M, Co), jnp.float32),
                   jax.ShapeDtypeStruct((N, 1, Co), jnp.float32),
                   jax.ShapeDtypeStruct((N, 1, Co), jnp.float32)),
        grid=(N,),
        in_specs=[_batched_spec(y.shape), _shared_spec(scale.shape),
                  _shared_spec(shift.shape)],
        out_specs=(_batched_spec((N, M, Co)),
                   _batched_spec((N, 1, Co)),
                   _batched_spec((N, 1, Co))),
        compiler_params=_cparams(),
    )(y, scale, shift)


def pallas_bn_relu_downscale_add(y, scale, shift, xd, wd_mat, bd):
    N, M, Co = y.shape
    return pl.pallas_call(
        _bn_relu_downscale_add_kernel,
        out_shape=jax.ShapeDtypeStruct((N, M, Co), jnp.float32),
        grid=(N,),
        in_specs=[_batched_spec(y.shape), _shared_spec(scale.shape),
                  _shared_spec(shift.shape), _batched_spec(xd.shape),
                  _shared_spec(wd_mat.shape), _shared_spec(bd.shape)],
        out_specs=_batched_spec((N, M, Co)),
        compiler_params=_cparams(),
    )(y, scale, shift, xd, wd_mat, bd)


# ---------------------------------------------------------------------------
# JAX glue: BN folding, padding, phase split, ResBlock forward
# ---------------------------------------------------------------------------

def _reduce_stats(psum, psq, count):
    mean = jnp.sum(psum, axis=0) / count                   # (1, C)
    ex2 = jnp.sum(psq, axis=0) / count
    var = jnp.maximum(ex2 - mean * mean, 0.0)              # single-pass biased variance
    return mean, var


def _bn_scale_shift(mean, var, gamma, beta):
    s = gamma * lax.rsqrt(var + EPS)
    return s, beta - mean * s


def _prep_conv_input(x_nhwc, s_aff, t_aff, stride):
    """Apply the folded BN1 affine (fused by XLA into the pad producer -> no extra HBM
    pass), zero-pad like the conv would pad BN1(x), and split into stride phases so the
    conv kernel only needs static, unstrided slices of a VMEM-resident tile."""
    xbn = x_nhwc * s_aff.reshape(1, 1, 1, -1) + t_aff.reshape(1, 1, 1, -1)
    xpad = jnp.pad(xbn, ((0, 0), (1, 1), (1, 1), (0, 0)))
    N, Hp, Wp, C = xpad.shape
    Hq = ((Hp + stride - 1) // stride) * stride
    Wq = ((Wp + stride - 1) // stride) * stride
    xpad = jnp.pad(xpad, ((0, 0), (0, Hq - Hp), (0, Wq - Wp), (0, 0)))
    x6 = xpad.reshape(N, Hq // stride, stride, Wq // stride, stride, C)
    return x6.transpose(0, 2, 4, 1, 3, 5)                  # (N, s, s, Hph, Wph, C) f32


def res_block_forward(x_nhwc, params, stride):
    N, H, W, Cin = x_nhwc.shape
    p1, p2 = params["conv1"], params["conv2"]
    Co = int(p1["w_taps"].shape[-1])
    Ho = (H - 1) // stride + 1
    Wo = (W - 1) // stride + 1
    M = Ho * Wo

    # BN1 statistics of the raw input (the only standalone stats pass in the pipeline).
    xsum, xsq = pallas_channel_stats(x_nhwc.reshape(N, H * W, Cin))

    # --- CNNBlock 1: conv3x3(stride) with BN1 folded, BN2 stats fused --------------
    m, v = _reduce_stats(xsum, xsq, N * H * W)
    s1, t1 = _bn_scale_shift(m, v, p1["g1"], p1["b1"])
    xph = _prep_conv_input(x_nhwc, s1, t1, stride)
    y1, y1s, y1q = pallas_conv3x3(xph, p1["w_taps"], Ho, Wo, stride)
    m, v = _reduce_stats(y1s, y1q, N * M)
    s2, t2 = _bn_scale_shift(m, v, p1["g2"], p1["b2"])
    a1, a1s, a1q = pallas_bn_relu_stats(y1, s2, t2)        # epilogue also feeds block 2's BN1

    # --- CNNBlock 2: conv3x3(stride=1); epilogue fused with downscale + residual ---
    m, v = _reduce_stats(a1s, a1q, N * M)
    s3, t3 = _bn_scale_shift(m, v, p2["g1"], p2["b1"])
    aph = _prep_conv_input(a1.reshape(N, Ho, Wo, Co), s3, t3, 1)
    y2, y2s, y2q = pallas_conv3x3(aph, p2["w_taps"], Ho, Wo, 1)
    m, v = _reduce_stats(y2s, y2q, N * M)
    s4, t4 = _bn_scale_shift(m, v, p2["g2"], p2["b2"])

    xd = x_nhwc[:, ::stride, ::stride, :].reshape(N, M, Cin).astype(jnp.bfloat16)
    out = pallas_bn_relu_downscale_add(y2, s4, t4, xd, params["wd_mat"], params["bd"])
    return out.reshape(N, Ho, Wo, Co)


def init_params(key, cin, cout):
    k1, k2, k3, k4 = jax.random.split(key, 4)

    def cnn_block_params(k, ci, co):
        kw_, kg1, kb1, kg2, kb2 = jax.random.split(k, 5)
        w = jax.random.normal(kw_, (co, ci, 3, 3), jnp.float32) * 0.1   # torch OIHW
        return dict(
            w_oihw=w,
            # tap-major (kh, kw) weight matrices, bf16 for the MXU
            w_taps=jnp.transpose(w, (2, 3, 1, 0)).reshape(9, ci, co).astype(jnp.bfloat16),
            g1=jax.random.uniform(kg1, (1, ci), jnp.float32, 0.75, 1.25),
            b1=jax.random.normal(kb1, (1, ci), jnp.float32) * 0.1,
            g2=jax.random.uniform(kg2, (1, co), jnp.float32, 0.75, 1.25),
            b2=jax.random.normal(kb2, (1, co), jnp.float32) * 0.1,
        )

    wd = jax.random.normal(k3, (cout, cin, 1, 1), jnp.float32) * 0.1    # downscale (has bias)
    bd = jax.random.normal(k4, (1, cout), jnp.float32) * 0.1
    return dict(
        conv1=cnn_block_params(k1, cin, cout),
        conv2=cnn_block_params(k2, cout, cout),
        wd_oihw=wd,
        wd_mat=wd[:, :, 0, 0].T.astype(jnp.bfloat16),
        bd=bd,
    )


# ---------------------------------------------------------------------------
# pure-JAX f32 reference (same math, via lax.conv)
# ---------------------------------------------------------------------------

def _ref_bn(x, g, b):
    m = jnp.mean(x, axis=(0, 1, 2), keepdims=True)
    v = jnp.mean((x - m) ** 2, axis=(0, 1, 2), keepdims=True)
    return (x - m) * lax.rsqrt(v + EPS) * g.reshape(1, 1, 1, -1) + b.reshape(1, 1, 1, -1)


def _ref_conv(x, w_oihw, stride, padding):
    return lax.conv_general_dilated(
        x, w_oihw, (stride, stride), [(padding, padding)] * 2,
        dimension_numbers=("NHWC", "OIHW", "NHWC"),
        precision=lax.Precision.HIGHEST)


def ref_res_block(x, params, stride):
    def blk(xx, p, s):
        y = _ref_conv(_ref_bn(xx, p["g1"], p["b1"]), p["w_oihw"], s, 1)
        return jnp.maximum(_ref_bn(y, p["g2"], p["b2"]), 0.0)

    out = blk(x, params["conv1"], stride)
    out = blk(out, params["conv2"], 1)
    xd = _ref_conv(x, params["wd_oihw"], stride, 0) + params["bd"].reshape(1, 1, 1, -1)
    return out + xd


if __name__ == "__main__":
    key = jax.random.PRNGKey(0)
    kx, kp = jax.random.split(key)

    N, Cin, H, W = 2, 4, 16, 16
    Cout, stride = 8, 2

    x_nchw = jax.random.normal(kx, (N, Cin, H, W), jnp.float32)   # PyTorch layout
    params = init_params(kp, Cin, Cout)

    x_nhwc = jnp.transpose(x_nchw, (0, 2, 3, 1))
    fwd = jax.jit(res_block_forward, static_argnums=2)
    out_nhwc = fwd(x_nhwc, params, stride)
    out_nchw = jnp.transpose(out_nhwc, (0, 3, 1, 2))              # back to NCHW
    jax.block_until_ready(out_nchw)

    # sanity check against a pure-f32 XLA reference of the same forward math
    ref = jnp.transpose(ref_res_block(x_nhwc, params, stride), (0, 3, 1, 2))
    assert out_nchw.shape == (N, Cout, H // stride, W // stride)
    err = float(jnp.max(jnp.abs(out_nchw - ref)))
    # bf16 MXU operands (with f32 accumulation) dominate the tolerance
    assert err < 1e-1, f"mismatch vs reference: {err}"

    print("KERNEL_OK")
</pallas_src>

<mosaic_0001>
module attributes {stable_mosaic.version = 11 : i64} {
  func.func @_stats_kernel(%arg0: i32, %arg1: memref<1x256x4xf32, #tpu.memory_space<vmem>>, %arg2: memref<1x1x4xf32, #tpu.memory_space<vmem>>, %arg3: memref<1x1x4xf32, #tpu.memory_space<vmem>>) attributes {dimension_semantics = [#tpu.dimension_semantics<parallel>], iteration_bounds = array<i64: 2>, scalar_prefetch = 0 : i64, scratch_operands = 0 : i64, tpu.core_type = #tpu.core_type<tc>, window_params = [{transform_indices = @transform_0, window_bounds = array<i64: 1, 256, 4>}, {transform_indices = @transform_1, window_bounds = array<i64: 1, 1, 4>}, {transform_indices = @transform_2, window_bounds = array<i64: 1, 1, 4>}]} {
    %c0 = arith.constant 0 : index
    %c0_0 = arith.constant 0 : index
    %c0_1 = arith.constant 0 : index
    %0 = vector.load %arg1[%c0, %c0_0, %c0_1] : memref<1x256x4xf32, #tpu.memory_space<vmem>>, vector<1x256x4xf32>
    %1 = vector.shape_cast %0 : vector<1x256x4xf32> to vector<256x4xf32>
    %cst = arith.constant dense<0.000000e+00> : vector<4xf32>
    %2 = vector.multi_reduction <add>, %1, %cst [0] : vector<256x4xf32> to vector<4xf32>
    %3 = vector.shape_cast %2 : vector<4xf32> to vector<1x4xf32>
    %c0_2 = arith.constant 0 : index
    %c0_3 = arith.constant 0 : index
    %c0_4 = arith.constant 0 : index
    %4 = vector.load %arg2[%c0_2, %c0_3, %c0_4] : memref<1x1x4xf32, #tpu.memory_space<vmem>>, vector<1x1x4xf32>
    %5 = vector.shape_cast %4 : vector<1x1x4xf32> to vector<1x4xf32>
    %6 = vector.shape_cast %3 : vector<1x4xf32> to vector<1x1x4xf32>
    tpu.vector_store %arg2[%c0_2, %c0_3, %c0_4], %6 {strides = array<i32>} : memref<1x1x4xf32, #tpu.memory_space<vmem>>, vector<1x1x4xf32>,
    %7 = arith.mulf %1, %1 : vector<256x4xf32>
    %cst_5 = arith.constant dense<0.000000e+00> : vector<4xf32>
    %8 = vector.multi_reduction <add>, %7, %cst_5 [0] : vector<256x4xf32> to vector<4xf32>
    %9 = vector.shape_cast %8 : vector<4xf32> to vector<1x4xf32>
    %c0_6 = arith.constant 0 : index
    %c0_7 = arith.constant 0 : index
    %c0_8 = arith.constant 0 : index
    %10 = vector.load %arg3[%c0_6, %c0_7, %c0_8] : memref<1x1x4xf32, #tpu.memory_space<vmem>>, vector<1x1x4xf32>
    %11 = vector.shape_cast %10 : vector<1x1x4xf32> to vector<1x4xf32>
    %12 = vector.shape_cast %9 : vector<1x4xf32> to vector<1x1x4xf32>
    tpu.vector_store %arg3[%c0_6, %c0_7, %c0_8], %12 {strides = array<i32>} : memref<1x1x4xf32, #tpu.memory_space<vmem>>, vector<1x1x4xf32>,
    return
  }
  func.func @transform_0(%arg0: i32) -> (i32, i32, i32) {
    %c0_i32 = arith.constant 0 : i32
    %c0_i32_0 = arith.constant 0 : i32
    %c0_i32_1 = arith.constant 0 : i32
    return %arg0, %c0_i32, %c0_i32_0 : i32, i32, i32
  }
  func.func @transform_1(%arg0: i32) -> (i32, i32, i32) {
    %c0_i32 = arith.constant 0 : i32
    %c0_i32_0 = arith.constant 0 : i32
    %c0_i32_1 = arith.constant 0 : i32
    return %arg0, %c0_i32, %c0_i32_0 : i32, i32, i32
  }
  func.func @transform_2(%arg0: i32) -> (i32, i32, i32) {
    %c0_i32 = arith.constant 0 : i32
    %c0_i32_0 = arith.constant 0 : i32
    %c0_i32_1 = arith.constant 0 : i32
    return %arg0, %c0_i32, %c0_i32_0 : i32, i32, i32
  }
}

module attributes {stable_mosaic.version = 11 : i64} {
  func.func @_conv3x3_kernel(%arg0: i32, %arg1: memref<1x2x2x9x9x4xf32, #tpu.memory_space<vmem>>, %arg2: memref<9x4x8xbf16, #tpu.memory_space<vmem>>, %arg3: memref<1x64x8xf32, #tpu.memory_space<vmem>>, %arg4: memref<1x1x8xf32, #tpu.memory_space<vmem>>, %arg5: memref<1x1x8xf32, #tpu.memory_space<vmem>>) attributes {dimension_semantics = [#tpu.dimension_semantics<parallel>], iteration_bounds = array<i64: 2>, scalar_prefetch = 0 : i64, scratch_operands = 0 : i64, tpu.core_type = #tpu.core_type<tc>, window_params = [{transform_indices = @transform_0, window_bounds = array<i64: 1, 2, 2, 9, 9, 4>}, {pipeline_mode = #tpu.pipeline_mode<synchronous>, transform_indices = @transform_1, window_bounds = array<i64: 9, 4, 8>}, {transform_indices = @transform_2, window_bounds = array<i64: 1, 64, 8>}, {transform_indices = @transform_3, window_bounds = array<i64: 1, 1, 8>}, {transform_indices = @transform_4, window_bounds = array<i64: 1, 1, 8>}]} {
    %cst = arith.constant 0.000000e+00 : f32
    %0 = vector.broadcast %cst : f32 to vector<64x8xf32>
    %c0 = arith.constant 0 : index
    %c0_0 = arith.constant 0 : index
    %c0_1 = arith.constant 0 : index
    %c0_2 = arith.constant 0 : index
    %c0_3 = arith.constant 0 : index
    %c0_4 = arith.constant 0 : index
    %1 = vector.load %arg1[%c0, %c0_0, %c0_1, %c0_2, %c0_3, %c0_4] : memref<1x2x2x9x9x4xf32, #tpu.memory_space<vmem>>, vector<1x1x1x8x8x4xf32>
    %2 = vector.shape_cast %1 : vector<1x1x1x8x8x4xf32> to vector<8x8x4xf32>
    %3 = vector.shape_cast %2 : vector<8x8x4xf32> to vector<64x4xf32>
    %4 = arith.truncf %3 : vector<64x4xf32> to vector<64x4xbf16>
    %c0_5 = arith.constant 0 : index
    %c0_6 = arith.constant 0 : index
    %c0_7 = arith.constant 0 : index
    %5 = vector.load %arg2[%c0_5, %c0_6, %c0_7] : memref<9x4x8xbf16, #tpu.memory_space<vmem>>, vector<1x4x8xbf16>
    %6 = vector.shape_cast %5 : vector<1x4x8xbf16> to vector<4x8xbf16>
    %cst_8 = arith.constant dense<0.000000e+00> : vector<64x8xf32>
    %7 = tpu.matmul %4, %6, %cst_8 {dimension_numbers = #tpu.dot_dimension_numbers<[1], [0], [0], [1], [0, 0, 1, 1], [], []>} : vector<64x4xbf16>, vector<4x8xbf16>, vector<64x8xf32> -> vector<64x8xf32>
    %8 = arith.addf %0, %7 : vector<64x8xf32>
    %c0_9 = arith.constant 0 : index
    %c0_10 = arith.constant 0 : index
    %c1 = arith.constant 1 : index
    %c0_11 = arith.constant 0 : index
    %c0_12 = arith.constant 0 : index
    %c0_13 = arith.constant 0 : index
    %9 = vector.load %arg1[%c0_9, %c0_10, %c1, %c0_11, %c0_12, %c0_13] : memref<1x2x2x9x9x4xf32, #tpu.memory_space<vmem>>, vector<1x1x1x8x8x4xf32>
    %10 = vector.shape_cast %9 : vector<1x1x1x8x8x4xf32> to vector<8x8x4xf32>
    %11 = vector.shape_cast %10 : vector<8x8x4xf32> to vector<64x4xf32>
    %12 = arith.truncf %11 : vector<64x4xf32> to vector<64x4xbf16>
    %c1_14 = arith.constant 1 : index
    %c0_15 = arith.constant 0 : index
    %c0_16 = arith.constant 0 : index
    %13 = vector.load %arg2[%c1_14, %c0_15, %c0_16] : memref<9x4x8xbf16, #tpu.memory_space<vmem>>, vector<1x4x8xbf16>
    %14 = vector.shape_cast %13 : vector<1x4x8xbf16> to vector<4x8xbf16>
    %cst_17 = arith.constant dense<0.000000e+00> : vector<64x8xf32>
    %15 = tpu.matmul %12, %14, %cst_17 {dimension_numbers = #tpu.dot_dimension_numbers<[1], [0], [0], [1], [0, 0, 1, 1], [], []>} : vector<64x4xbf16>, vector<4x8xbf16>, vector<64x8xf32> -> vector<64x8xf32>
    %16 = arith.addf %8, %15 : vector<64x8xf32>
    %c0_18 = arith.constant 0 : index
    %c0_19 = arith.constant 0 : index
    %c0_20 = arith.constant 0 : index
    %c0_21 = arith.constant 0 : index
    %c1_22 = arith.constant 1 : index
    %c0_23 = arith.constant 0 : index
    %17 = vector.load %arg1[%c0_18, %c0_19, %c0_20, %c0_21, %c1_22, %c0_23] : memref<1x2x2x9x9x4xf32, #tpu.memory_space<vmem>>, vector<1x1x1x8x8x4xf32>
    %18 = vector.shape_cast %17 : vector<1x1x1x8x8x4xf32> to vector<8x8x4xf32>
    %19 = vector.shape_cast %18 : vector<8x8x4xf32> to vector<64x4xf32>
    %20 = arith.truncf %19 : vector<64x4xf32> to vector<64x4xbf16>
    %c2 = arith.constant 2 : index
    %c0_24 = arith.constant 0 : index
    %c0_25 = arith.constant 0 : index
    %21 = vector.load %arg2[%c2, %c0_24, %c0_25] : memref<9x4x8xbf16, #tpu.memory_space<vmem>>, vector<1x4x8xbf16>
    %22 = vector.shape_cast %21 : vector<1x4x8xbf16> to vector<4x8xbf16>
    %cst_26 = arith.constant dense<0.000000e+00> : vector<64x8xf32>
    %23 = tpu.matmul %20, %22, %cst_26 {dimension_numbers = #tpu.dot_dimension_numbers<[1], [0], [0], [1], [0, 0, 1, 1], [], []>} : vector<64x4xbf16>, vector<4x8xbf16>, vector<64x8xf32> -> vector<64x8xf32>
    %24 = arith.addf %16, %23 : vector<64x8xf32>
    %c0_27 = arith.constant 0 : index
    %c1_28 = arith.constant 1 : index
    %c0_29 = arith.constant 0 : index
    %c0_30 = arith.constant 0 : index
    %c0_31 = arith.constant 0 : index
    %c0_32 = arith.constant 0 : index
    %25 = vector.load %arg1[%c0_27, %c1_28, %c0_29, %c0_30, %c0_31, %c0_32] : memref<1x2x2x9x9x4xf32, #tpu.memory_space<vmem>>, vector<1x1x1x8x8x4xf32>
    %26 = vector.shape_cast %25 : vector<1x1x1x8x8x4xf32> to vector<8x8x4xf32>
    %27 = vector.shape_cast %26 : vector<8x8x4xf32> to vector<64x4xf32>
    %28 = arith.truncf %27 : vector<64x4xf32> to vector<64x4xbf16>
    %c3 = arith.constant 3 : index
    %c0_33 = arith.constant 0 : index
    %c0_34 = arith.constant 0 : index
    %29 = vector.load %arg2[%c3, %c0_33, %c0_34] : memref<9x4x8xbf16, #tpu.memory_space<vmem>>, vector<1x4x8xbf16>
    %30 = vector.shape_cast %29 : vector<1x4x8xbf16> to vector<4x8xbf16>
    %cst_35 = arith.constant dense<0.000000e+00> : vector<64x8xf32>
    %31 = tpu.matmul %28, %30, %cst_35 {dimension_numbers = #tpu.dot_dimension_numbers<[1], [0], [0], [1], [0, 0, 1, 1], [], []>} : vector<64x4xbf16>, vector<4x8xbf16>, vector<64x8xf32> -> vector<64x8xf32>
    %32 = arith.addf %24, %31 : vector<64x8xf32>
    %c0_36 = arith.constant 0 : index
    %c1_37 = arith.constant 1 : index
    %c1_38 = arith.constant 1 : index
    %c0_39 = arith.constant 0 : index
    %c0_40 = arith.constant 0 : index
    %c0_41 = arith.constant 0 : index
    %33 = vector.load %arg1[%c0_36, %c1_37, %c1_38, %c0_39, %c0_40, %c0_41] : memref<1x2x2x9x9x4xf32, #tpu.memory_space<vmem>>, vector<1x1x1x8x8x4xf32>
    %34 = vector.shape_cast %33 : vector<1x1x1x8x8x4xf32> to vector<8x8x4xf32>
    %35 = vector.shape_cast %34 : vector<8x8x4xf32> to vector<64x4xf32>
    %36 = arith.truncf %35 : vector<64x4xf32> to vector<64x4xbf16>
    %c4 = arith.constant 4 : index
    %c0_42 = arith.constant 0 : index
    %c0_43 = arith.constant 0 : index
    %37 = vector.load %arg2[%c4, %c0_42, %c0_43] : memref<9x4x8xbf16, #tpu.memory_space<vmem>>, vector<1x4x8xbf16>
    %38 = vector.shape_cast %37 : vector<1x4x8xbf16> to vector<4x8xbf16>
    %cst_44 = arith.constant dense<0.000000e+00> : vector<64x8xf32>
    %39 = tpu.matmul %36, %38, %cst_44 {dimension_numbers = #tpu.dot_dimension_numbers<[1], [0], [0], [1], [0, 0, 1, 1], [], []>} : vector<64x4xbf16>, vector<4x8xbf16>, vector<64x8xf32> -> vector<64x8xf32>
    %40 = arith.addf %32, %39 : vector<64x8xf32>
    %c0_45 = arith.constant 0 : index
    %c1_46 = arith.constant 1 : index
    %c0_47 = arith.constant 0 : index
    %c0_48 = arith.constant 0 : index
    %c1_49 = arith.constant 1 : index
    %c0_50 = arith.constant 0 : index
    %41 = vector.load %arg1[%c0_45, %c1_46, %c0_47, %c0_48, %c1_49, %c0_50] : memref<1x2x2x9x9x4xf32, #tpu.memory_space<vmem>>, vector<1x1x1x8x8x4xf32>
    %42 = vector.shape_cast %41 : vector<1x1x1x8x8x4xf32> to vector<8x8x4xf32>
    %43 = vector.shape_cast %42 : vector<8x8x4xf32> to vector<64x4xf32>
    %44 = arith.truncf %43 : vector<64x4xf32> to vector<64x4xbf16>
    %c5 = arith.constant 5 : index
    %c0_51 = arith.constant 0 : index
    %c0_52 = arith.constant 0 : index
    %45 = vector.load %arg2[%c5, %c0_51, %c0_52] : memref<9x4x8xbf16, #tpu.memory_space<vmem>>, vector<1x4x8xbf16>
    %46 = vector.shape_cast %45 : vector<1x4x8xbf16> to vector<4x8xbf16>
    %cst_53 = arith.constant dense<0.000000e+00> : vector<64x8xf32>
    %47 = tpu.matmul %44, %46, %cst_53 {dimension_numbers = #tpu.dot_dimension_numbers<[1], [0], [0], [1], [0, 0, 1, 1], [], []>} : vector<64x4xbf16>, vector<4x8xbf16>, vector<64x8xf32> -> vector<64x8xf32>
    %48 = arith.addf %40, %47 : vector<64x8xf32>
    %c0_54 = arith.constant 0 : index
    %c0_55 = arith.constant 0 : index
    %c0_56 = arith.constant 0 : index
    %c1_57 = arith.constant 1 : index
    %c0_58 = arith.constant 0 : index
    %c0_59 = arith.constant 0 : index
    %49 = vector.load %arg1[%c0_54, %c0_55, %c0_56, %c1_57, %c0_58, %c0_59] : memref<1x2x2x9x9x4xf32, #tpu.memory_space<vmem>>, vector<1x1x1x8x8x4xf32>
    %50 = vector.shape_cast %49 : vector<1x1x1x8x8x4xf32> to vector<8x8x4xf32>
    %51 = vector.shape_cast %50 : vector<8x8x4xf32> to vector<64x4xf32>
    %52 = arith.truncf %51 : vector<64x4xf32> to vector<64x4xbf16>
    %c6 = arith.constant 6 : index
    %c0_60 = arith.constant 0 : index
    %c0_61 = arith.constant 0 : index
    %53 = vector.load %arg2[%c6, %c0_60, %c0_61] : memref<9x4x8xbf16, #tpu.memory_space<vmem>>, vector<1x4x8xbf16>
    %54 = vector.shape_cast %53 : vector<1x4x8xbf16> to vector<4x8xbf16>
    %cst_62 = arith.constant dense<0.000000e+00> : vector<64x8xf32>
    %55 = tpu.matmul %52, %54, %cst_62 {dimension_numbers = #tpu.dot_dimension_numbers<[1], [0], [0], [1], [0, 0, 1, 1], [], []>} : vector<64x4xbf16>, vector<4x8xbf16>, vector<64x8xf32> -> vector<64x8xf32>
    %56 = arith.addf %48, %55 : vector<64x8xf32>
    %c0_63 = arith.constant 0 : index
    %c0_64 = arith.constant 0 : index
    %c1_65 = arith.constant 1 : index
    %c1_66 = arith.constant 1 : index
    %c0_67 = arith.constant 0 : index
    %c0_68 = arith.constant 0 : index
    %57 = vector.load %arg1[%c0_63, %c0_64, %c1_65, %c1_66, %c0_67, %c0_68] : memref<1x2x2x9x9x4xf32, #tpu.memory_space<vmem>>, vector<1x1x1x8x8x4xf32>
    %58 = vector.shape_cast %57 : vector<1x1x1x8x8x4xf32> to vector<8x8x4xf32>
    %59 = vector.shape_cast %58 : vector<8x8x4xf32> to vector<64x4xf32>
    %60 = arith.truncf %59 : vector<64x4xf32> to vector<64x4xbf16>
    %c7 = arith.constant 7 : index
    %c0_69 = arith.constant 0 : index
    %c0_70 = arith.constant 0 : index
    %61 = vector.load %arg2[%c7, %c0_69, %c0_70] : memref<9x4x8xbf16, #tpu.memory_space<vmem>>, vector<1x4x8xbf16>
    %62 = vector.shape_cast %61 : vector<1x4x8xbf16> to vector<4x8xbf16>
    %cst_71 = arith.constant dense<0.000000e+00> : vector<64x8xf32>
    %63 = tpu.matmul %60, %62, %cst_71 {dimension_numbers = #tpu.dot_dimension_numbers<[1], [0], [0], [1], [0, 0, 1, 1], [], []>} : vector<64x4xbf16>, vector<4x8xbf16>, vector<64x8xf32> -> vector<64x8xf32>
    %64 = arith.addf %56, %63 : vector<64x8xf32>
    %c0_72 = arith.constant 0 : index
    %c0_73 = arith.constant 0 : index
    %c0_74 = arith.constant 0 : index
    %c1_75 = arith.constant 1 : index
    %c1_76 = arith.constant 1 : index
    %c0_77 = arith.constant 0 : index
    %65 = vector.load %arg1[%c0_72, %c0_73, %c0_74, %c1_75, %c1_76, %c0_77] : memref<1x2x2x9x9x4xf32, #tpu.memory_space<vmem>>, vector<1x1x1x8x8x4xf32>
    %66 = vector.shape_cast %65 : vector<1x1x1x8x8x4xf32> to vector<8x8x4xf32>
    %67 = vector.shape_cast %66 : vector<8x8x4xf32> to vector<64x4xf32>
    %68 = arith.truncf %67 : vector<64x4xf32> to vector<64x4xbf16>
    %c8 = arith.constant 8 : index
    %c0_78 = arith.constant 0 : index
    %c0_79 = arith.constant 0 : index
    %69 = vector.load %arg2[%c8, %c0_78, %c0_79] : memref<9x4x8xbf16, #tpu.memory_space<vmem>>, vector<1x4x8xbf16>
    %70 = vector.shape_cast %69 : vector<1x4x8xbf16> to vector<4x8xbf16>
    %cst_80 = arith.constant dense<0.000000e+00> : vector<64x8xf32>
    %71 = tpu.matmul %68, %70, %cst_80 {dimension_numbers = #tpu.dot_dimension_numbers<[1], [0], [0], [1], [0, 0, 1, 1], [], []>} : vector<64x4xbf16>, vector<4x8xbf16>, vector<64x8xf32> -> vector<64x8xf32>
    %72 = arith.addf %64, %71 : vector<64x8xf32>
    %c0_81 = arith.constant 0 : index
    %c0_82 = arith.constant 0 : index
    %c0_83 = arith.constant 0 : index
    %73 = vector.load %arg3[%c0_81, %c0_82, %c0_83] : memref<1x64x8xf32, #tpu.memory_space<vmem>>, vector<1x64x8xf32>
    %74 = vector.shape_cast %73 : vector<1x64x8xf32> to vector<64x8xf32>
    %75 = vector.shape_cast %72 : vector<64x8xf32> to vector<1x64x8xf32>
    tpu.vector_store %arg3[%c0_81, %c0_82, %c0_83], %75 {strides = array<i32>} : memref<1x64x8xf32, #tpu.memory_space<vmem>>, vector<1x64x8xf32>,
    %cst_84 = arith.constant dense<0.000000e+00> : vector<8xf32>
    %76 = vector.multi_reduction <add>, %72, %cst_84 [0] : vector<64x8xf32> to vector<8xf32>
    %77 = vector.shape_cast %76 : vector<8xf32> to vector<1x8xf32>
    %c0_85 = arith.constant 0 : index
    %c0_86 = arith.constant 0 : index
    %c0_87 = arith.constant 0 : index
    %78 = vector.load %arg4[%c0_85, %c0_86, %c0_87] : memref<1x1x8xf32, #tpu.memory_space<vmem>>, vector<1x1x8xf32>
    %79 = vector.shape_cast %78 : vector<1x1x8xf32> to vector<1x8xf32>
    %80 = vector.shape_cast %77 : vector<1x8xf32> to vector<1x1x8xf32>
    tpu.vector_store %arg4[%c0_85, %c0_86, %c0_87], %80 {strides = array<i32>} : memref<1x1x8xf32, #tpu.memory_space<vmem>>, vector<1x1x8xf32>,
    %81 = arith.mulf %72, %72 : vector<64x8xf32>
    %cst_88 = arith.constant dense<0.000000e+00> : vector<8xf32>
    %82 = vector.multi_reduction <add>, %81, %cst_88 [0] : vector<64x8xf32> to vector<8xf32>
    %83 = vector.shape_cast %82 : vector<8xf32> to vector<1x8xf32>
    %c0_89 = arith.constant 0 : index
    %c0_90 = arith.constant 0 : index
    %c0_91 = arith.constant 0 : index
    %84 = vector.load %arg5[%c0_89, %c0_90, %c0_91] : memref<1x1x8xf32, #tpu.memory_space<vmem>>, vector<1x1x8xf32>
    %85 = vector.shape_cast %84 : vector<1x1x8xf32> to vector<1x8xf32>
    %86 = vector.shape_cast %83 : vector<1x8xf32> to vector<1x1x8xf32>
    tpu.vector_store %arg5[%c0_89, %c0_90, %c0_91], %86 {strides = array<i32>} : memref<1x1x8xf32, #tpu.memory_space<vmem>>, vector<1x1x8xf32>,
    return
  }
  func.func @transform_0(%arg0: i32) -> (i32, i32, i32, i32, i32, i32) {
    %c0_i32 = arith.constant 0 : i32
    %c0_i32_0 = arith.constant 0 : i32
    %c0_i32_1 = arith.constant 0 : i32
    %c0_i32_2 = arith.constant 0 : i32
    %c0_i32_3 = arith.constant 0 : i32
    %c0_i32_4 = arith.constant 0 : i32
    return %arg0, %c0_i32, %c0_i32_0, %c0_i32_1, %c0_i32_2, %c0_i32_3 : i32, i32, i32, i32, i32, i32
  }
  func.func @transform_1(%arg0: i32) -> (i32, i32, i32) {
    %c0_i32 = arith.constant 0 : i32
    %c0_i32_0 = arith.constant 0 : i32
    %c0_i32_1 = arith.constant 0 : i32
    %c0_i32_2 = arith.constant 0 : i32
    return %c0_i32, %c0_i32_0, %c0_i32_1 : i32, i32, i32
  }
  func.func @transform_2(%arg0: i32) -> (i32, i32, i32) {
    %c0_i32 = arith.constant 0 : i32
    %c0_i32_0 = arith.constant 0 : i32
    %c0_i32_1 = arith.constant 0 : i32
    return %arg0, %c0_i32, %c0_i32_0 : i32, i32, i32
  }
  func.func @transform_3(%arg0: i32) -> (i32, i32, i32) {
    %c0_i32 = arith.constant 0 : i32
    %c0_i32_0 = arith.constant 0 : i32
    %c0_i32_1 = arith.constant 0 : i32
    return %arg0, %c0_i32, %c0_i32_0 : i32, i32, i32
  }
  func.func @transform_4(%arg0: i32) -> (i32, i32, i32) {
    %c0_i32 = arith.constant 0 : i32
    %c0_i32_0 = arith.constant 0 : i32
    %c0_i32_1 = arith.constant 0 : i32
    return %arg0, %c0_i32, %c0_i32_0 : i32, i32, i32
  }
}

module attributes {stable_mosaic.version = 11 : i64} {
  func.func @_bn_relu_stats_kernel(%arg0: i32, %arg1: memref<1x64x8xf32, #tpu.memory_space<vmem>>, %arg2: memref<1x8xf32, #tpu.memory_space<vmem>>, %arg3: memref<1x8xf32, #tpu.memory_space<vmem>>, %arg4: memref<1x64x8xf32, #tpu.memory_space<vmem>>, %arg5: memref<1x1x8xf32, #tpu.memory_space<vmem>>, %arg6: memref<1x1x8xf32, #tpu.memory_space<vmem>>) attributes {dimension_semantics = [#tpu.dimension_semantics<parallel>], iteration_bounds = array<i64: 2>, scalar_prefetch = 0 : i64, scratch_operands = 0 : i64, tpu.core_type = #tpu.core_type<tc>, window_params = [{transform_indices = @transform_0, window_bounds = array<i64: 1, 64, 8>}, {pipeline_mode = #tpu.pipeline_mode<synchronous>, transform_indices = @transform_1, window_bounds = array<i64: 1, 8>}, {pipeline_mode = #tpu.pipeline_mode<synchronous>, transform_indices = @transform_2, window_bounds = array<i64: 1, 8>}, {transform_indices = @transform_3, window_bounds = array<i64: 1, 64, 8>}, {transform_indices = @transform_4, window_bounds = array<i64: 1, 1, 8>}, {transform_indices = @transform_5, window_bounds = array<i64: 1, 1, 8>}]} {
    %c0 = arith.constant 0 : index
    %c0_0 = arith.constant 0 : index
    %c0_1 = arith.constant 0 : index
    %0 = vector.load %arg1[%c0, %c0_0, %c0_1] : memref<1x64x8xf32, #tpu.memory_space<vmem>>, vector<1x64x8xf32>
    %1 = vector.shape_cast %0 : vector<1x64x8xf32> to vector<64x8xf32>
    %c0_2 = arith.constant 0 : index
    %c0_3 = arith.constant 0 : index
    %2 = vector.load %arg2[%c0_2, %c0_3] : memref<1x8xf32, #tpu.memory_space<vmem>>, vector<1x8xf32>
    %3 = vector.broadcast %2 : vector<1x8xf32> to vector<64x8xf32>
    %4 = arith.mulf %1, %3 : vector<64x8xf32>
    %c0_4 = arith.constant 0 : index
    %c0_5 = arith.constant 0 : index
    %5 = vector.load %arg3[%c0_4, %c0_5] : memref<1x8xf32, #tpu.memory_space<vmem>>, vector<1x8xf32>
    %6 = vector.broadcast %5 : vector<1x8xf32> to vector<64x8xf32>
    %7 = arith.addf %4, %6 : vector<64x8xf32>
    %cst = arith.constant 0.000000e+00 : f32
    %8 = vector.broadcast %cst : f32 to vector<64x8xf32>
    %9 = arith.maximumf %7, %8 : vector<64x8xf32>
    %c0_6 = arith.constant 0 : index
    %c0_7 = arith.constant 0 : index
    %c0_8 = arith.constant 0 : index
    %10 = vector.load %arg4[%c0_6, %c0_7, %c0_8] : memref<1x64x8xf32, #tpu.memory_space<vmem>>, vector<1x64x8xf32>
    %11 = vector.shape_cast %10 : vector<1x64x8xf32> to vector<64x8xf32>
    %12 = vector.shape_cast %9 : vector<64x8xf32> to vector<1x64x8xf32>
    tpu.vector_store %arg4[%c0_6, %c0_7, %c0_8], %12 {strides = array<i32>} : memref<1x64x8xf32, #tpu.memory_space<vmem>>, vector<1x64x8xf32>,
    %cst_9 = arith.constant dense<0.000000e+00> : vector<8xf32>
    %13 = vector.multi_reduction <add>, %9, %cst_9 [0] : vector<64x8xf32> to vector<8xf32>
    %14 = vector.shape_cast %13 : vector<8xf32> to vector<1x8xf32>
    %c0_10 = arith.constant 0 : index
    %c0_11 = arith.constant 0 : index
    %c0_12 = arith.constant 0 : index
    %15 = vector.load %arg5[%c0_10, %c0_11, %c0_12] : memref<1x1x8xf32, #tpu.memory_space<vmem>>, vector<1x1x8xf32>
    %16 = vector.shape_cast %15 : vector<1x1x8xf32> to vector<1x8xf32>
    %17 = vector.shape_cast %14 : vector<1x8xf32> to vector<1x1x8xf32>
    tpu.vector_store %arg5[%c0_10, %c0_11, %c0_12], %17 {strides = array<i32>} : memref<1x1x8xf32, #tpu.memory_space<vmem>>, vector<1x1x8xf32>,
    %18 = arith.mulf %9, %9 : vector<64x8xf32>
    %cst_13 = arith.constant dense<0.000000e+00> : vector<8xf32>
    %19 = vector.multi_reduction <add>, %18, %cst_13 [0] : vector<64x8xf32> to vector<8xf32>
    %20 = vector.shape_cast %19 : vector<8xf32> to vector<1x8xf32>
    %c0_14 = arith.constant 0 : index
    %c0_15 = arith.constant 0 : index
    %c0_16 = arith.constant 0 : index
    %21 = vector.load %arg6[%c0_14, %c0_15, %c0_16] : memref<1x1x8xf32, #tpu.memory_space<vmem>>, vector<1x1x8xf32>
    %22 = vector.shape_cast %21 : vector<1x1x8xf32> to vector<1x8xf32>
    %23 = vector.shape_cast %20 : vector<1x8xf32> to vector<1x1x8xf32>
    tpu.vector_store %arg6[%c0_14, %c0_15, %c0_16], %23 {strides = array<i32>} : memref<1x1x8xf32, #tpu.memory_space<vmem>>, vector<1x1x8xf32>,
    return
  }
  func.func @transform_0(%arg0: i32) -> (i32, i32, i32) {
    %c0_i32 = arith.constant 0 : i32
    %c0_i32_0 = arith.constant 0 : i32
    %c0_i32_1 = arith.constant 0 : i32
    return %arg0, %c0_i32, %c0_i32_0 : i32, i32, i32
  }
  func.func @transform_1(%arg0: i32) -> (i32, i32) {
    %c0_i32 = arith.constant 0 : i32
    %c0_i32_0 = arith.constant 0 : i32
    %c0_i32_1 = arith.constant 0 : i32
    return %c0_i32, %c0_i32_0 : i32, i32
  }
  func.func @transform_2(%arg0: i32) -> (i32, i32) {
    %c0_i32 = arith.constant 0 : i32
    %c0_i32_0 = arith.constant 0 : i32
    %c0_i32_1 = arith.constant 0 : i32
    return %c0_i32, %c0_i32_0 : i32, i32
  }
  func.func @transform_3(%arg0: i32) -> (i32, i32, i32) {
    %c0_i32 = arith.constant 0 : i32
    %c0_i32_0 = arith.constant 0 : i32
    %c0_i32_1 = arith.constant 0 : i32
    return %arg0, %c0_i32, %c0_i32_0 : i32, i32, i32
  }
  func.func @transform_4(%arg0: i32) -> (i32, i32, i32) {
    %c0_i32 = arith.constant 0 : i32
    %c0_i32_0 = arith.constant 0 : i32
    %c0_i32_1 = arith.constant 0 : i32
    return %arg0, %c0_i32, %c0_i32_0 : i32, i32, i32
  }
  func.func @transform_5(%arg0: i32) -> (i32, i32, i32) {
    %c0_i32 = arith.constant 0 : i32
    %c0_i32_0 = arith.constant 0 : i32
    %c0_i32_1 = arith.constant 0 : i32
    return %arg0, %c0_i32, %c0_i32_0 : i32, i32, i32
  }
}

module attributes {stable_mosaic.version = 11 : i64} {
  func.func @_conv3x3_kernel(%arg0: i32, %arg1: memref<1x1x1x10x10x8xf32, #tpu.memory_space<vmem>>, %arg2: memref<9x8x8xbf16, #tpu.memory_space<vmem>>, %arg3: memref<1x64x8xf32, #tpu.memory_space<vmem>>, %arg4: memref<1x1x8xf32, #tpu.memory_space<vmem>>, %arg5: memref<1x1x8xf32, #tpu.memory_space<vmem>>) attributes {dimension_semantics = [#tpu.dimension_semantics<parallel>], iteration_bounds = array<i64: 2>, scalar_prefetch = 0 : i64, scratch_operands = 0 : i64, tpu.core_type = #tpu.core_type<tc>, window_params = [{transform_indices = @transform_0, window_bounds = array<i64: 1, 1, 1, 10, 10, 8>}, {pipeline_mode = #tpu.pipeline_mode<synchronous>, transform_indices = @transform_1, window_bounds = array<i64: 9, 8, 8>}, {transform_indices = @transform_2, window_bounds = array<i64: 1, 64, 8>}, {transform_indices = @transform_3, window_bounds = array<i64: 1, 1, 8>}, {transform_indices = @transform_4, window_bounds = array<i64: 1, 1, 8>}]} {
    %cst = arith.constant 0.000000e+00 : f32
    %0 = vector.broadcast %cst : f32 to vector<64x8xf32>
    %c0 = arith.constant 0 : index
    %c0_0 = arith.constant 0 : index
    %c0_1 = arith.constant 0 : index
    %c0_2 = arith.constant 0 : index
    %c0_3 = arith.constant 0 : index
    %c0_4 = arith.constant 0 : index
    %1 = vector.load %arg1[%c0, %c0_0, %c0_1, %c0_2, %c0_3, %c0_4] : memref<1x1x1x10x10x8xf32, #tpu.memory_space<vmem>>, vector<1x1x1x8x8x8xf32>
    %2 = vector.shape_cast %1 : vector<1x1x1x8x8x8xf32> to vector<8x8x8xf32>
    %3 = vector.shape_cast %2 : vector<8x8x8xf32> to vector<64x8xf32>
    %4 = arith.truncf %3 : vector<64x8xf32> to vector<64x8xbf16>
    %c0_5 = arith.constant 0 : index
    %c0_6 = arith.constant 0 : index
    %c0_7 = arith.constant 0 : index
    %5 = vector.load %arg2[%c0_5, %c0_6, %c0_7] : memref<9x8x8xbf16, #tpu.memory_space<vmem>>, vector<1x8x8xbf16>
    %6 = vector.shape_cast %5 : vector<1x8x8xbf16> to vector<8x8xbf16>
    %cst_8 = arith.constant dense<0.000000e+00> : vector<64x8xf32>
    %7 = tpu.matmul %4, %6, %cst_8 {dimension_numbers = #tpu.dot_dimension_numbers<[1], [0], [0], [1], [0, 0, 1, 1], [], []>} : vector<64x8xbf16>, vector<8x8xbf16>, vector<64x8xf32> -> vector<64x8xf32>
    %8 = arith.addf %0, %7 : vector<64x8xf32>
    %c0_9 = arith.constant 0 : index
    %c0_10 = arith.constant 0 : index
    %c0_11 = arith.constant 0 : index
    %c0_12 = arith.constant 0 : index
    %c1 = arith.constant 1 : index
    %c0_13 = arith.constant 0 : index
    %9 = vector.load %arg1[%c0_9, %c0_10, %c0_11, %c0_12, %c1, %c0_13] : memref<1x1x1x10x10x8xf32, #tpu.memory_space<vmem>>, vector<1x1x1x8x8x8xf32>
    %10 = vector.shape_cast %9 : vector<1x1x1x8x8x8xf32> to vector<8x8x8xf32>
    %11 = vector.shape_cast %10 : vector<8x8x8xf32> to vector<64x8xf32>
    %12 = arith.truncf %11 : vector<64x8xf32> to vector<64x8xbf16>
    %c1_14 = arith.constant 1 : index
    %c0_15 = arith.constant 0 : index
    %c0_16 = arith.constant 0 : index
    %13 = vector.load %arg2[%c1_14, %c0_15, %c0_16] : memref<9x8x8xbf16, #tpu.memory_space<vmem>>, vector<1x8x8xbf16>
    %14 = vector.shape_cast %13 : vector<1x8x8xbf16> to vector<8x8xbf16>
    %cst_17 = arith.constant dense<0.000000e+00> : vector<64x8xf32>
    %15 = tpu.matmul %12, %14, %cst_17 {dimension_numbers = #tpu.dot_dimension_numbers<[1], [0], [0], [1], [0, 0, 1, 1], [], []>} : vector<64x8xbf16>, vector<8x8xbf16>, vector<64x8xf32> -> vector<64x8xf32>
    %16 = arith.addf %8, %15 : vector<64x8xf32>
    %c0_18 = arith.constant 0 : index
    %c0_19 = arith.constant 0 : index
    %c0_20 = arith.constant 0 : index
    %c0_21 = arith.constant 0 : index
    %c2 = arith.constant 2 : index
    %c0_22 = arith.constant 0 : index
    %17 = vector.load %arg1[%c0_18, %c0_19, %c0_20, %c0_21, %c2, %c0_22] : memref<1x1x1x10x10x8xf32, #tpu.memory_space<vmem>>, vector<1x1x1x8x8x8xf32>
    %18 = vector.shape_cast %17 : vector<1x1x1x8x8x8xf32> to vector<8x8x8xf32>
    %19 = vector.shape_cast %18 : vector<8x8x8xf32> to vector<64x8xf32>
    %20 = arith.truncf %19 : vector<64x8xf32> to vector<64x8xbf16>
    %c2_23 = arith.constant 2 : index
    %c0_24 = arith.constant 0 : index
    %c0_25 = arith.constant 0 : index
    %21 = vector.load %arg2[%c2_23, %c0_24, %c0_25] : memref<9x8x8xbf16, #tpu.memory_space<vmem>>, vector<1x8x8xbf16>
    %22 = vector.shape_cast %21 : vector<1x8x8xbf16> to vector<8x8xbf16>
    %cst_26 = arith.constant dense<0.000000e+00> : vector<64x8xf32>
    %23 = tpu.matmul %20, %22, %cst_26 {dimension_numbers = #tpu.dot_dimension_numbers<[1], [0], [0], [1], [0, 0, 1, 1], [], []>} : vector<64x8xbf16>, vector<8x8xbf16>, vector<64x8xf32> -> vector<64x8xf32>
    %24 = arith.addf %16, %23 : vector<64x8xf32>
    %c0_27 = arith.constant 0 : index
    %c0_28 = arith.constant 0 : index
    %c0_29 = arith.constant 0 : index
    %c1_30 = arith.constant 1 : index
    %c0_31 = arith.constant 0 : index
    %c0_32 = arith.constant 0 : index
    %25 = vector.load %arg1[%c0_27, %c0_28, %c0_29, %c1_30, %c0_31, %c0_32] : memref<1x1x1x10x10x8xf32, #tpu.memory_space<vmem>>, vector<1x1x1x8x8x8xf32>
    %26 = vector.shape_cast %25 : vector<1x1x1x8x8x8xf32> to vector<8x8x8xf32>
    %27 = vector.shape_cast %26 : vector<8x8x8xf32> to vector<64x8xf32>
    %28 = arith.truncf %27 : vector<64x8xf32> to vector<64x8xbf16>
    %c3 = arith.constant 3 : index
    %c0_33 = arith.constant 0 : index
    %c0_34 = arith.constant 0 : index
    %29 = vector.load %arg2[%c3, %c0_33, %c0_34] : memref<9x8x8xbf16, #tpu.memory_space<vmem>>, vector<1x8x8xbf16>
    %30 = vector.shape_cast %29 : vector<1x8x8xbf16> to vector<8x8xbf16>
    %cst_35 = arith.constant dense<0.000000e+00> : vector<64x8xf32>
    %31 = tpu.matmul %28, %30, %cst_35 {dimension_numbers = #tpu.dot_dimension_numbers<[1], [0], [0], [1], [0, 0, 1, 1], [], []>} : vector<64x8xbf16>, vector<8x8xbf16>, vector<64x8xf32> -> vector<64x8xf32>
    %32 = arith.addf %24, %31 : vector<64x8xf32>
    %c0_36 = arith.constant 0 : index
    %c0_37 = arith.constant 0 : index
    %c0_38 = arith.constant 0 : index
    %c1_39 = arith.constant 1 : index
    %c1_40 = arith.constant 1 : index
    %c0_41 = arith.constant 0 : index
    %33 = vector.load %arg1[%c0_36, %c0_37, %c0_38, %c1_39, %c1_40, %c0_41] : memref<1x1x1x10x10x8xf32, #tpu.memory_space<vmem>>, vector<1x1x1x8x8x8xf32>
    %34 = vector.shape_cast %33 : vector<1x1x1x8x8x8xf32> to vector<8x8x8xf32>
    %35 = vector.shape_cast %34 : vector<8x8x8xf32> to vector<64x8xf32>
    %36 = arith.truncf %35 : vector<64x8xf32> to vector<64x8xbf16>
    %c4 = arith.constant 4 : index
    %c0_42 = arith.constant 0 : index
    %c0_43 = arith.constant 0 : index
    %37 = vector.load %arg2[%c4, %c0_42, %c0_43] : memref<9x8x8xbf16, #tpu.memory_space<vmem>>, vector<1x8x8xbf16>
    %38 = vector.shape_cast %37 : vector<1x8x8xbf16> to vector<8x8xbf16>
    %cst_44 = arith.constant dense<0.000000e+00> : vector<64x8xf32>
    %39 = tpu.matmul %36, %38, %cst_44 {dimension_numbers = #tpu.dot_dimension_numbers<[1], [0], [0], [1], [0, 0, 1, 1], [], []>} : vector<64x8xbf16>, vector<8x8xbf16>, vector<64x8xf32> -> vector<64x8xf32>
    %40 = arith.addf %32, %39 : vector<64x8xf32>
    %c0_45 = arith.constant 0 : index
    %c0_46 = arith.constant 0 : index
    %c0_47 = arith.constant 0 : index
    %c1_48 = arith.constant 1 : index
    %c2_49 = arith.constant 2 : index
    %c0_50 = arith.constant 0 : index
    %41 = vector.load %arg1[%c0_45, %c0_46, %c0_47, %c1_48, %c2_49, %c0_50] : memref<1x1x1x10x10x8xf32, #tpu.memory_space<vmem>>, vector<1x1x1x8x8x8xf32>
    %42 = vector.shape_cast %41 : vector<1x1x1x8x8x8xf32> to vector<8x8x8xf32>
    %43 = vector.shape_cast %42 : vector<8x8x8xf32> to vector<64x8xf32>
    %44 = arith.truncf %43 : vector<64x8xf32> to vector<64x8xbf16>
    %c5 = arith.constant 5 : index
    %c0_51 = arith.constant 0 : index
    %c0_52 = arith.constant 0 : index
    %45 = vector.load %arg2[%c5, %c0_51, %c0_52] : memref<9x8x8xbf16, #tpu.memory_space<vmem>>, vector<1x8x8xbf16>
    %46 = vector.shape_cast %45 : vector<1x8x8xbf16> to vector<8x8xbf16>
    %cst_53 = arith.constant dense<0.000000e+00> : vector<64x8xf32>
    %47 = tpu.matmul %44, %46, %cst_53 {dimension_numbers = #tpu.dot_dimension_numbers<[1], [0], [0], [1], [0, 0, 1, 1], [], []>} : vector<64x8xbf16>, vector<8x8xbf16>, vector<64x8xf32> -> vector<64x8xf32>
    %48 = arith.addf %40, %47 : vector<64x8xf32>
    %c0_54 = arith.constant 0 : index
    %c0_55 = arith.constant 0 : index
    %c0_56 = arith.constant 0 : index
    %c2_57 = arith.constant 2 : index
    %c0_58 = arith.constant 0 : index
    %c0_59 = arith.constant 0 : index
    %49 = vector.load %arg1[%c0_54, %c0_55, %c0_56, %c2_57, %c0_58, %c0_59] : memref<1x1x1x10x10x8xf32, #tpu.memory_space<vmem>>, vector<1x1x1x8x8x8xf32>
    %50 = vector.shape_cast %49 : vector<1x1x1x8x8x8xf32> to vector<8x8x8xf32>
    %51 = vector.shape_cast %50 : vector<8x8x8xf32> to vector<64x8xf32>
    %52 = arith.truncf %51 : vector<64x8xf32> to vector<64x8xbf16>
    %c6 = arith.constant 6 : index
    %c0_60 = arith.constant 0 : index
    %c0_61 = arith.constant 0 : index
    %53 = vector.load %arg2[%c6, %c0_60, %c0_61] : memref<9x8x8xbf16, #tpu.memory_space<vmem>>, vector<1x8x8xbf16>
    %54 = vector.shape_cast %53 : vector<1x8x8xbf16> to vector<8x8xbf16>
    %cst_62 = arith.constant dense<0.000000e+00> : vector<64x8xf32>
    %55 = tpu.matmul %52, %54, %cst_62 {dimension_numbers = #tpu.dot_dimension_numbers<[1], [0], [0], [1], [0, 0, 1, 1], [], []>} : vector<64x8xbf16>, vector<8x8xbf16>, vector<64x8xf32> -> vector<64x8xf32>
    %56 = arith.addf %48, %55 : vector<64x8xf32>
    %c0_63 = arith.constant 0 : index
    %c0_64 = arith.constant 0 : index
    %c0_65 = arith.constant 0 : index
    %c2_66 = arith.constant 2 : index
    %c1_67 = arith.constant 1 : index
    %c0_68 = arith.constant 0 : index
    %57 = vector.load %arg1[%c0_63, %c0_64, %c0_65, %c2_66, %c1_67, %c0_68] : memref<1x1x1x10x10x8xf32, #tpu.memory_space<vmem>>, vector<1x1x1x8x8x8xf32>
    %58 = vector.shape_cast %57 : vector<1x1x1x8x8x8xf32> to vector<8x8x8xf32>
    %59 = vector.shape_cast %58 : vector<8x8x8xf32> to vector<64x8xf32>
    %60 = arith.truncf %59 : vector<64x8xf32> to vector<64x8xbf16>
    %c7 = arith.constant 7 : index
    %c0_69 = arith.constant 0 : index
    %c0_70 = arith.constant 0 : index
    %61 = vector.load %arg2[%c7, %c0_69, %c0_70] : memref<9x8x8xbf16, #tpu.memory_space<vmem>>, vector<1x8x8xbf16>
    %62 = vector.shape_cast %61 : vector<1x8x8xbf16> to vector<8x8xbf16>
    %cst_71 = arith.constant dense<0.000000e+00> : vector<64x8xf32>
    %63 = tpu.matmul %60, %62, %cst_71 {dimension_numbers = #tpu.dot_dimension_numbers<[1], [0], [0], [1], [0, 0, 1, 1], [], []>} : vector<64x8xbf16>, vector<8x8xbf16>, vector<64x8xf32> -> vector<64x8xf32>
    %64 = arith.addf %56, %63 : vector<64x8xf32>
    %c0_72 = arith.constant 0 : index
    %c0_73 = arith.constant 0 : index
    %c0_74 = arith.constant 0 : index
    %c2_75 = arith.constant 2 : index
    %c2_76 = arith.constant 2 : index
    %c0_77 = arith.constant 0 : index
    %65 = vector.load %arg1[%c0_72, %c0_73, %c0_74, %c2_75, %c2_76, %c0_77] : memref<1x1x1x10x10x8xf32, #tpu.memory_space<vmem>>, vector<1x1x1x8x8x8xf32>
    %66 = vector.shape_cast %65 : vector<1x1x1x8x8x8xf32> to vector<8x8x8xf32>
    %67 = vector.shape_cast %66 : vector<8x8x8xf32> to vector<64x8xf32>
    %68 = arith.truncf %67 : vector<64x8xf32> to vector<64x8xbf16>
    %c8 = arith.constant 8 : index
    %c0_78 = arith.constant 0 : index
    %c0_79 = arith.constant 0 : index
    %69 = vector.load %arg2[%c8, %c0_78, %c0_79] : memref<9x8x8xbf16, #tpu.memory_space<vmem>>, vector<1x8x8xbf16>
    %70 = vector.shape_cast %69 : vector<1x8x8xbf16> to vector<8x8xbf16>
    %cst_80 = arith.constant dense<0.000000e+00> : vector<64x8xf32>
    %71 = tpu.matmul %68, %70, %cst_80 {dimension_numbers = #tpu.dot_dimension_numbers<[1], [0], [0], [1], [0, 0, 1, 1], [], []>} : vector<64x8xbf16>, vector<8x8xbf16>, vector<64x8xf32> -> vector<64x8xf32>
    %72 = arith.addf %64, %71 : vector<64x8xf32>
    %c0_81 = arith.constant 0 : index
    %c0_82 = arith.constant 0 : index
    %c0_83 = arith.constant 0 : index
    %73 = vector.load %arg3[%c0_81, %c0_82, %c0_83] : memref<1x64x8xf32, #tpu.memory_space<vmem>>, vector<1x64x8xf32>
    %74 = vector.shape_cast %73 : vector<1x64x8xf32> to vector<64x8xf32>
    %75 = vector.shape_cast %72 : vector<64x8xf32> to vector<1x64x8xf32>
    tpu.vector_store %arg3[%c0_81, %c0_82, %c0_83], %75 {strides = array<i32>} : memref<1x64x8xf32, #tpu.memory_space<vmem>>, vector<1x64x8xf32>,
    %cst_84 = arith.constant dense<0.000000e+00> : vector<8xf32>
    %76 = vector.multi_reduction <add>, %72, %cst_84 [0] : vector<64x8xf32> to vector<8xf32>
    %77 = vector.shape_cast %76 : vector<8xf32> to vector<1x8xf32>
    %c0_85 = arith.constant 0 : index
    %c0_86 = arith.constant 0 : index
    %c0_87 = arith.constant 0 : index
    %78 = vector.load %arg4[%c0_85, %c0_86, %c0_87] : memref<1x1x8xf32, #tpu.memory_space<vmem>>, vector<1x1x8xf32>
    %79 = vector.shape_cast %78 : vector<1x1x8xf32> to vector<1x8xf32>
    %80 = vector.shape_cast %77 : vector<1x8xf32> to vector<1x1x8xf32>
    tpu.vector_store %arg4[%c0_85, %c0_86, %c0_87], %80 {strides = array<i32>} : memref<1x1x8xf32, #tpu.memory_space<vmem>>, vector<1x1x8xf32>,
    %81 = arith.mulf %72, %72 : vector<64x8xf32>
    %cst_88 = arith.constant dense<0.000000e+00> : vector<8xf32>
    %82 = vector.multi_reduction <add>, %81, %cst_88 [0] : vector<64x8xf32> to vector<8xf32>
    %83 = vector.shape_cast %82 : vector<8xf32> to vector<1x8xf32>
    %c0_89 = arith.constant 0 : index
    %c0_90 = arith.constant 0 : index
    %c0_91 = arith.constant 0 : index
    %84 = vector.load %arg5[%c0_89, %c0_90, %c0_91] : memref<1x1x8xf32, #tpu.memory_space<vmem>>, vector<1x1x8xf32>
    %85 = vector.shape_cast %84 : vector<1x1x8xf32> to vector<1x8xf32>
    %86 = vector.shape_cast %83 : vector<1x8xf32> to vector<1x1x8xf32>
    tpu.vector_store %arg5[%c0_89, %c0_90, %c0_91], %86 {strides = array<i32>} : memref<1x1x8xf32, #tpu.memory_space<vmem>>, vector<1x1x8xf32>,
    return
  }
  func.func @transform_0(%arg0: i32) -> (i32, i32, i32, i32, i32, i32) {
    %c0_i32 = arith.constant 0 : i32
    %c0_i32_0 = arith.constant 0 : i32
    %c0_i32_1 = arith.constant 0 : i32
    %c0_i32_2 = arith.constant 0 : i32
    %c0_i32_3 = arith.constant 0 : i32
    %c0_i32_4 = arith.constant 0 : i32
    return %arg0, %c0_i32, %c0_i32_0, %c0_i32_1, %c0_i32_2, %c0_i32_3 : i32, i32, i32, i32, i32, i32
  }
  func.func @transform_1(%arg0: i32) -> (i32, i32, i32) {
    %c0_i32 = arith.constant 0 : i32
    %c0_i32_0 = arith.constant 0 : i32
    %c0_i32_1 = arith.constant 0 : i32
    %c0_i32_2 = arith.constant 0 : i32
    return %c0_i32, %c0_i32_0, %c0_i32_1 : i32, i32, i32
  }
  func.func @transform_2(%arg0: i32) -> (i32, i32, i32) {
    %c0_i32 = arith.constant 0 : i32
    %c0_i32_0 = arith.constant 0 : i32
    %c0_i32_1 = arith.constant 0 : i32
    return %arg0, %c0_i32, %c0_i32_0 : i32, i32, i32
  }
  func.func @transform_3(%arg0: i32) -> (i32, i32, i32) {
    %c0_i32 = arith.constant 0 : i32
    %c0_i32_0 = arith.constant 0 : i32
    %c0_i32_1 = arith.constant 0 : i32
    return %arg0, %c0_i32, %c0_i32_0 : i32, i32, i32
  }
  func.func @transform_4(%arg0: i32) -> (i32, i32, i32) {
    %c0_i32 = arith.constant 0 : i32
    %c0_i32_0 = arith.constant 0 : i32
    %c0_i32_1 = arith.constant 0 : i32
    return %arg0, %c0_i32, %c0_i32_0 : i32, i32, i32
  }
}

module attributes {stable_mosaic.version = 11 : i64} {
  func.func @_bn_relu_downscale_add_kernel(%arg0: i32, %arg1: memref<1x64x8xf32, #tpu.memory_space<vmem>>, %arg2: memref<1x8xf32, #tpu.memory_space<vmem>>, %arg3: memref<1x8xf32, #tpu.memory_space<vmem>>, %arg4: memref<1x64x4xbf16, #tpu.memory_space<vmem>>, %arg5: memref<4x8xbf16, #tpu.memory_space<vmem>>, %arg6: memref<1x8xf32, #tpu.memory_space<vmem>>, %arg7: memref<1x64x8xf32, #tpu.memory_space<vmem>>) attributes {dimension_semantics = [#tpu.dimension_semantics<parallel>], iteration_bounds = array<i64: 2>, scalar_prefetch = 0 : i64, scratch_operands = 0 : i64, tpu.core_type = #tpu.core_type<tc>, window_params = [{transform_indices = @transform_0, window_bounds = array<i64: 1, 64, 8>}, {pipeline_mode = #tpu.pipeline_mode<synchronous>, transform_indices = @transform_1, window_bounds = array<i64: 1, 8>}, {pipeline_mode = #tpu.pipeline_mode<synchronous>, transform_indices = @transform_2, window_bounds = array<i64: 1, 8>}, {transform_indices = @transform_3, window_bounds = array<i64: 1, 64, 4>}, {pipeline_mode = #tpu.pipeline_mode<synchronous>, transform_indices = @transform_4, window_bounds = array<i64: 4, 8>}, {pipeline_mode = #tpu.pipeline_mode<synchronous>, transform_indices = @transform_5, window_bounds = array<i64: 1, 8>}, {transform_indices = @transform_6, window_bounds = array<i64: 1, 64, 8>}]} {
    %c0 = arith.constant 0 : index
    %c0_0 = arith.constant 0 : index
    %c0_1 = arith.constant 0 : index
    %0 = vector.load %arg1[%c0, %c0_0, %c0_1] : memref<1x64x8xf32, #tpu.memory_space<vmem>>, vector<1x64x8xf32>
    %1 = vector.shape_cast %0 : vector<1x64x8xf32> to vector<64x8xf32>
    %c0_2 = arith.constant 0 : index
    %c0_3 = arith.constant 0 : index
    %2 = vector.load %arg2[%c0_2, %c0_3] : memref<1x8xf32, #tpu.memory_space<vmem>>, vector<1x8xf32>
    %3 = vector.broadcast %2 : vector<1x8xf32> to vector<64x8xf32>
    %4 = arith.mulf %1, %3 : vector<64x8xf32>
    %c0_4 = arith.constant 0 : index
    %c0_5 = arith.constant 0 : index
    %5 = vector.load %arg3[%c0_4, %c0_5] : memref<1x8xf32, #tpu.memory_space<vmem>>, vector<1x8xf32>
    %6 = vector.broadcast %5 : vector<1x8xf32> to vector<64x8xf32>
    %7 = arith.addf %4, %6 : vector<64x8xf32>
    %cst = arith.constant 0.000000e+00 : f32
    %8 = vector.broadcast %cst : f32 to vector<64x8xf32>
    %9 = arith.maximumf %7, %8 : vector<64x8xf32>
    %c0_6 = arith.constant 0 : index
    %c0_7 = arith.constant 0 : index
    %c0_8 = arith.constant 0 : index
    %10 = vector.load %arg4[%c0_6, %c0_7, %c0_8] : memref<1x64x4xbf16, #tpu.memory_space<vmem>>, vector<1x64x4xbf16>
    %11 = vector.shape_cast %10 : vector<1x64x4xbf16> to vector<64x4xbf16>
    %c0_9 = arith.constant 0 : index
    %c0_10 = arith.constant 0 : index
    %12 = vector.load %arg5[%c0_9, %c0_10] : memref<4x8xbf16, #tpu.memory_space<vmem>>, vector<4x8xbf16>
    %cst_11 = arith.constant dense<0.000000e+00> : vector<64x8xf32>
    %13 = tpu.matmul %11, %12, %cst_11 {dimension_numbers = #tpu.dot_dimension_numbers<[1], [0], [0], [1], [0, 0, 1, 1], [], []>} : vector<64x4xbf16>, vector<4x8xbf16>, vector<64x8xf32> -> vector<64x8xf32>
    %14 = arith.addf %9, %13 : vector<64x8xf32>
    %c0_12 = arith.constant 0 : index
    %c0_13 = arith.constant 0 : index
    %15 = vector.load %arg6[%c0_12, %c0_13] : memref<1x8xf32, #tpu.memory_space<vmem>>, vector<1x8xf32>
    %16 = vector.broadcast %15 : vector<1x8xf32> to vector<64x8xf32>
    %17 = arith.addf %14, %16 : vector<64x8xf32>
    %c0_14 = arith.constant 0 : index
    %c0_15 = arith.constant 0 : index
    %c0_16 = arith.constant 0 : index
    %18 = vector.load %arg7[%c0_14, %c0_15, %c0_16] : memref<1x64x8xf32, #tpu.memory_space<vmem>>, vector<1x64x8xf32>
    %19 = vector.shape_cast %18 : vector<1x64x8xf32> to vector<64x8xf32>
    %20 = vector.shape_cast %17 : vector<64x8xf32> to vector<1x64x8xf32>
    tpu.vector_store %arg7[%c0_14, %c0_15, %c0_16], %20 {strides = array<i32>} : memref<1x64x8xf32, #tpu.memory_space<vmem>>, vector<1x64x8xf32>,
    return
  }
  func.func @transform_0(%arg0: i32) -> (i32, i32, i32) {
    %c0_i32 = arith.constant 0 : i32
    %c0_i32_0 = arith.constant 0 : i32
    %c0_i32_1 = arith.constant 0 : i32
    return %arg0, %c0_i32, %c0_i32_0 : i32, i32, i32
  }
  func.func @transform_1(%arg0: i32) -> (i32, i32) {
    %c0_i32 = arith.constant 0 : i32
    %c0_i32_0 = arith.constant 0 : i32
    %c0_i32_1 = arith.constant 0 : i32
    return %c0_i32, %c0_i32_0 : i32, i32
  }
  func.func @transform_2(%arg0: i32) -> (i32, i32) {
    %c0_i32 = arith.constant 0 : i32
    %c0_i32_0 = arith.constant 0 : i32
    %c0_i32_1 = arith.constant 0 : i32
    return %c0_i32, %c0_i32_0 : i32, i32
  }
  func.func @transform_3(%arg0: i32) -> (i32, i32, i32) {
    %c0_i32 = arith.constant 0 : i32
    %c0_i32_0 = arith.constant 0 : i32
    %c0_i32_1 = arith.constant 0 : i32
    return %arg0, %c0_i32, %c0_i32_0 : i32, i32, i32
  }
  func.func @transform_4(%arg0: i32) -> (i32, i32) {
    %c0_i32 = arith.constant 0 : i32
    %c0_i32_0 = arith.constant 0 : i32
    %c0_i32_1 = arith.constant 0 : i32
    return %c0_i32, %c0_i32_0 : i32, i32
  }
  func.func @transform_5(%arg0: i32) -> (i32, i32) {
    %c0_i32 = arith.constant 0 : i32
    %c0_i32_0 = arith.constant 0 : i32
    %c0_i32_1 = arith.constant 0 : i32
    return %c0_i32, %c0_i32_0 : i32, i32
  }
  func.func @transform_6(%arg0: i32) -> (i32, i32, i32) {
    %c0_i32 = arith.constant 0 : i32
    %c0_i32_0 = arith.constant 0 : i32
    %c0_i32_1 = arith.constant 0 : i32
    return %arg0, %c0_i32, %c0_i32_0 : i32, i32, i32
  }
}

</mosaic_0001>

<llo_original>
// kernel: res_block_forward.5
$region0: #{res_block_forward.5}
  #allocation0 [shape = 'u32[]', space=smem, size = 0x4, offset = 0x4, fixed_abs, tag = 'smem constant byte address 0x4 - core index']
  #allocation1 [shape = 'u32[144,128]{1,0:T(1,128)}', space=vmem, size = 0x12000, scoped, tag = 'internal scratch']
  %s0 = inlined_call_operand.vmem [shape: f32[2,256,4], index: 0, kind: input, shape index: {}]
  %s1 = inlined_call_operand.vmem [shape: f32[2,1,4], index: 1, kind: output, shape index: {0}]
  %s2 = inlined_call_operand.vmem [shape: f32[2,1,4], index: 2, kind: output, shape index: {1}]
  %3 = xla_tuple %s1, %s2
  %s4 = sld [smem:[#allocation0]]
  $region45: #{res_block_forward.5} parent=0
    _
  %s6 = ssub.s32 1, %s4
  %s7 = scalar_select 0, %s6, %s4
  loop: start=0, step=1, limit=4
  $region2: #{res_block_forward.5} parent=0 // loop_pre_header
    _
  $region3: #{res_block_forward.5} parent=0 // loop_header
    %s9 = sphi 0, %s13
    %p10 = scmp.ge.s32.totalorder %s9, 4
    %s19 = sphi 0, %s21
    %s22 = sphi 0, %s19
    %s23 = sphi 0, %s22
    %s39 = sphi 0, %s23
    %s45 = sphi 0, %s47
    %s48 = sphi 0, %s45
    %s49 = sphi 0, %s48
    %s65 = sphi 0, %s49
    %s71 = sphi 0, %s73
    %s74 = sphi 0, %s71
    %s75 = sphi 0, %s74
    %s91 = sphi 0, %s75
  $region4: #{res_block_forward.5} parent=0 // loop_header_branch
    %12 = sbr.rel (%p10) target = $region8
  $region5: #{res_block_forward.5} parent=0 // loop_body
    %s14 = ssub.s32 %s9, 1
    %s15 = ssub.s32 %s9, 2
    %s16 = sadd.s32 %s9, 1
    %s17 = ssub.s32 %s9, %s16
    %p18 = scmp.eq.s32.totalorder %s17, 0
    %s20 = sadd.s32 %s19, 1
    %s21 = scalar_select %p18, %s19, %s20
    %p24 = pneg %p18
    %p25 = scmp.eq.s32.totalorder %s9, 1
    %p26 = por %p24, %p25
    %p27 = scmp.ne.s32.totalorder %s19, %s22
    %p28 = scmp.eq.s32.totalorder %s9, 0
    %p29 = por %p27, %p28
    %p30 = scmp.ne.s32.totalorder %s19, %s22
    %p31 = scmp.eq.s32.totalorder %s14, 1
    %p32 = por %p30, %p31
    %p33 = scmp.ne.s32.totalorder %s22, %s23
    %p34 = scmp.eq.s32.totalorder %s14, 0
    %p35 = por %p33, %p34
    %p36 = scmp.ne.s32.totalorder %s22, %s23
    %p37 = scmp.eq.s32.totalorder %s15, 1
    %p38 = por %p36, %p37
    %p40 = scmp.ne.s32.totalorder %s23, %s39
    %p41 = scmp.eq.s32.totalorder %s15, 0
    %p42 = por %p40, %p41
    %s43 = ssub.s32 %s9, %s16
    %p44 = scmp.eq.s32.totalorder %s43, 0
    %s46 = sadd.s32 %s45, 1
    %s47 = scalar_select %p44, %s45, %s46
    %p50 = pneg %p44
    %p51 = scmp.eq.s32.totalorder %s9, 1
    %p52 = por %p50, %p51
    %p53 = scmp.ne.s32.totalorder %s45, %s48
    %p54 = scmp.eq.s32.totalorder %s9, 0
    %p55 = por %p53, %p54
    %p56 = scmp.ne.s32.totalorder %s45, %s48
    %p57 = scmp.eq.s32.totalorder %s14, 1
    %p58 = por %p56, %p57
    %p59 = scmp.ne.s32.totalorder %s48, %s49
    %p60 = scmp.eq.s32.totalorder %s14, 0
    %p61 = por %p59, %p60
    %p62 = scmp.ne.s32.totalorder %s48, %s49
    %p63 = scmp.eq.s32.totalorder %s15, 1
    %p64 = por %p62, %p63
    %p66 = scmp.ne.s32.totalorder %s49, %s65
    %p67 = scmp.eq.s32.totalorder %s15, 0
    %p68 = por %p66, %p67
    %s69 = ssub.s32 %s9, %s16
    %p70 = scmp.eq.s32.totalorder %s69, 0
    %s72 = sadd.s32 %s71, 1
    %s73 = scalar_select %p70, %s71, %s72
    %p76 = pneg %p70
    %p77 = scmp.eq.s32.totalorder %s9, 1
    %p78 = por %p76, %p77
    %p79 = scmp.ne.s32.totalorder %s71, %s74
    %p80 = scmp.eq.s32.totalorder %s9, 0
    %p81 = por %p79, %p80
    %p82 = scmp.ne.s32.totalorder %s71, %s74
    %p83 = scmp.eq.s32.totalorder %s14, 1
    %p84 = por %p82, %p83
    %p85 = scmp.ne.s32.totalorder %s74, %s75
    %p86 = scmp.eq.s32.totalorder %s14, 0
    %p87 = por %p85, %p86
    %p88 = scmp.ne.s32.totalorder %s74, %s75
    %p89 = scmp.eq.s32.totalorder %s15, 1
    %p90 = por %p88, %p89
    %p92 = scmp.ne.s32.totalorder %s75, %s91
    %p93 = scmp.eq.s32.totalorder %s15, 0
    %p94 = por %p92, %p93
    %p95 = scmp.le.s32.totalorder 1, %s9
    %p96 = scmp.lt.s32.totalorder %s9, 3
    %p97 = pnand %p95, %p96
    %p98 = pneg %p97
    // Predicated region
    $region9: #{res_block_forward.5} parent=5 // pred_check
      _
    $region10: #{res_block_forward.5} parent=5 // pred_check_branch
      %100 = sbr.rel (%p97) target = $region12
    $region11: #{res_block_forward.5} parent=5 // pred_region
      %s101 = ssub.s32 %s9, 1
    $region12: #{res_block_forward.5} parent=5 // pred_fallthru
      _
    %p102 = scmp.lt.s32.totalorder %s9, 2
    // Predicated region
    $region13: #{res_block_forward.5} parent=5 // pred_check
      %p103 = pneg %p102
    $region14: #{res_block_forward.5} parent=5 // pred_check_branch
      %105 = sbr.rel (%p103) target = $region16
    $region15: #{res_block_forward.5} parent=5 // pred_region
      // Predicated region
      $region17: #{res_block_forward.5} parent=15 // pred_check
        %p106 = pneg %p29
      $region18: #{res_block_forward.5} parent=15 // pred_check_branch
        %108 = sbr.rel (%p106) target = $region20
      $region19: #{res_block_forward.5} parent=15 // pred_region
        %p109 = scmp.lt.s32.totalorder %s9, 1
        %s110 = scalar_select %p109, %s9, 1
        %s111 = smul.addr %s110, 32
        %s112 = smul.addr %s111, 8
        %s113 = scalar_lea.vmem %s0, %s112
      $region20: #{res_block_forward.5} parent=15 // pred_fallthru
        _
    $region16: #{res_block_forward.5} parent=5 // pred_fallthru
      _
    %p114 = scmp.le.s32.totalorder 1, %s9
    %p115 = scmp.lt.s32.totalorder %s9, 3
    %p116 = pnand %p114, %p115
    %p117 = pneg %p116
    // Predicated region
    $region21: #{res_block_forward.5} parent=5 // pred_check
      _
    $region22: #{res_block_forward.5} parent=5 // pred_check_branch
      %119 = sbr.rel (%p116) target = $region24
    $region23: #{res_block_forward.5} parent=5 // pred_region
      %s120 = ssub.s32 %s9, 1
      %p121 = scmp.lt.s32.totalorder %s14, 1
      %s122 = scalar_select %p121, %s14, 1
      %s123 = smul.addr %s122, 32
      %s124 = smul.addr %s123, 8
      %s125 = scalar_lea.vmem %s0, %s124
      %p126 = pneg %p35
      %p127 = pneg %p32
      %p128 = pneg %p61
      %p129 = pneg %p58
      %p130 = scmp.lt.s32.totalorder %s14, 1
      %s131 = scalar_select %p130, %s14, 1
      %s132 = scalar_lea.vmem %s1, %s131
      %p133 = pneg %p87
      %p134 = pneg %p84
      %p135 = scmp.lt.s32.totalorder %s14, 1
      %s136 = scalar_select %p135, %s14, 1
      %s137 = scalar_lea.vmem %s2, %s136
      %p138 = scmp.lt.s32.totalorder %s14, 1
      %s139 = scalar_select %p138, %s14, 1
      %s140 = smul.addr %s139, 32
      %s141 = smul.addr %s140, 8
      %s142 = scalar_lea.vmem %s0, %s141
      %p143 = scmp.lt.s32.totalorder %s14, 1
      %s144 = scalar_select %p143, %s14, 1
      %s145 = scalar_lea.vmem %s1, %s144
      %p146 = scmp.lt.s32.totalorder %s14, 1
      %s147 = scalar_select %p146, %s14, 1
      %s148 = scalar_lea.vmem %s2, %s147
      %v149 = vld [vmem:[%s142] sm:$0xff]
      %v150 = vld [vmem:[%s142 + $0x8] sm:$0xff]
      %v151 = vld [vmem:[%s142 + $0x10] sm:$0xff]
      %v152 = vld [vmem:[%s142 + $0x18] sm:$0xff]
      %v153 = vld [vmem:[%s142 + $0x20] sm:$0xff]
      %v154 = vld [vmem:[%s142 + $0x28] sm:$0xff]
      %v155 = vld [vmem:[%s142 + $0x30] sm:$0xff]
      %v156 = vld [vmem:[%s142 + $0x38] sm:$0xff]
      %v157 = vld [vmem:[%s142 + $0x40] sm:$0xff]
      %v158 = vld [vmem:[%s142 + $0x48] sm:$0xff]
      %v159 = vld [vmem:[%s142 + $0x50] sm:$0xff]
      %v160 = vld [vmem:[%s142 + $0x58] sm:$0xff]
      %v161 = vld [vmem:[%s142 + $0x60] sm:$0xff]
      %v162 = vld [vmem:[%s142 + $0x68] sm:$0xff]
      %v163 = vld [vmem:[%s142 + $0x70] sm:$0xff]
      %v164 = vld [vmem:[%s142 + $0x78] sm:$0xff]
      %v165 = vld [vmem:[%s142 + $0x80] sm:$0xff]
      %v166 = vld [vmem:[%s142 + $0x88] sm:$0xff]
      %v167 = vld [vmem:[%s142 + $0x90] sm:$0xff]
      %v168 = vld [vmem:[%s142 + $0x98] sm:$0xff]
      %v169 = vld [vmem:[%s142 + $0xa0] sm:$0xff]
      %v170 = vld [vmem:[%s142 + $0xa8] sm:$0xff]
      %v171 = vld [vmem:[%s142 + $0xb0] sm:$0xff]
      %v172 = vld [vmem:[%s142 + $0xb8] sm:$0xff]
      %v173 = vld [vmem:[%s142 + $0xc0] sm:$0xff]
      %v174 = vld [vmem:[%s142 + $0xc8] sm:$0xff]
      %v175 = vld [vmem:[%s142 + $0xd0] sm:$0xff]
      %v176 = vld [vmem:[%s142 + $0xd8] sm:$0xff]
      %v177 = vld [vmem:[%s142 + $0xe0] sm:$0xff]
      %v178 = vld [vmem:[%s142 + $0xe8] sm:$0xff]
      %v179 = vld [vmem:[%s142 + $0xf0] sm:$0xff]
      %v180 = vld [vmem:[%s142 + $0xf8] sm:$0xff]
      %vm181 = vcmask 31744
      %v182 = vsel %vm181, %v149, 0.0
      %v183 = vsel %vm181, %v150, 0.0
      %v184 = vadd.f32 %v182, %v183
      %v185 = vsel %vm181, %v151, 0.0
      %v186 = vadd.f32 %v184, %v185
      %v187 = vsel %vm181, %v152, 0.0
      %v188 = vadd.f32 %v186, %v187
      %v189 = vsel %vm181, %v153, 0.0
      %v190 = vadd.f32 %v188, %v189
      %v191 = vsel %vm181, %v154, 0.0
      %v192 = vadd.f32 %v190, %v191
      %v193 = vsel %vm181, %v155, 0.0
      %v194 = vadd.f32 %v192, %v193
      %v195 = vsel %vm181, %v156, 0.0
      %v196 = vadd.f32 %v194, %v195
      %v197 = vsel %vm181, %v157, 0.0
      %v198 = vadd.f32 %v196, %v197
      %v199 = vsel %vm181, %v158, 0.0
      %v200 = vadd.f32 %v198, %v199
      %v201 = vsel %vm181, %v159, 0.0
      %v202 = vadd.f32 %v200, %v201
      %v203 = vsel %vm181, %v160, 0.0
      %v204 = vadd.f32 %v202, %v203
      %v205 = vsel %vm181, %v161, 0.0
      %v206 = vadd.f32 %v204, %v205
      %v207 = vsel %vm181, %v162, 0.0
      %v208 = vadd.f32 %v206, %v207
      %v209 = vsel %vm181, %v163, 0.0
      %v210 = vadd.f32 %v208, %v209
      %v211 = vsel %vm181, %v164, 0.0
      %v212 = vadd.f32 %v210, %v211
      %v213 = vsel %vm181, %v165, 0.0
      %v214 = vadd.f32 %v212, %v213
      %v215 = vsel %vm181, %v166, 0.0
      %v216 = vadd.f32 %v214, %v215
      %v217 = vsel %vm181, %v167, 0.0
      %v218 = vadd.f32 %v216, %v217
      %v219 = vsel %vm181, %v168, 0.0
      %v220 = vadd.f32 %v218, %v219
      %v221 = vsel %vm181, %v169, 0.0
      %v222 = vadd.f32 %v220, %v221
      %v223 = vsel %vm181, %v170, 0.0
      %v224 = vadd.f32 %v222, %v223
      %v225 = vsel %vm181, %v171, 0.0
      %v226 = vadd.f32 %v224, %v225
      %v227 = vsel %vm181, %v172, 0.0
      %v228 = vadd.f32 %v226, %v227
      %v229 = vsel %vm181, %v173, 0.0
      %v230 = vadd.f32 %v228, %v229
      %v231 = vsel %vm181, %v174, 0.0
      %v232 = vadd.f32 %v230, %v231
      %v233 = vsel %vm181, %v175, 0.0
      %v234 = vadd.f32 %v232, %v233
      %v235 = vsel %vm181, %v176, 0.0
      %v236 = vadd.f32 %v234, %v235
      %v237 = vsel %vm181, %v177, 0.0
      %v238 = vadd.f32 %v236, %v237
      %v239 = vsel %vm181, %v178, 0.0
      %v240 = vadd.f32 %v238, %v239
      %v241 = vsel %vm181, %v179, 0.0
      %v242 = vadd.f32 %v240, %v241
      %v243 = vsel %vm181, %v180, 0.0
      %v244 = vadd.f32 %v242, %v243
      %v245 = vrot.slane %v244, 4
      %v246 = vadd.f32 %v244, %v245
      %v247 = vrot.slane %v246, 2
      %v248 = vadd.f32 %v246, %v247
      %v249 = vrot.slane %v248, 1
      %v250 = vadd.f32 %v248, %v249
      %vm251 = vcmask 24576
      %252 = vst.msk [vmem:[%s145] sm:$0x1] %vm251, %v250
      %v253 = vmul.f32 %v149, %v149
      %v254 = vmul.f32 %v150, %v150
      %v255 = vmul.f32 %v151, %v151
      %v256 = vmul.f32 %v152, %v152
      %v257 = vmul.f32 %v153, %v153
      %v258 = vmul.f32 %v154, %v154
      %v259 = vmul.f32 %v155, %v155
      %v260 = vmul.f32 %v156, %v156
      %v261 = vmul.f32 %v157, %v157
      %v262 = vmul.f32 %v158, %v158
      %v263 = vmul.f32 %v159, %v159
      %v264 = vmul.f32 %v160, %v160
      %v265 = vmul.f32 %v161, %v161
      %v266 = vmul.f32 %v162, %v162
      %v267 = vmul.f32 %v163, %v163
      %v268 = vmul.f32 %v164, %v164
      %v269 = vmul.f32 %v165, %v165
      %v270 = vmul.f32 %v166, %v166
      %v271 = vmul.f32 %v167, %v167
      %v272 = vmul.f32 %v168, %v168
      %v273 = vmul.f32 %v169, %v169
      %v274 = vmul.f32 %v170, %v170
      %v275 = vmul.f32 %v171, %v171
      %v276 = vmul.f32 %v172, %v172
      %v277 = vmul.f32 %v173, %v173
      %v278 = vmul.f32 %v174, %v174
      %v279 = vmul.f32 %v175, %v175
      %v280 = vmul.f32 %v176, %v176
      %v281 = vmul.f32 %v177, %v177
      %v282 = vmul.f32 %v178, %v178
      %v283 = vmul.f32 %v179, %v179
      %v284 = vmul.f32 %v180, %v180
      %v285 = vsel %vm181, %v253, 0.0
      %v286 = vsel %vm181, %v254, 0.0
      %v287 = vadd.f32 %v285, %v286
      %v288 = vsel %vm181, %v255, 0.0
      %v289 = vadd.f32 %v287, %v288
      %v290 = vsel %vm181, %v256, 0.0
      %v291 = vadd.f32 %v289, %v290
      %v292 = vsel %vm181, %v257, 0.0
      %v293 = vadd.f32 %v291, %v292
      %v294 = vsel %vm181, %v258, 0.0
      %v295 = vadd.f32 %v293, %v294
      %v296 = vsel %vm181, %v259, 0.0
      %v297 = vadd.f32 %v295, %v296
      %v298 = vsel %vm181, %v260, 0.0
      %v299 = vadd.f32 %v297, %v298
      %v300 = vsel %vm181, %v261, 0.0
      %v301 = vadd.f32 %v299, %v300
      %v302 = vsel %vm181, %v262, 0.0
      %v303 = vadd.f32 %v301, %v302
      %v304 = vsel %vm181, %v263, 0.0
      %v305 = vadd.f32 %v303, %v304
      %v306 = vsel %vm181, %v264, 0.0
      %v307 = vadd.f32 %v305, %v306
      %v308 = vsel %vm181, %v265, 0.0
      %v309 = vadd.f32 %v307, %v308
      %v310 = vsel %vm181, %v266, 0.0
      %v311 = vadd.f32 %v309, %v310
      %v312 = vsel %vm181, %v267, 0.0
      %v313 = vadd.f32 %v311, %v312
      %v314 = vsel %vm181, %v268, 0.0
      %v315 = vadd.f32 %v313, %v314
      %v316 = vsel %vm181, %v269, 0.0
      %v317 = vadd.f32 %v315, %v316
      %v318 = vsel %vm181, %v270, 0.0
      %v319 = vadd.f32 %v317, %v318
      %v320 = vsel %vm181, %v271, 0.0
      %v321 = vadd.f32 %v319, %v320
      %v322 = vsel %vm181, %v272, 0.0
      %v323 = vadd.f32 %v321, %v322
      %v324 = vsel %vm181, %v273, 0.0
      %v325 = vadd.f32 %v323, %v324
      %v326 = vsel %vm181, %v274, 0.0
      %v327 = vadd.f32 %v325, %v326
      %v328 = vsel %vm181, %v275, 0.0
      %v329 = vadd.f32 %v327, %v328
      %v330 = vsel %vm181, %v276, 0.0
      %v331 = vadd.f32 %v329, %v330
      %v332 = vsel %vm181, %v277, 0.0
      %v333 = vadd.f32 %v331, %v332
      %v334 = vsel %vm181, %v278, 0.0
      %v335 = vadd.f32 %v333, %v334
      %v336 = vsel %vm181, %v279, 0.0
      %v337 = vadd.f32 %v335, %v336
      %v338 = vsel %vm181, %v280, 0.0
      %v339 = vadd.f32 %v337, %v338
      %v340 = vsel %vm181, %v281, 0.0
      %v341 = vadd.f32 %v339, %v340
      %v342 = vsel %vm181, %v282, 0.0
      %v343 = vadd.f32 %v341, %v342
      %v344 = vsel %vm181, %v283, 0.0
      %v345 = vadd.f32 %v343, %v344
      %v346 = vsel %vm181, %v284, 0.0
      %v347 = vadd.f32 %v345, %v346
      %v348 = vrot.slane %v347, 4
      %v349 = vadd.f32 %v347, %v348
      %v350 = vrot.slane %v349, 2
      %v351 = vadd.f32 %v349, %v350
      %v352 = vrot.slane %v351, 1
      %v353 = vadd.f32 %v351, %v352
      %354 = vst.msk [vmem:[%s148] sm:$0x1] %vm251, %v353
      %p355 = scmp.lt.s32.totalorder %s14, 1
      %s356 = scalar_select %p355, %s14, 1
      %s357 = scalar_lea.vmem %s1, %s356
      %p358 = scmp.lt.s32.totalorder %s14, 1
      %s359 = scalar_select %p358, %s14, 1
      %s360 = scalar_lea.vmem %s2, %s359
      // Predicated region
      $region25: #{res_block_forward.5} parent=23 // pred_check
        %p361 = pneg %p58
      $region26: #{res_block_forward.5} parent=23 // pred_check_branch
        %363 = sbr.rel (%p361) target = $region28
      $region27: #{res_block_forward.5} parent=23 // pred_region
        _
      $region28: #{res_block_forward.5} parent=23 // pred_fallthru
        _
      // Predicated region
      $region29: #{res_block_forward.5} parent=23 // pred_check
        %p364 = pneg %p84
      $region30: #{res_block_forward.5} parent=23 // pred_check_branch
        %366 = sbr.rel (%p364) target = $region32
      $region31: #{res_block_forward.5} parent=23 // pred_region
        _
      $region32: #{res_block_forward.5} parent=23 // pred_fallthru
        _
    $region24: #{res_block_forward.5} parent=5 // pred_fallthru
      _
    %p367 = scmp.le.s32.totalorder 2, %s9
    // Predicated region
    $region33: #{res_block_forward.5} parent=5 // pred_check
      %p368 = pneg %p367
    $region34: #{res_block_forward.5} parent=5 // pred_check_branch
      %370 = sbr.rel (%p368) target = $region36
    $region35: #{res_block_forward.5} parent=5 // pred_region
      %s371 = ssub.s32 %s9, 2
      // Predicated region
      $region37: #{res_block_forward.5} parent=35 // pred_check
        %p372 = pneg %p64
      $region38: #{res_block_forward.5} parent=35 // pred_check_branch
        %374 = sbr.rel (%p372) target = $region40
      $region39: #{res_block_forward.5} parent=35 // pred_region
        %p375 = scmp.lt.s32.totalorder %s15, 1
        %s376 = scalar_select %p375, %s15, 1
        %s377 = scalar_lea.vmem %s1, %s376
      $region40: #{res_block_forward.5} parent=35 // pred_fallthru
        _
      // Predicated region
      $region41: #{res_block_forward.5} parent=35 // pred_check
        %p378 = pneg %p90
      $region42: #{res_block_forward.5} parent=35 // pred_check_branch
        %380 = sbr.rel (%p378) target = $region44
      $region43: #{res_block_forward.5} parent=35 // pred_region
        %p381 = scmp.lt.s32.totalorder %s15, 1
        %s382 = scalar_select %p381, %s15, 1
        %s383 = scalar_lea.vmem %s2, %s382
      $region44: #{res_block_forward.5} parent=35 // pred_fallthru
        _
    $region36: #{res_block_forward.5} parent=5 // pred_fallthru
      _
  $region6: #{res_block_forward.5} parent=0 // loop_footer
    %s13 = sadd.s32 1, %s9
  $region7: #{res_block_forward.5} parent=0 // loop_footer_branch
    %8 = sbr.rel target = $region3
  $region8: #{res_block_forward.5} parent=0 // loop_exit
    _

// kernel: res_block_forward.7
$region0: #{res_block_forward.7}
  #allocation0 [shape = 'u32[]', space=smem, size = 0x4, offset = 0x4, fixed_abs, tag = 'smem constant byte address 0x4 - core index']
  #allocation1 [shape = 'u32[144,128]{1,0:T(1,128)}', space=vmem, size = 0x12000, scoped, tag = 'internal scratch']
  %s0 = inlined_call_operand.vmem [shape: f32[2,64,8], index: 0, kind: input, shape index: {}]
  %s1 = inlined_call_operand.vmem [shape: f32[1,8], index: 1, kind: input, shape index: {}]
  %s2 = inlined_call_operand.vmem [shape: f32[1,8], index: 2, kind: input, shape index: {}]
  %s3 = inlined_call_operand.vmem [shape: f32[2,64,8], index: 3, kind: output, shape index: {0}]
  %s4 = inlined_call_operand.vmem [shape: f32[2,1,8], index: 4, kind: output, shape index: {1}]
  %s5 = inlined_call_operand.vmem [shape: f32[2,1,8], index: 5, kind: output, shape index: {2}]
  %6 = xla_tuple %s3, %s4, %s5
  %s7 = sld [smem:[#allocation0]]
  $region61: #{res_block_forward.7} parent=0
    _
  %s9 = ssub.s32 1, %s7
  %s10 = scalar_select 0, %s9, %s7
  loop: start=0, step=1, limit=4
  $region2: #{res_block_forward.7} parent=0 // loop_pre_header
    _
  $region3: #{res_block_forward.7} parent=0 // loop_header
    %s12 = sphi 0, %s16
    %p13 = scmp.ge.s32.totalorder %s12, 4
    %s22 = sphi 0, %s24
    %s25 = sphi 0, %s22
    %s26 = sphi 0, %s25
    %s42 = sphi 0, %s26
    %s46 = sphi 0, %s46
    %s48 = sphi 0, %s46
    %s49 = sphi 0, %s48
    %s63 = sphi 0, %s49
    %s67 = sphi 0, %s67
    %s69 = sphi 0, %s67
    %s70 = sphi 0, %s69
    %s84 = sphi 0, %s70
    %s90 = sphi 0, %s92
    %s93 = sphi 0, %s90
    %s94 = sphi 0, %s93
    %s110 = sphi 0, %s94
    %s116 = sphi 0, %s118
    %s119 = sphi 0, %s116
    %s120 = sphi 0, %s119
    %s136 = sphi 0, %s120
    %s142 = sphi 0, %s144
    %s145 = sphi 0, %s142
    %s146 = sphi 0, %s145
    %s162 = sphi 0, %s146
  $region4: #{res_block_forward.7} parent=0 // loop_header_branch
    %15 = sbr.rel (%p13) target = $region8
  $region5: #{res_block_forward.7} parent=0 // loop_body
    %s17 = ssub.s32 %s12, 1
    %s18 = ssub.s32 %s12, 2
    %s19 = sadd.s32 %s12, 1
    %s20 = ssub.s32 %s12, %s19
    %p21 = scmp.eq.s32.totalorder %s20, 0
    %s23 = sadd.s32 %s22, 1
    %s24 = scalar_select %p21, %s22, %s23
    %p27 = pneg %p21
    %p28 = scmp.eq.s32.totalorder %s12, 1
    %p29 = por %p27, %p28
    %p30 = scmp.ne.s32.totalorder %s22, %s25
    %p31 = scmp.eq.s32.totalorder %s12, 0
    %p32 = por %p30, %p31
    %p33 = scmp.ne.s32.totalorder %s22, %s25
    %p34 = scmp.eq.s32.totalorder %s17, 1
    %p35 = por %p33, %p34
    %p36 = scmp.ne.s32.totalorder %s25, %s26
    %p37 = scmp.eq.s32.totalorder %s17, 0
    %p38 = por %p36, %p37
    %p39 = scmp.ne.s32.totalorder %s25, %s26
    %p40 = scmp.eq.s32.totalorder %s18, 1
    %p41 = por %p39, %p40
    %p43 = scmp.ne.s32.totalorder %s26, %s42
    %p44 = scmp.eq.s32.totalorder %s18, 0
    %p45 = por %p43, %p44
    %s47 = sadd.s32 %s46, 1
    %p50 = scmp.eq.s32.totalorder %s12, 1
    %p51 = scmp.ne.s32.totalorder %s46, %s48
    %p52 = scmp.eq.s32.totalorder %s12, 0
    %p53 = por %p51, %p52
    %p54 = scmp.ne.s32.totalorder %s46, %s48
    %p55 = scmp.eq.s32.totalorder %s17, 1
    %p56 = por %p54, %p55
    %p57 = scmp.ne.s32.totalorder %s48, %s49
    %p58 = scmp.eq.s32.totalorder %s17, 0
    %p59 = por %p57, %p58
    %p60 = scmp.ne.s32.totalorder %s48, %s49
    %p61 = scmp.eq.s32.totalorder %s18, 1
    %p62 = por %p60, %p61
    %p64 = scmp.ne.s32.totalorder %s49, %s63
    %p65 = scmp.eq.s32.totalorder %s18, 0
    %p66 = por %p64, %p65
    %s68 = sadd.s32 %s67, 1
    %p71 = scmp.eq.s32.totalorder %s12, 1
    %p72 = scmp.ne.s32.totalorder %s67, %s69
    %p73 = scmp.eq.s32.totalorder %s12, 0
    %p74 = por %p72, %p73
    %p75 = scmp.ne.s32.totalorder %s67, %s69
    %p76 = scmp.eq.s32.totalorder %s17, 1
    %p77 = por %p75, %p76
    %p78 = scmp.ne.s32.totalorder %s69, %s70
    %p79 = scmp.eq.s32.totalorder %s17, 0
    %p80 = por %p78, %p79
    %p81 = scmp.ne.s32.totalorder %s69, %s70
    %p82 = scmp.eq.s32.totalorder %s18, 1
    %p83 = por %p81, %p82
    %p85 = scmp.ne.s32.totalorder %s70, %s84
    %p86 = scmp.eq.s32.totalorder %s18, 0
    %p87 = por %p85, %p86
    %s88 = ssub.s32 %s12, %s19
    %p89 = scmp.eq.s32.totalorder %s88, 0
    %s91 = sadd.s32 %s90, 1
    %s92 = scalar_select %p89, %s90, %s91
    %p95 = pneg %p89
    %p96 = scmp.eq.s32.totalorder %s12, 1
    %p97 = por %p95, %p96
    %p98 = scmp.ne.s32.totalorder %s90, %s93
    %p99 = scmp.eq.s32.totalorder %s12, 0
    %p100 = por %p98, %p99
    %p101 = scmp.ne.s32.totalorder %s90, %s93
    %p102 = scmp.eq.s32.totalorder %s17, 1
    %p103 = por %p101, %p102
    %p104 = scmp.ne.s32.totalorder %s93, %s94
    %p105 = scmp.eq.s32.totalorder %s17, 0
    %p106 = por %p104, %p105
    %p107 = scmp.ne.s32.totalorder %s93, %s94
    %p108 = scmp.eq.s32.totalorder %s18, 1
    %p109 = por %p107, %p108
    %p111 = scmp.ne.s32.totalorder %s94, %s110
    %p112 = scmp.eq.s32.totalorder %s18, 0
    %p113 = por %p111, %p112
    %s114 = ssub.s32 %s12, %s19
    %p115 = scmp.eq.s32.totalorder %s114, 0
    %s117 = sadd.s32 %s116, 1
    %s118 = scalar_select %p115, %s116, %s117
    %p121 = pneg %p115
    %p122 = scmp.eq.s32.totalorder %s12, 1
    %p123 = por %p121, %p122
    %p124 = scmp.ne.s32.totalorder %s116, %s119
    %p125 = scmp.eq.s32.totalorder %s12, 0
    %p126 = por %p124, %p125
    %p127 = scmp.ne.s32.totalorder %s116, %s119
    %p128 = scmp.eq.s32.totalorder %s17, 1
    %p129 = por %p127, %p128
    %p130 = scmp.ne.s32.totalorder %s119, %s120
    %p131 = scmp.eq.s32.totalorder %s17, 0
    %p132 = por %p130, %p131
    %p133 = scmp.ne.s32.totalorder %s119, %s120
    %p134 = scmp.eq.s32.totalorder %s18, 1
    %p135 = por %p133, %p134
    %p137 = scmp.ne.s32.totalorder %s120, %s136
    %p138 = scmp.eq.s32.totalorder %s18, 0
    %p139 = por %p137, %p138
    %s140 = ssub.s32 %s12, %s19
    %p141 = scmp.eq.s32.totalorder %s140, 0
    %s143 = sadd.s32 %s142, 1
    %s144 = scalar_select %p141, %s142, %s143
    %p147 = pneg %p141
    %p148 = scmp.eq.s32.totalorder %s12, 1
    %p149 = por %p147, %p148
    %p150 = scmp.ne.s32.totalorder %s142, %s145
    %p151 = scmp.eq.s32.totalorder %s12, 0
    %p152 = por %p150, %p151
    %p153 = scmp.ne.s32.totalorder %s142, %s145
    %p154 = scmp.eq.s32.totalorder %s17, 1
    %p155 = por %p153, %p154
    %p156 = scmp.ne.s32.totalorder %s145, %s146
    %p157 = scmp.eq.s32.totalorder %s17, 0
    %p158 = por %p156, %p157
    %p159 = scmp.ne.s32.totalorder %s145, %s146
    %p160 = scmp.eq.s32.totalorder %s18, 1
    %p161 = por %p159, %p160
    %p163 = scmp.ne.s32.totalorder %s146, %s162
    %p164 = scmp.eq.s32.totalorder %s18, 0
    %p165 = por %p163, %p164
    %p166 = scmp.le.s32.totalorder 1, %s12
    %p167 = scmp.lt.s32.totalorder %s12, 3
    %p168 = pnand %p166, %p167
    %p169 = pneg %p168
    // Predicated region
    $region9: #{res_block_forward.7} parent=5 // pred_check
      _
    $region10: #{res_block_forward.7} parent=5 // pred_check_branch
      %171 = sbr.rel (%p168) target = $region12
    $region11: #{res_block_forward.7} parent=5 // pred_region
      %s172 = ssub.s32 %s12, 1
      // Predicated region
      $region13: #{res_block_forward.7} parent=11 // pred_check
        %p173 = pneg %p59
      $region14: #{res_block_forward.7} parent=11 // pred_check_branch
        %175 = sbr.rel (%p173) target = $region16
      $region15: #{res_block_forward.7} parent=11 // pred_region
        _
      $region16: #{res_block_forward.7} parent=11 // pred_fallthru
        _
      // Predicated region
      $region17: #{res_block_forward.7} parent=11 // pred_check
        %p176 = pneg %p80
      $region18: #{res_block_forward.7} parent=11 // pred_check_branch
        %178 = sbr.rel (%p176) target = $region20
      $region19: #{res_block_forward.7} parent=11 // pred_region
        _
      $region20: #{res_block_forward.7} parent=11 // pred_fallthru
        _
    $region12: #{res_block_forward.7} parent=5 // pred_fallthru
      _
    %p179 = scmp.lt.s32.totalorder %s12, 2
    // Predicated region
    $region21: #{res_block_forward.7} parent=5 // pred_check
      %p180 = pneg %p179
    $region22: #{res_block_forward.7} parent=5 // pred_check_branch
      %182 = sbr.rel (%p180) target = $region24
    $region23: #{res_block_forward.7} parent=5 // pred_region
      // Predicated region
      $region25: #{res_block_forward.7} parent=23 // pred_check
        %p183 = pneg %p32
      $region26: #{res_block_forward.7} parent=23 // pred_check_branch
        %185 = sbr.rel (%p183) target = $region28
      $region27: #{res_block_forward.7} parent=23 // pred_region
        %p186 = scmp.lt.s32.totalorder %s12, 1
        %s187 = scalar_select %p186, %s12, 1
        %s188 = smul.addr %s187, 8
        %s189 = smul.addr %s188, 8
        %s190 = scalar_lea.vmem %s0, %s189
      $region28: #{res_block_forward.7} parent=23 // pred_fallthru
        _
    $region24: #{res_block_forward.7} parent=5 // pred_fallthru
      _
    %p191 = scmp.le.s32.totalorder 1, %s12
    %p192 = scmp.lt.s32.totalorder %s12, 3
    %p193 = pnand %p191, %p192
    %p194 = pneg %p193
    // Predicated region
    $region29: #{res_block_forward.7} parent=5 // pred_check
      _
    $region30: #{res_block_forward.7} parent=5 // pred_check_branch
      %196 = sbr.rel (%p193) target = $region32
    $region31: #{res_block_forward.7} parent=5 // pred_region
      %s197 = ssub.s32 %s12, 1
      %p198 = scmp.lt.s32.totalorder %s17, 1
      %s199 = scalar_select %p198, %s17, 1
      %s200 = smul.addr %s199, 8
      %s201 = smul.addr %s200, 8
      %s202 = scalar_lea.vmem %s0, %s201
      %p203 = pneg %p38
      %p204 = pneg %p35
      %p205 = pneg %p59
      %p206 = pneg %p56
      %p207 = pneg %p80
      %p208 = pneg %p77
      %p209 = pneg %p106
      %p210 = pneg %p103
      %p211 = scmp.lt.s32.totalorder %s17, 1
      %s212 = scalar_select %p211, %s17, 1
      %s213 = smul.addr %s212, 8
      %s214 = smul.addr %s213, 8
      %s215 = scalar_lea.vmem %s3, %s214
      %p216 = pneg %p132
      %p217 = pneg %p129
      %p218 = scmp.lt.s32.totalorder %s17, 1
      %s219 = scalar_select %p218, %s17, 1
      %s220 = scalar_lea.vmem %s4, %s219
      %p221 = pneg %p158
      %p222 = pneg %p155
      %p223 = scmp.lt.s32.totalorder %s17, 1
      %s224 = scalar_select %p223, %s17, 1
      %s225 = scalar_lea.vmem %s5, %s224
      %p226 = scmp.lt.s32.totalorder %s17, 1
      %s227 = scalar_select %p226, %s17, 1
      %s228 = smul.addr %s227, 8
      %s229 = smul.addr %s228, 8
      %s230 = scalar_lea.vmem %s0, %s229
      %p231 = scmp.lt.s32.totalorder %s17, 1
      %s232 = scalar_select %p231, %s17, 1
      %s233 = smul.addr %s232, 8
      %s234 = smul.addr %s233, 8
      %s235 = scalar_lea.vmem %s3, %s234
      %p236 = scmp.lt.s32.totalorder %s17, 1
      %s237 = scalar_select %p236, %s17, 1
      %s238 = scalar_lea.vmem %s4, %s237
      %p239 = scmp.lt.s32.totalorder %s17, 1
      %s240 = scalar_select %p239, %s17, 1
      %s241 = scalar_lea.vmem %s5, %s240
      %v242 = vld [vmem:[%s230] sm:$0xff]
      %v243 = vld [vmem:[%s230 + $0x8] sm:$0xff]
      %v244 = vld [vmem:[%s230 + $0x10] sm:$0xff]
      %v245 = vld [vmem:[%s230 + $0x18] sm:$0xff]
      %v246 = vld [vmem:[%s230 + $0x20] sm:$0xff]
      %v247 = vld [vmem:[%s230 + $0x28] sm:$0xff]
      %v248 = vld [vmem:[%s230 + $0x30] sm:$0xff]
      %v249 = vld [vmem:[%s230 + $0x38] sm:$0xff]
      %v250 = vld [vmem:[%s1] sm:$0x1]
      %v252 = vlaneseq
      %v253 = vshrl.u32 %v252, 7
      %v254 = vsub.s32 0, %v253
      %v255 = vrot.slane %v250, %v254
      %v257 = vmul.f32 %v242, %v255
      %v258 = vmul.f32 %v243, %v255
      %v259 = vmul.f32 %v244, %v255
      %v260 = vmul.f32 %v245, %v255
      %v261 = vmul.f32 %v246, %v255
      %v262 = vmul.f32 %v247, %v255
      %v263 = vmul.f32 %v248, %v255
      %v264 = vmul.f32 %v249, %v255
      %v265 = vld [vmem:[%s2] sm:$0x1]
      %v267 = vlaneseq
      %v268 = vshrl.u32 %v267, 7
      %v269 = vsub.s32 0, %v268
      %v270 = vrot.slane %v265, %v269
      %v272 = vadd.f32 %v257, %v270
      %v273 = vadd.f32 %v258, %v270
      %v274 = vadd.f32 %v259, %v270
      %v275 = vadd.f32 %v260, %v270
      %v276 = vadd.f32 %v261, %v270
      %v277 = vadd.f32 %v262, %v270
      %v278 = vadd.f32 %v263, %v270
      %v279 = vadd.f32 %v264, %v270
      %v280 = vmax.f32 %v272, 0.0
      %v281 = vmax.f32 %v273, 0.0
      %v282 = vmax.f32 %v274, 0.0
      %v283 = vmax.f32 %v275, 0.0
      %v284 = vmax.f32 %v276, 0.0
      %v285 = vmax.f32 %v277, 0.0
      %v286 = vmax.f32 %v278, 0.0
      %v287 = vmax.f32 %v279, 0.0
      %vm288 = vcmask 64512
      %289 = vst.msk [vmem:[%s235] sm:$0xff] %vm288, %v280
      %290 = vst.msk [vmem:[%s235 + $0x8] sm:$0xff] %vm288, %v281
      %291 = vst.msk [vmem:[%s235 + $0x10] sm:$0xff] %vm288, %v282
      %292 = vst.msk [vmem:[%s235 + $0x18] sm:$0xff] %vm288, %v283
      %293 = vst.msk [vmem:[%s235 + $0x20] sm:$0xff] %vm288, %v284
      %294 = vst.msk [vmem:[%s235 + $0x28] sm:$0xff] %vm288, %v285
      %295 = vst.msk [vmem:[%s235 + $0x30] sm:$0xff] %vm288, %v286
      %296 = vst.msk [vmem:[%s235 + $0x38] sm:$0xff] %vm288, %v287
      %v297 = vsel %vm288, %v280, 0.0
      %v298 = vsel %vm288, %v281, 0.0
      %v299 = vadd.f32 %v297, %v298
      %v300 = vsel %vm288, %v282, 0.0
      %v301 = vadd.f32 %v299, %v300
      %v302 = vsel %vm288, %v283, 0.0
      %v303 = vadd.f32 %v301, %v302
      %v304 = vsel %vm288, %v284, 0.0
      %v305 = vadd.f32 %v303, %v304
      %v306 = vsel %vm288, %v285, 0.0
      %v307 = vadd.f32 %v305, %v306
      %v308 = vsel %vm288, %v286, 0.0
      %v309 = vadd.f32 %v307, %v308
      %v310 = vsel %vm288, %v287, 0.0
      %v311 = vadd.f32 %v309, %v310
      %v312 = vrot.slane %v311, 4
      %v313 = vadd.f32 %v311, %v312
      %v314 = vrot.slane %v313, 2
      %v315 = vadd.f32 %v313, %v314
      %v316 = vrot.slane %v315, 1
      %v317 = vadd.f32 %v315, %v316
      %vm318 = vcmask 57344
      %319 = vst.msk [vmem:[%s238] sm:$0x1] %vm318, %v317
      %v320 = vmul.f32 %v280, %v280
      %v321 = vmul.f32 %v281, %v281
      %v322 = vmul.f32 %v282, %v282
      %v323 = vmul.f32 %v283, %v283
      %v324 = vmul.f32 %v284, %v284
      %v325 = vmul.f32 %v285, %v285
      %v326 = vmul.f32 %v286, %v286
      %v327 = vmul.f32 %v287, %v287
      %v328 = vsel %vm288, %v320, 0.0
      %v329 = vsel %vm288, %v321, 0.0
      %v330 = vadd.f32 %v328, %v329
      %v331 = vsel %vm288, %v322, 0.0
      %v332 = vadd.f32 %v330, %v331
      %v333 = vsel %vm288, %v323, 0.0
      %v334 = vadd.f32 %v332, %v333
      %v335 = vsel %vm288, %v324, 0.0
      %v336 = vadd.f32 %v334, %v335
      %v337 = vsel %vm288, %v325, 0.0
      %v338 = vadd.f32 %v336, %v337
      %v339 = vsel %vm288, %v326, 0.0
      %v340 = vadd.f32 %v338, %v339
      %v341 = vsel %vm288, %v327, 0.0
      %v342 = vadd.f32 %v340, %v341
      %v343 = vrot.slane %v342, 4
      %v344 = vadd.f32 %v342, %v343
      %v345 = vrot.slane %v344, 2
      %v346 = vadd.f32 %v344, %v345
      %v347 = vrot.slane %v346, 1
      %v348 = vadd.f32 %v346, %v347
      %349 = vst.msk [vmem:[%s241] sm:$0x1] %vm318, %v348
      %p350 = scmp.lt.s32.totalorder %s17, 1
      %s351 = scalar_select %p350, %s17, 1
      %s352 = smul.addr %s351, 8
      %s353 = smul.addr %s352, 8
      %s354 = scalar_lea.vmem %s3, %s353
      %p355 = scmp.lt.s32.totalorder %s17, 1
      %s356 = scalar_select %p355, %s17, 1
      %s357 = scalar_lea.vmem %s4, %s356
      %p358 = scmp.lt.s32.totalorder %s17, 1
      %s359 = scalar_select %p358, %s17, 1
      %s360 = scalar_lea.vmem %s5, %s359
      // Predicated region
      $region33: #{res_block_forward.7} parent=31 // pred_check
        %p361 = pneg %p103
      $region34: #{res_block_forward.7} parent=31 // pred_check_branch
        %363 = sbr.rel (%p361) target = $region36
      $region35: #{res_block_forward.7} parent=31 // pred_region
        _
      $region36: #{res_block_forward.7} parent=31 // pred_fallthru
        _
      // Predicated region
      $region37: #{res_block_forward.7} parent=31 // pred_check
        %p364 = pneg %p129
      $region38: #{res_block_forward.7} parent=31 // pred_check_branch
        %366 = sbr.rel (%p364) target = $region40
      $region39: #{res_block_forward.7} parent=31 // pred_region
        _
      $region40: #{res_block_forward.7} parent=31 // pred_fallthru
        _
      // Predicated region
      $region41: #{res_block_forward.7} parent=31 // pred_check
        %p367 = pneg %p155
      $region42: #{res_block_forward.7} parent=31 // pred_check_branch
        %369 = sbr.rel (%p367) target = $region44
      $region43: #{res_block_forward.7} parent=31 // pred_region
        _
      $region44: #{res_block_forward.7} parent=31 // pred_fallthru
        _
    $region32: #{res_block_forward.7} parent=5 // pred_fallthru
      _
    %p370 = scmp.le.s32.totalorder 2, %s12
    // Predicated region
    $region45: #{res_block_forward.7} parent=5 // pred_check
      %p371 = pneg %p370
    $region46: #{res_block_forward.7} parent=5 // pred_check_branch
      %373 = sbr.rel (%p371) target = $region48
    $region47: #{res_block_forward.7} parent=5 // pred_region
      %s374 = ssub.s32 %s12, 2
      // Predicated region
      $region49: #{res_block_forward.7} parent=47 // pred_check
        %p375 = pneg %p109
      $region50: #{res_block_forward.7} parent=47 // pred_check_branch
        %377 = sbr.rel (%p375) target = $region52
      $region51: #{res_block_forward.7} parent=47 // pred_region
        %p378 = scmp.lt.s32.totalorder %s18, 1
        %s379 = scalar_select %p378, %s18, 1
        %s380 = smul.addr %s379, 8
        %s381 = smul.addr %s380, 8
        %s382 = scalar_lea.vmem %s3, %s381
      $region52: #{res_block_forward.7} parent=47 // pred_fallthru
        _
      // Predicated region
      $region53: #{res_block_forward.7} parent=47 // pred_check
        %p383 = pneg %p135
      $region54: #{res_block_forward.7} parent=47 // pred_check_branch
        %385 = sbr.rel (%p383) target = $region56
      $region55: #{res_block_forward.7} parent=47 // pred_region
        %p386 = scmp.lt.s32.totalorder %s18, 1
        %s387 = scalar_select %p386, %s18, 1
        %s388 = scalar_lea.vmem %s4, %s387
      $region56: #{res_block_forward.7} parent=47 // pred_fallthru
        _
      // Predicated region
      $region57: #{res_block_forward.7} parent=47 // pred_check
        %p389 = pneg %p161
      $region58: #{res_block_forward.7} parent=47 // pred_check_branch
        %391 = sbr.rel (%p389) target = $region60
      $region59: #{res_block_forward.7} parent=47 // pred_region
        %p392 = scmp.lt.s32.totalorder %s18, 1
        %s393 = scalar_select %p392, %s18, 1
        %s394 = scalar_lea.vmem %s5, %s393
      $region60: #{res_block_forward.7} parent=47 // pred_fallthru
        _
    $region48: #{res_block_forward.7} parent=5 // pred_fallthru
      _
  $region6: #{res_block_forward.7} parent=0 // loop_footer
    %s16 = sadd.s32 1, %s12
  $region7: #{res_block_forward.7} parent=0 // loop_footer_branch
    %11 = sbr.rel target = $region3
  $region8: #{res_block_forward.7} parent=0 // loop_exit
    _

// kernel: res_block_forward.6
$region0: #{res_block_forward.6}
  #allocation0 [shape = 'u32[]', space=smem, size = 0x4, offset = 0x4, fixed_abs, tag = 'smem constant byte address 0x4 - core index']
  #allocation1 [shape = 'u32[144,128]{1,0:T(1,128)}', space=vmem, size = 0x12000, scoped, tag = 'internal scratch']
  %s0 = inlined_call_operand.vmem [shape: f32[2,2,2,9,9,4], index: 0, kind: input, shape index: {}]
  %s1 = inlined_call_operand.vmem [shape: bf16[9,4,8], index: 1, kind: input, shape index: {}]
  %s2 = inlined_call_operand.vmem [shape: f32[2,64,8], index: 2, kind: output, shape index: {0}]
  %s3 = inlined_call_operand.vmem [shape: f32[2,1,8], index: 3, kind: output, shape index: {1}]
  %s4 = inlined_call_operand.vmem [shape: f32[2,1,8], index: 4, kind: output, shape index: {2}]
  %5 = xla_tuple %s2, %s3, %s4
  %s6 = sld [smem:[#allocation0]]
  $region57: #{res_block_forward.6} parent=0
    _
  %s8 = ssub.s32 1, %s6
  %s9 = scalar_select 0, %s8, %s6
  loop: start=0, step=1, limit=4
  $region2: #{res_block_forward.6} parent=0 // loop_pre_header
    _
  $region3: #{res_block_forward.6} parent=0 // loop_header
    %s11 = sphi 0, %s15
    %p12 = scmp.ge.s32.totalorder %s11, 4
    %s21 = sphi 0, %s23
    %s24 = sphi 0, %s21
    %s25 = sphi 0, %s24
    %s41 = sphi 0, %s25
    %s45 = sphi 0, %s45
    %s47 = sphi 0, %s45
    %s48 = sphi 0, %s47
    %s62 = sphi 0, %s48
    %s68 = sphi 0, %s70
    %s71 = sphi 0, %s68
    %s72 = sphi 0, %s71
    %s88 = sphi 0, %s72
    %s94 = sphi 0, %s96
    %s97 = sphi 0, %s94
    %s98 = sphi 0, %s97
    %s114 = sphi 0, %s98
    %s120 = sphi 0, %s122
    %s123 = sphi 0, %s120
    %s124 = sphi 0, %s123
    %s140 = sphi 0, %s124
  $region4: #{res_block_forward.6} parent=0 // loop_header_branch
    %14 = sbr.rel (%p12) target = $region8
  $region5: #{res_block_forward.6} parent=0 // loop_body
    %s16 = ssub.s32 %s11, 1
    %s17 = ssub.s32 %s11, 2
    %s18 = sadd.s32 %s11, 1
    %s19 = ssub.s32 %s11, %s18
    %p20 = scmp.eq.s32.totalorder %s19, 0
    %s22 = sadd.s32 %s21, 1
    %s23 = scalar_select %p20, %s21, %s22
    %p26 = pneg %p20
    %p27 = scmp.eq.s32.totalorder %s11, 1
    %p28 = por %p26, %p27
    %p29 = scmp.ne.s32.totalorder %s21, %s24
    %p30 = scmp.eq.s32.totalorder %s11, 0
    %p31 = por %p29, %p30
    %p32 = scmp.ne.s32.totalorder %s21, %s24
    %p33 = scmp.eq.s32.totalorder %s16, 1
    %p34 = por %p32, %p33
    %p35 = scmp.ne.s32.totalorder %s24, %s25
    %p36 = scmp.eq.s32.totalorder %s16, 0
    %p37 = por %p35, %p36
    %p38 = scmp.ne.s32.totalorder %s24, %s25
    %p39 = scmp.eq.s32.totalorder %s17, 1
    %p40 = por %p38, %p39
    %p42 = scmp.ne.s32.totalorder %s25, %s41
    %p43 = scmp.eq.s32.totalorder %s17, 0
    %p44 = por %p42, %p43
    %s46 = sadd.s32 %s45, 1
    %p49 = scmp.eq.s32.totalorder %s11, 1
    %p50 = scmp.ne.s32.totalorder %s45, %s47
    %p51 = scmp.eq.s32.totalorder %s11, 0
    %p52 = por %p50, %p51
    %p53 = scmp.ne.s32.totalorder %s45, %s47
    %p54 = scmp.eq.s32.totalorder %s16, 1
    %p55 = por %p53, %p54
    %p56 = scmp.ne.s32.totalorder %s47, %s48
    %p57 = scmp.eq.s32.totalorder %s16, 0
    %p58 = por %p56, %p57
    %p59 = scmp.ne.s32.totalorder %s47, %s48
    %p60 = scmp.eq.s32.totalorder %s17, 1
    %p61 = por %p59, %p60
    %p63 = scmp.ne.s32.totalorder %s48, %s62
    %p64 = scmp.eq.s32.totalorder %s17, 0
    %p65 = por %p63, %p64
    %s66 = ssub.s32 %s11, %s18
    %p67 = scmp.eq.s32.totalorder %s66, 0
    %s69 = sadd.s32 %s68, 1
    %s70 = scalar_select %p67, %s68, %s69
    %p73 = pneg %p67
    %p74 = scmp.eq.s32.totalorder %s11, 1
    %p75 = por %p73, %p74
    %p76 = scmp.ne.s32.totalorder %s68, %s71
    %p77 = scmp.eq.s32.totalorder %s11, 0
    %p78 = por %p76, %p77
    %p79 = scmp.ne.s32.totalorder %s68, %s71
    %p80 = scmp.eq.s32.totalorder %s16, 1
    %p81 = por %p79, %p80
    %p82 = scmp.ne.s32.totalorder %s71, %s72
    %p83 = scmp.eq.s32.totalorder %s16, 0
    %p84 = por %p82, %p83
    %p85 = scmp.ne.s32.totalorder %s71, %s72
    %p86 = scmp.eq.s32.totalorder %s17, 1
    %p87 = por %p85, %p86
    %p89 = scmp.ne.s32.totalorder %s72, %s88
    %p90 = scmp.eq.s32.totalorder %s17, 0
    %p91 = por %p89, %p90
    %s92 = ssub.s32 %s11, %s18
    %p93 = scmp.eq.s32.totalorder %s92, 0
    %s95 = sadd.s32 %s94, 1
    %s96 = scalar_select %p93, %s94, %s95
    %p99 = pneg %p93
    %p100 = scmp.eq.s32.totalorder %s11, 1
    %p101 = por %p99, %p100
    %p102 = scmp.ne.s32.totalorder %s94, %s97
    %p103 = scmp.eq.s32.totalorder %s11, 0
    %p104 = por %p102, %p103
    %p105 = scmp.ne.s32.totalorder %s94, %s97
    %p106 = scmp.eq.s32.totalorder %s16, 1
    %p107 = por %p105, %p106
    %p108 = scmp.ne.s32.totalorder %s97, %s98
    %p109 = scmp.eq.s32.totalorder %s16, 0
    %p110 = por %p108, %p109
    %p111 = scmp.ne.s32.totalorder %s97, %s98
    %p112 = scmp.eq.s32.totalorder %s17, 1
    %p113 = por %p111, %p112
    %p115 = scmp.ne.s32.totalorder %s98, %s114
    %p116 = scmp.eq.s32.totalorder %s17, 0
    %p117 = por %p115, %p116
    %s118 = ssub.s32 %s11, %s18
    %p119 = scmp.eq.s32.totalorder %s118, 0
    %s121 = sadd.s32 %s120, 1
    %s122 = scalar_select %p119, %s120, %s121
    %p125 = pneg %p119
    %p126 = scmp.eq.s32.totalorder %s11, 1
    %p127 = por %p125, %p126
    %p128 = scmp.ne.s32.totalorder %s120, %s123
    %p129 = scmp.eq.s32.totalorder %s11, 0
    %p130 = por %p128, %p129
    %p131 = scmp.ne.s32.totalorder %s120, %s123
    %p132 = scmp.eq.s32.totalorder %s16, 1
    %p133 = por %p131, %p132
    %p134 = scmp.ne.s32.totalorder %s123, %s124
    %p135 = scmp.eq.s32.totalorder %s16, 0
    %p136 = por %p134, %p135
    %p137 = scmp.ne.s32.totalorder %s123, %s124
    %p138 = scmp.eq.s32.totalorder %s17, 1
    %p139 = por %p137, %p138
    %p141 = scmp.ne.s32.totalorder %s124, %s140
    %p142 = scmp.eq.s32.totalorder %s17, 0
    %p143 = por %p141, %p142
    %p144 = scmp.le.s32.totalorder 1, %s11
    %p145 = scmp.lt.s32.totalorder %s11, 3
    %p146 = pnand %p144, %p145
    %p147 = pneg %p146
    // Predicated region
    $region9: #{res_block_forward.6} parent=5 // pred_check
      _
    $region10: #{res_block_forward.6} parent=5 // pred_check_branch
      %149 = sbr.rel (%p146) target = $region12
    $region11: #{res_block_forward.6} parent=5 // pred_region
      %s150 = ssub.s32 %s11, 1
      // Predicated region
      $region13: #{res_block_forward.6} parent=11 // pred_check
        %p151 = pneg %p58
      $region14: #{res_block_forward.6} parent=11 // pred_check_branch
        %153 = sbr.rel (%p151) target = $region16
      $region15: #{res_block_forward.6} parent=11 // pred_region
        _
      $region16: #{res_block_forward.6} parent=11 // pred_fallthru
        _
    $region12: #{res_block_forward.6} parent=5 // pred_fallthru
      _
    %p154 = scmp.lt.s32.totalorder %s11, 2
    // Predicated region
    $region17: #{res_block_forward.6} parent=5 // pred_check
      %p155 = pneg %p154
    $region18: #{res_block_forward.6} parent=5 // pred_check_branch
      %157 = sbr.rel (%p155) target = $region20
    $region19: #{res_block_forward.6} parent=5 // pred_region
      // Predicated region
      $region21: #{res_block_forward.6} parent=19 // pred_check
        %p158 = pneg %p31
      $region22: #{res_block_forward.6} parent=19 // pred_check_branch
        %160 = sbr.rel (%p158) target = $region24
      $region23: #{res_block_forward.6} parent=19 // pred_region
        %p161 = scmp.lt.s32.totalorder %s11, 1
        %s162 = scalar_select %p161, %s11, 1
        %s163 = smul.addr %s162, 72
        %s164 = smul.addr %s163, 8
        %s165 = scalar_lea.vmem %s0, %s164
      $region24: #{res_block_forward.6} parent=19 // pred_fallthru
        _
    $region20: #{res_block_forward.6} parent=5 // pred_fallthru
      _
    %p166 = scmp.le.s32.totalorder 1, %s11
    %p167 = scmp.lt.s32.totalorder %s11, 3
    %p168 = pnand %p166, %p167
    %p169 = pneg %p168
    // Predicated region
    $region25: #{res_block_forward.6} parent=5 // pred_check
      _
    $region26: #{res_block_forward.6} parent=5 // pred_check_branch
      %171 = sbr.rel (%p168) target = $region28
    $region27: #{res_block_forward.6} parent=5 // pred_region
      %s172 = ssub.s32 %s11, 1
      %p173 = scmp.lt.s32.totalorder %s16, 1
      %s174 = scalar_select %p173, %s16, 1
      %s175 = smul.addr %s174, 72
      %s176 = smul.addr %s175, 8
      %s177 = scalar_lea.vmem %s0, %s176
      %p178 = pneg %p37
      %p179 = pneg %p34
      %p180 = pneg %p58
      %p181 = pneg %p55
      %p182 = pneg %p84
      %p183 = pneg %p81
      %p184 = scmp.lt.s32.totalorder %s16, 1
      %s185 = scalar_select %p184, %s16, 1
      %s186 = smul.addr %s185, 8
      %s187 = smul.addr %s186, 8
      %s188 = scalar_lea.vmem %s2, %s187
      %p189 = pneg %p110
      %p190 = pneg %p107
      %p191 = scmp.lt.s32.totalorder %s16, 1
      %s192 = scalar_select %p191, %s16, 1
      %s193 = scalar_lea.vmem %s3, %s192
      %p194 = pneg %p136
      %p195 = pneg %p133
      %p196 = scmp.lt.s32.totalorder %s16, 1
      %s197 = scalar_select %p196, %s16, 1
      %s198 = scalar_lea.vmem %s4, %s197
      %p199 = scmp.lt.s32.totalorder %s16, 1
      %s200 = scalar_select %p199, %s16, 1
      %s201 = smul.addr %s200, 72
      %s202 = smul.addr %s201, 8
      %s203 = scalar_lea.vmem %s0, %s202
      %p204 = scmp.lt.s32.totalorder %s16, 1
      %s205 = scalar_select %p204, %s16, 1
      %s206 = smul.addr %s205, 8
      %s207 = smul.addr %s206, 8
      %s208 = scalar_lea.vmem %s2, %s207
      %p209 = scmp.lt.s32.totalorder %s16, 1
      %s210 = scalar_select %p209, %s16, 1
      %s211 = scalar_lea.vmem %s3, %s210
      %p212 = scmp.lt.s32.totalorder %s16, 1
      %s213 = scalar_select %p212, %s16, 1
      %s214 = scalar_lea.vmem %s4, %s213
      %v216 = vld [vmem:[%s203] sm:$0xff]
      %v217 = vld [vmem:[%s203 + $0x10] sm:$0xff]
      %v218 = vld [vmem:[%s203 + $0x20] sm:$0xff]
      %v219 = vld [vmem:[%s203 + $0x30] sm:$0xff]
      %v220 = vld [vmem:[%s203 + $0x40] sm:$0xff]
      %v221 = vld [vmem:[%s203 + $0x50] sm:$0xff]
      %v222 = vld [vmem:[%s203 + $0x60] sm:$0xff]
      %v223 = vld [vmem:[%s203 + $0x70] sm:$0xff]
      %v224 = vpack.c.bf16 %v217, %v216
      %v225 = vpack.c.bf16 %v219, %v218
      %v226 = vpack.c.bf16 %v221, %v220
      %v227 = vpack.c.bf16 %v223, %v222
      %v228 = vld [vmem:[%s1] sm:$0x3]
      %s229 = scalar_lea.vmem %s203, 144
      %v230 = vld [vmem:[%s229] sm:$0xff]
      %v231 = vld [vmem:[%s229 + $0x10] sm:$0xff]
      %v232 = vld [vmem:[%s229 + $0x20] sm:$0xff]
      %v233 = vld [vmem:[%s229 + $0x30] sm:$0xff]
      %v234 = vld [vmem:[%s229 + $0x40] sm:$0xff]
      %v235 = vld [vmem:[%s229 + $0x50] sm:$0xff]
      %v236 = vld [vmem:[%s229 + $0x60] sm:$0xff]
      %v237 = vld [vmem:[%s229 + $0x70] sm:$0xff]
      %v238 = vpack.c.bf16 %v231, %v230
      %v239 = vpack.c.bf16 %v233, %v232
      %v240 = vpack.c.bf16 %v235, %v234
      %v241 = vpack.c.bf16 %v237, %v236
      %s242 = scalar_lea.vmem %s1, 2
      %v243 = vld [vmem:[%s242] sm:$0x3]
      %vm244 = vcmask 31744
      %v246 = vsel %vm244, %v238, 0
      %v249 = vsel %vm244, %v239, 0
      %v252 = vsel %vm244, %v240, 0
      %v255 = vsel %vm244, %v241, 0
      %vm257 = vcmask 1041408
      %v259 = vsel %vm257, %v243, 0
      %261 = vmatprep.subr.bf16.mxu0 0
      %262 = vmatpush1.bf16.msra.mxu0 %v259
      %263 = vmatprep.subr.bf16.mxu0 0
      %264 = vmatpush1.bf16.msra.mxu0 0
      %265 = vmatprep.subr.bf16.mxu0 0
      %266 = vmatpush1.bf16.msra.mxu0 0
      %267 = vmatprep.subr.bf16.mxu0 0
      %268 = vmatpush1.bf16.msra.mxu0 0
      %269 = vmatprep.subr.bf16.mxu0 0
      %270 = vmatpush1.bf16.msra.mxu0 0
      %271 = vmatprep.subr.bf16.mxu0 0
      %272 = vmatpush1.bf16.msra.mxu0 0
      %273 = vmatprep.subr.bf16.mxu0 0
      %274 = vmatpush1.bf16.msra.mxu0 0
      %275 = vmatprep.subr.bf16.mxu0 0
      %276 = vmatpush1.bf16.msra.mxu0 0
      %277 = vmatprep.subr.bf16.mxu0 0
      %278 = vmatpush1.bf16.msra.mxu0 0
      %279 = vmatprep.subr.bf16.mxu0 0
      %280 = vmatpush1.bf16.msra.mxu0 0
      %281 = vmatprep.subr.bf16.mxu0 0
      %282 = vmatpush1.bf16.msra.mxu0 0
      %283 = vmatprep.subr.bf16.mxu0 0
      %284 = vmatpush1.bf16.msra.mxu0 0
      %285 = vmatprep.subr.bf16.mxu0 0
      %286 = vmatpush1.bf16.msra.mxu0 0
      %287 = vmatprep.subr.bf16.mxu0 0
      %288 = vmatpush1.bf16.msra.mxu0 0
      %289 = vmatprep.subr.bf16.mxu0 0
      %290 = vmatpush1.bf16.msra.mxu0 0
      %291 = vmatprep.subr.bf16.mxu0 0
      %292 = vmatpush1.bf16.msra.mxu0 0
      %293 = vmatprep.mubr.bf16.mxu0 0
      %294 = vmatmul.mubr.bf16.gmra.mrb[0].mxu0 %v246
      %v295 = vpop.f32.mrb[0].mxu0
      %v296 = vadd.f32 0.0, %v295
      %v297 = vpop.f32.mrb[0].mxu0
      %v298 = vpop.f32.mrb[0].mxu0
      %v299 = vadd.f32 0.0, %v298
      %v300 = vpop.f32.mrb[0].mxu0
      %301 = vmatprep.mubr.bf16.mxu0 0
      %302 = vmatmul.mubr.bf16.gmra.mrb[0].mxu0 %v249
      %v303 = vpop.f32.mrb[0].mxu0
      %v304 = vadd.f32 0.0, %v303
      %v305 = vpop.f32.mrb[0].mxu0
      %v306 = vpop.f32.mrb[0].mxu0
      %v307 = vadd.f32 0.0, %v306
      %v308 = vpop.f32.mrb[0].mxu0
      %309 = vmatprep.mubr.bf16.mxu0 0
      %310 = vmatmul.mubr.bf16.gmra.mrb[0].mxu0 %v252
      %v311 = vpop.f32.mrb[0].mxu0
      %v312 = vadd.f32 0.0, %v311
      %v313 = vpop.f32.mrb[0].mxu0
      %v314 = vpop.f32.mrb[0].mxu0
      %v315 = vadd.f32 0.0, %v314
      %v316 = vpop.f32.mrb[0].mxu0
      %317 = vmatprep.mubr.bf16.mxu0 0
      %318 = vmatmul.mubr.bf16.gmra.mrb[0].mxu0 %v255
      %v319 = vpop.f32.mrb[0].mxu0
      %v320 = vadd.f32 0.0, %v319
      %v321 = vpop.f32.mrb[0].mxu0
      %v322 = vpop.f32.mrb[0].mxu0
      %v323 = vadd.f32 0.0, %v322
      %v324 = vpop.f32.mrb[0].mxu0
      %325 = vdwg.mxu0
      %v327 = vsel %vm244, %v224, 0
      %v330 = vsel %vm244, %v225, 0
      %v333 = vsel %vm244, %v226, 0
      %v336 = vsel %vm244, %v227, 0
      %v339 = vsel %vm257, %v228, 0
      %341 = vmatprep.subr.bf16.mxu0 0
      %342 = vmatpush1.bf16.msra.mxu0 %v339
      %343 = vmatprep.subr.bf16.mxu0 0
      %344 = vmatpush1.bf16.msra.mxu0 0
      %345 = vmatprep.subr.bf16.mxu0 0
      %346 = vmatpush1.bf16.msra.mxu0 0
      %347 = vmatprep.subr.bf16.mxu0 0
      %348 = vmatpush1.bf16.msra.mxu0 0
      %349 = vmatprep.subr.bf16.mxu0 0
      %350 = vmatpush1.bf16.msra.mxu0 0
      %351 = vmatprep.subr.bf16.mxu0 0
      %352 = vmatpush1.bf16.msra.mxu0 0
      %353 = vmatprep.subr.bf16.mxu0 0
      %354 = vmatpush1.bf16.msra.mxu0 0
      %355 = vmatprep.subr.bf16.mxu0 0
      %356 = vmatpush1.bf16.msra.mxu0 0
      %357 = vmatprep.subr.bf16.mxu0 0
      %358 = vmatpush1.bf16.msra.mxu0 0
      %359 = vmatprep.subr.bf16.mxu0 0
      %360 = vmatpush1.bf16.msra.mxu0 0
      %361 = vmatprep.subr.bf16.mxu0 0
      %362 = vmatpush1.bf16.msra.mxu0 0
      %363 = vmatprep.subr.bf16.mxu0 0
      %364 = vmatpush1.bf16.msra.mxu0 0
      %365 = vmatprep.subr.bf16.mxu0 0
      %366 = vmatpush1.bf16.msra.mxu0 0
      %367 = vmatprep.subr.bf16.mxu0 0
      %368 = vmatpush1.bf16.msra.mxu0 0
      %369 = vmatprep.subr.bf16.mxu0 0
      %370 = vmatpush1.bf16.msra.mxu0 0
      %371 = vmatprep.subr.bf16.mxu0 0
      %372 = vmatpush1.bf16.msra.mxu0 0
      %373 = vmatprep.mubr.bf16.mxu0 0
      %374 = vmatmul.mubr.bf16.gmra.mrb[0].mxu0 %v327
      %v375 = vpop.f32.mrb[0].mxu0
      %v376 = vadd.f32 %v296, %v375
      %v377 = vpop.f32.mrb[0].mxu0
      %v378 = vpop.f32.mrb[0].mxu0
      %v379 = vadd.f32 %v299, %v378
      %v380 = vpop.f32.mrb[0].mxu0
      %381 = vmatprep.mubr.bf16.mxu0 0
      %382 = vmatmul.mubr.bf16.gmra.mrb[0].mxu0 %v330
      %v383 = vpop.f32.mrb[0].mxu0
      %v384 = vadd.f32 %v304, %v383
      %v385 = vpop.f32.mrb[0].mxu0
      %v386 = vpop.f32.mrb[0].mxu0
      %v387 = vadd.f32 %v307, %v386
      %v388 = vpop.f32.mrb[0].mxu0
      %389 = vmatprep.mubr.bf16.mxu0 0
      %390 = vmatmul.mubr.bf16.gmra.mrb[0].mxu0 %v333
      %v391 = vpop.f32.mrb[0].mxu0
      %v392 = vadd.f32 %v312, %v391
      %v393 = vpop.f32.mrb[0].mxu0
      %v394 = vpop.f32.mrb[0].mxu0
      %v395 = vadd.f32 %v315, %v394
      %v396 = vpop.f32.mrb[0].mxu0
      %397 = vmatprep.mubr.bf16.mxu0 0
      %398 = vmatmul.mubr.bf16.gmra.mrb[0].mxu0 %v336
      %v399 = vpop.f32.mrb[0].mxu0
      %v400 = vadd.f32 %v320, %v399
      %v401 = vpop.f32.mrb[0].mxu0
      %v402 = vpop.f32.mrb[0].mxu0
      %v403 = vadd.f32 %v323, %v402
      %v404 = vpop.f32.mrb[0].mxu0
      %405 = vdwg.mxu0
      %v406 = vld [vmem:[%s203 + $0x1] sm:$0xff]
      %v407 = vld [vmem:[%s203 + $0x11] sm:$0xff]
      %v408 = vld [vmem:[%s203 + $0x21] sm:$0xff]
      %v409 = vld [vmem:[%s203 + $0x31] sm:$0xff]
      %v410 = vld [vmem:[%s203 + $0x41] sm:$0xff]
      %v411 = vld [vmem:[%s203 + $0x51] sm:$0xff]
      %v412 = vld [vmem:[%s203 + $0x61] sm:$0xff]
      %v413 = vld [vmem:[%s203 + $0x71] sm:$0xff]
      %v414 = vpack.c.bf16 %v407, %v406
      %v415 = vpack.c.bf16 %v409, %v408
      %v416 = vpack.c.bf16 %v411, %v410
      %v417 = vpack.c.bf16 %v413, %v412
      %s418 = scalar_lea.vmem %s1, 4
      %v419 = vld [vmem:[%s418] sm:$0x3]
      %v421 = vsel %vm244, %v414, 0
      %v424 = vsel %vm244, %v415, 0
      %v427 = vsel %vm244, %v416, 0
      %v430 = vsel %vm244, %v417, 0
      %v433 = vsel %vm257, %v419, 0
      %435 = vmatprep.subr.bf16.mxu0 0
      %436 = vmatpush1.bf16.msra.mxu0 %v433
      %437 = vmatprep.subr.bf16.mxu0 0
      %438 = vmatpush1.bf16.msra.mxu0 0
      %439 = vmatprep.subr.bf16.mxu0 0
      %440 = vmatpush1.bf16.msra.mxu0 0
      %441 = vmatprep.subr.bf16.mxu0 0
      %442 = vmatpush1.bf16.msra.mxu0 0
      %443 = vmatprep.subr.bf16.mxu0 0
      %444 = vmatpush1.bf16.msra.mxu0 0
      %445 = vmatprep.subr.bf16.mxu0 0
      %446 = vmatpush1.bf16.msra.mxu0 0
      %447 = vmatprep.subr.bf16.mxu0 0
      %448 = vmatpush1.bf16.msra.mxu0 0
      %449 = vmatprep.subr.bf16.mxu0 0
      %450 = vmatpush1.bf16.msra.mxu0 0
      %451 = vmatprep.subr.bf16.mxu0 0
      %452 = vmatpush1.bf16.msra.mxu0 0
      %453 = vmatprep.subr.bf16.mxu0 0
      %454 = vmatpush1.bf16.msra.mxu0 0
      %455 = vmatprep.subr.bf16.mxu0 0
      %456 = vmatpush1.bf16.msra.mxu0 0
      %457 = vmatprep.subr.bf16.mxu0 0
      %458 = vmatpush1.bf16.msra.mxu0 0
      %459 = vmatprep.subr.bf16.mxu0 0
      %460 = vmatpush1.bf16.msra.mxu0 0
      %461 = vmatprep.subr.bf16.mxu0 0
      %462 = vmatpush1.bf16.msra.mxu0 0
      %463 = vmatprep.subr.bf16.mxu0 0
      %464 = vmatpush1.bf16.msra.mxu0 0
      %465 = vmatprep.subr.bf16.mxu0 0
      %466 = vmatpush1.bf16.msra.mxu0 0
      %467 = vmatprep.mubr.bf16.mxu0 0
      %468 = vmatmul.mubr.bf16.gmra.mrb[0].mxu0 %v421
      %v469 = vpop.f32.mrb[0].mxu0
      %v470 = vadd.f32 0.0, %v469
      %v471 = vpop.f32.mrb[0].mxu0
      %v472 = vpop.f32.mrb[0].mxu0
      %v473 = vadd.f32 0.0, %v472
      %v474 = vpop.f32.mrb[0].mxu0
      %475 = vmatprep.mubr.bf16.mxu0 0
      %476 = vmatmul.mubr.bf16.gmra.mrb[0].mxu0 %v424
      %v477 = vpop.f32.mrb[0].mxu0
      %v478 = vadd.f32 0.0, %v477
      %v479 = vpop.f32.mrb[0].mxu0
      %v480 = vpop.f32.mrb[0].mxu0
      %v481 = vadd.f32 0.0, %v480
      %v482 = vpop.f32.mrb[0].mxu0
      %483 = vmatprep.mubr.bf16.mxu0 0
      %484 = vmatmul.mubr.bf16.gmra.mrb[0].mxu0 %v427
      %v485 = vpop.f32.mrb[0].mxu0
      %v486 = vadd.f32 0.0, %v485
      %v487 = vpop.f32.mrb[0].mxu0
      %v488 = vpop.f32.mrb[0].mxu0
      %v489 = vadd.f32 0.0, %v488
      %v490 = vpop.f32.mrb[0].mxu0
      %491 = vmatprep.mubr.bf16.mxu0 0
      %492 = vmatmul.mubr.bf16.gmra.mrb[0].mxu0 %v430
      %v493 = vpop.f32.mrb[0].mxu0
      %v494 = vadd.f32 0.0, %v493
      %v495 = vpop.f32.mrb[0].mxu0
      %v496 = vpop.f32.mrb[0].mxu0
      %v497 = vadd.f32 0.0, %v496
      %v498 = vpop.f32.mrb[0].mxu0
      %499 = vdwg.mxu0
      %v500 = vadd.f32 %v376, %v470
      %v501 = vadd.f32 %v379, %v473
      %v502 = vadd.f32 %v384, %v478
      %v503 = vadd.f32 %v387, %v481
      %v504 = vadd.f32 %v392, %v486
      %v505 = vadd.f32 %v395, %v489
      %v506 = vadd.f32 %v400, %v494
      %v507 = vadd.f32 %v403, %v497
      %s508 = scalar_lea.vmem %s203, 288
      %v509 = vld [vmem:[%s508] sm:$0xff]
      %v510 = vld [vmem:[%s508 + $0x10] sm:$0xff]
      %v511 = vld [vmem:[%s508 + $0x20] sm:$0xff]
      %v512 = vld [vmem:[%s508 + $0x30] sm:$0xff]
      %v513 = vld [vmem:[%s508 + $0x40] sm:$0xff]
      %v514 = vld [vmem:[%s508 + $0x50] sm:$0xff]
      %v515 = vld [vmem:[%s508 + $0x60] sm:$0xff]
      %v516 = vld [vmem:[%s508 + $0x70] sm:$0xff]
      %v517 = vpack.c.bf16 %v510, %v509
      %v518 = vpack.c.bf16 %v512, %v511
      %v519 = vpack.c.bf16 %v514, %v513
      %v520 = vpack.c.bf16 %v516, %v515
      %s521 = scalar_lea.vmem %s1, 6
      %v522 = vld [vmem:[%s521] sm:$0x3]
      %v524 = vsel %vm244, %v517, 0
      %v527 = vsel %vm244, %v518, 0
      %v530 = vsel %vm244, %v519, 0
      %v533 = vsel %vm244, %v520, 0
      %v536 = vsel %vm257, %v522, 0
      %538 = vmatprep.subr.bf16.mxu0 0
      %539 = vmatpush1.bf16.msra.mxu0 %v536
      %540 = vmatprep.subr.bf16.mxu0 0
      %541 = vmatpush1.bf16.msra.mxu0 0
      %542 = vmatprep.subr.bf16.mxu0 0
      %543 = vmatpush1.bf16.msra.mxu0 0
      %544 = vmatprep.subr.bf16.mxu0 0
      %545 = vmatpush1.bf16.msra.mxu0 0
      %546 = vmatprep.subr.bf16.mxu0 0
      %547 = vmatpush1.bf16.msra.mxu0 0
      %548 = vmatprep.subr.bf16.mxu0 0
      %549 = vmatpush1.bf16.msra.mxu0 0
      %550 = vmatprep.subr.bf16.mxu0 0
      %551 = vmatpush1.bf16.msra.mxu0 0
      %552 = vmatprep.subr.bf16.mxu0 0
      %553 = vmatpush1.bf16.msra.mxu0 0
      %554 = vmatprep.subr.bf16.mxu0 0
      %555 = vmatpush1.bf16.msra.mxu0 0
      %556 = vmatprep.subr.bf16.mxu0 0
      %557 = vmatpush1.bf16.msra.mxu0 0
      %558 = vmatprep.subr.bf16.mxu0 0
      %559 = vmatpush1.bf16.msra.mxu0 0
      %560 = vmatprep.subr.bf16.mxu0 0
      %561 = vmatpush1.bf16.msra.mxu0 0
      %562 = vmatprep.subr.bf16.mxu0 0
      %563 = vmatpush1.bf16.msra.mxu0 0
      %564 = vmatprep.subr.bf16.mxu0 0
      %565 = vmatpush1.bf16.msra.mxu0 0
      %566 = vmatprep.subr.bf16.mxu0 0
      %567 = vmatpush1.bf16.msra.mxu0 0
      %568 = vmatprep.subr.bf16.mxu0 0
      %569 = vmatpush1.bf16.msra.mxu0 0
      %570 = vmatprep.mubr.bf16.mxu0 0
      %571 = vmatmul.mubr.bf16.gmra.mrb[0].mxu0 %v524
      %v572 = vpop.f32.mrb[0].mxu0
      %v573 = vadd.f32 0.0, %v572
      %v574 = vpop.f32.mrb[0].mxu0
      %v575 = vpop.f32.mrb[0].mxu0
      %v576 = vadd.f32 0.0, %v575
      %v577 = vpop.f32.mrb[0].mxu0
      %578 = vmatprep.mubr.bf16.mxu0 0
      %579 = vmatmul.mubr.bf16.gmra.mrb[0].mxu0 %v527
      %v580 = vpop.f32.mrb[0].mxu0
      %v581 = vadd.f32 0.0, %v580
      %v582 = vpop.f32.mrb[0].mxu0
      %v583 = vpop.f32.mrb[0].mxu0
      %v584 = vadd.f32 0.0, %v583
      %v585 = vpop.f32.mrb[0].mxu0
      %586 = vmatprep.mubr.bf16.mxu0 0
      %587 = vmatmul.mubr.bf16.gmra.mrb[0].mxu0 %v530
      %v588 = vpop.f32.mrb[0].mxu0
      %v589 = vadd.f32 0.0, %v588
      %v590 = vpop.f32.mrb[0].mxu0
      %v591 = vpop.f32.mrb[0].mxu0
      %v592 = vadd.f32 0.0, %v591
      %v593 = vpop.f32.mrb[0].mxu0
      %594 = vmatprep.mubr.bf16.mxu0 0
      %595 = vmatmul.mubr.bf16.gmra.mrb[0].mxu0 %v533
      %v596 = vpop.f32.mrb[0].mxu0
      %v597 = vadd.f32 0.0, %v596
      %v598 = vpop.f32.mrb[0].mxu0
      %v599 = vpop.f32.mrb[0].mxu0
      %v600 = vadd.f32 0.0, %v599
      %v601 = vpop.f32.mrb[0].mxu0
      %602 = vdwg.mxu0
      %v603 = vadd.f32 %v500, %v573
      %v604 = vadd.f32 %v501, %v576
      %v605 = vadd.f32 %v502, %v581
      %v606 = vadd.f32 %v503, %v584
      %v607 = vadd.f32 %v504, %v589
      %v608 = vadd.f32 %v505, %v592
      %v609 = vadd.f32 %v506, %v597
      %v610 = vadd.f32 %v507, %v600
      %s611 = scalar_lea.vmem %s203, 432
      %v612 = vld [vmem:[%s611] sm:$0xff]
      %v613 = vld [vmem:[%s611 + $0x10] sm:$0xff]
      %v614 = vld [vmem:[%s611 + $0x20] sm:$0xff]
      %v615 = vld [vmem:[%s611 + $0x30] sm:$0xff]
      %v616 = vld [vmem:[%s611 + $0x40] sm:$0xff]
      %v617 = vld [vmem:[%s611 + $0x50] sm:$0xff]
      %v618 = vld [vmem:[%s611 + $0x60] sm:$0xff]
      %v619 = vld [vmem:[%s611 + $0x70] sm:$0xff]
      %v620 = vpack.c.bf16 %v613, %v612
      %v621 = vpack.c.bf16 %v615, %v614
      %v622 = vpack.c.bf16 %v617, %v616
      %v623 = vpack.c.bf16 %v619, %v618
      %s624 = scalar_lea.vmem %s1, 8
      %v625 = vld [vmem:[%s624] sm:$0x3]
      %v627 = vsel %vm244, %v620, 0
      %v630 = vsel %vm244, %v621, 0
      %v633 = vsel %vm244, %v622, 0
      %v636 = vsel %vm244, %v623, 0
      %v639 = vsel %vm257, %v625, 0
      %641 = vmatprep.subr.bf16.mxu0 0
      %642 = vmatpush1.bf16.msra.mxu0 %v639
      %643 = vmatprep.subr.bf16.mxu0 0
      %644 = vmatpush1.bf16.msra.mxu0 0
      %645 = vmatprep.subr.bf16.mxu0 0
      %646 = vmatpush1.bf16.msra.mxu0 0
      %647 = vmatprep.subr.bf16.mxu0 0
      %648 = vmatpush1.bf16.msra.mxu0 0
      %649 = vmatprep.subr.bf16.mxu0 0
      %650 = vmatpush1.bf16.msra.mxu0 0
      %651 = vmatprep.subr.bf16.mxu0 0
      %652 = vmatpush1.bf16.msra.mxu0 0
      %653 = vmatprep.subr.bf16.mxu0 0
      %654 = vmatpush1.bf16.msra.mxu0 0
      %655 = vmatprep.subr.bf16.mxu0 0
      %656 = vmatpush1.bf16.msra.mxu0 0
      %657 = vmatprep.subr.bf16.mxu0 0
      %658 = vmatpush1.bf16.msra.mxu0 0
      %659 = vmatprep.subr.bf16.mxu0 0
      %660 = vmatpush1.bf16.msra.mxu0 0
      %661 = vmatprep.subr.bf16.mxu0 0
      %662 = vmatpush1.bf16.msra.mxu0 0
      %663 = vmatprep.subr.bf16.mxu0 0
      %664 = vmatpush1.bf16.msra.mxu0 0
      %665 = vmatprep.subr.bf16.mxu0 0
      %666 = vmatpush1.bf16.msra.mxu0 0
      %667 = vmatprep.subr.bf16.mxu0 0
      %668 = vmatpush1.bf16.msra.mxu0 0
      %669 = vmatprep.subr.bf16.mxu0 0
      %670 = vmatpush1.bf16.msra.mxu0 0
      %671 = vmatprep.subr.bf16.mxu0 0
      %672 = vmatpush1.bf16.msra.mxu0 0
      %673 = vmatprep.mubr.bf16.mxu0 0
      %674 = vmatmul.mubr.bf16.gmra.mrb[0].mxu0 %v627
      %v675 = vpop.f32.mrb[0].mxu0
      %v676 = vadd.f32 0.0, %v675
      %v677 = vpop.f32.mrb[0].mxu0
      %v678 = vpop.f32.mrb[0].mxu0
      %v679 = vadd.f32 0.0, %v678
      %v680 = vpop.f32.mrb[0].mxu0
      %681 = vmatprep.mubr.bf16.mxu0 0
      %682 = vmatmul.mubr.bf16.gmra.mrb[0].mxu0 %v630
      %v683 = vpop.f32.mrb[0].mxu0
      %v684 = vadd.f32 0.0, %v683
      %v685 = vpop.f32.mrb[0].mxu0
      %v686 = vpop.f32.mrb[0].mxu0
      %v687 = vadd.f32 0.0, %v686
      %v688 = vpop.f32.mrb[0].mxu0
      %689 = vmatprep.mubr.bf16.mxu0 0
      %690 = vmatmul.mubr.bf16.gmra.mrb[0].mxu0 %v633
      %v691 = vpop.f32.mrb[0].mxu0
      %v692 = vadd.f32 0.0, %v691
      %v693 = vpop.f32.mrb[0].mxu0
      %v694 = vpop.f32.mrb[0].mxu0
      %v695 = vadd.f32 0.0, %v694
      %v696 = vpop.f32.mrb[0].mxu0
      %697 = vmatprep.mubr.bf16.mxu0 0
      %698 = vmatmul.mubr.bf16.gmra.mrb[0].mxu0 %v636
      %v699 = vpop.f32.mrb[0].mxu0
      %v700 = vadd.f32 0.0, %v699
      %v701 = vpop.f32.mrb[0].mxu0
      %v702 = vpop.f32.mrb[0].mxu0
      %v703 = vadd.f32 0.0, %v702
      %v704 = vpop.f32.mrb[0].mxu0
      %705 = vdwg.mxu0
      %v706 = vadd.f32 %v603, %v676
      %v707 = vadd.f32 %v604, %v679
      %v708 = vadd.f32 %v605, %v684
      %v709 = vadd.f32 %v606, %v687
      %v710 = vadd.f32 %v607, %v692
      %v711 = vadd.f32 %v608, %v695
      %v712 = vadd.f32 %v609, %v700
      %v713 = vadd.f32 %v610, %v703
      %v714 = vld [vmem:[%s508 + $0x1] sm:$0xff]
      %v715 = vld [vmem:[%s508 + $0x11] sm:$0xff]
      %v716 = vld [vmem:[%s508 + $0x21] sm:$0xff]
      %v717 = vld [vmem:[%s508 + $0x31] sm:$0xff]
      %v718 = vld [vmem:[%s508 + $0x41] sm:$0xff]
      %v719 = vld [vmem:[%s508 + $0x51] sm:$0xff]
      %v720 = vld [vmem:[%s508 + $0x61] sm:$0xff]
      %v721 = vld [vmem:[%s508 + $0x71] sm:$0xff]
      %v722 = vpack.c.bf16 %v715, %v714
      %v723 = vpack.c.bf16 %v717, %v716
      %v724 = vpack.c.bf16 %v719, %v718
      %v725 = vpack.c.bf16 %v721, %v720
      %s726 = scalar_lea.vmem %s1, 10
      %v727 = vld [vmem:[%s726] sm:$0x3]
      %v729 = vsel %vm244, %v722, 0
      %v732 = vsel %vm244, %v723, 0
      %v735 = vsel %vm244, %v724, 0
      %v738 = vsel %vm244, %v725, 0
      %v741 = vsel %vm257, %v727, 0
      %743 = vmatprep.subr.bf16.mxu0 0
      %744 = vmatpush1.bf16.msra.mxu0 %v741
      %745 = vmatprep.subr.bf16.mxu0 0
      %746 = vmatpush1.bf16.msra.mxu0 0
      %747 = vmatprep.subr.bf16.mxu0 0
      %748 = vmatpush1.bf16.msra.mxu0 0
      %749 = vmatprep.subr.bf16.mxu0 0
      %750 = vmatpush1.bf16.msra.mxu0 0
      %751 = vmatprep.subr.bf16.mxu0 0
      %752 = vmatpush1.bf16.msra.mxu0 0
      %753 = vmatprep.subr.bf16.mxu0 0
      %754 = vmatpush1.bf16.msra.mxu0 0
      %755 = vmatprep.subr.bf16.mxu0 0
      %756 = vmatpush1.bf16.msra.mxu0 0
      %757 = vmatprep.subr.bf16.mxu0 0
      %758 = vmatpush1.bf16.msra.mxu0 0
      %759 = vmatprep.subr.bf16.mxu0 0
      %760 = vmatpush1.bf16.msra.mxu0 0
      %761 = vmatprep.subr.bf16.mxu0 0
      %762 = vmatpush1.bf16.msra.mxu0 0
      %763 = vmatprep.subr.bf16.mxu0 0
      %764 = vmatpush1.bf16.msra.mxu0 0
      %765 = vmatprep.subr.bf16.mxu0 0
      %766 = vmatpush1.bf16.msra.mxu0 0
      %767 = vmatprep.subr.bf16.mxu0 0
      %768 = vmatpush1.bf16.msra.mxu0 0
      %769 = vmatprep.subr.bf16.mxu0 0
      %770 = vmatpush1.bf16.msra.mxu0 0
      %771 = vmatprep.subr.bf16.mxu0 0
      %772 = vmatpush1.bf16.msra.mxu0 0
      %773 = vmatprep.subr.bf16.mxu0 0
      %774 = vmatpush1.bf16.msra.mxu0 0
      %775 = vmatprep.mubr.bf16.mxu0 0
      %776 = vmatmul.mubr.bf16.gmra.mrb[0].mxu0 %v729
      %v777 = vpop.f32.mrb[0].mxu0
      %v778 = vadd.f32 0.0, %v777
      %v779 = vpop.f32.mrb[0].mxu0
      %v780 = vpop.f32.mrb[0].mxu0
      %v781 = vadd.f32 0.0, %v780
      %v782 = vpop.f32.mrb[0].mxu0
      %783 = vmatprep.mubr.bf16.mxu0 0
      %784 = vmatmul.mubr.bf16.gmra.mrb[0].mxu0 %v732
      %v785 = vpop.f32.mrb[0].mxu0
      %v786 = vadd.f32 0.0, %v785
      %v787 = vpop.f32.mrb[0].mxu0
      %v788 = vpop.f32.mrb[0].mxu0
      %v789 = vadd.f32 0.0, %v788
      %v790 = vpop.f32.mrb[0].mxu0
      %791 = vmatprep.mubr.bf16.mxu0 0
      %792 = vmatmul.mubr.bf16.gmra.mrb[0].mxu0 %v735
      %v793 = vpop.f32.mrb[0].mxu0
      %v794 = vadd.f32 0.0, %v793
      %v795 = vpop.f32.mrb[0].mxu0
      %v796 = vpop.f32.mrb[0].mxu0
      %v797 = vadd.f32 0.0, %v796
      %v798 = vpop.f32.mrb[0].mxu0
      %799 = vmatprep.mubr.bf16.mxu0 0
      %800 = vmatmul.mubr.bf16.gmra.mrb[0].mxu0 %v738
      %v801 = vpop.f32.mrb[0].mxu0
      %v802 = vadd.f32 0.0, %v801
      %v803 = vpop.f32.mrb[0].mxu0
      %v804 = vpop.f32.mrb[0].mxu0
      %v805 = vadd.f32 0.0, %v804
      %v806 = vpop.f32.mrb[0].mxu0
      %807 = vdwg.mxu0
      %v808 = vadd.f32 %v706, %v778
      %v809 = vadd.f32 %v707, %v781
      %v810 = vadd.f32 %v708, %v786
      %v811 = vadd.f32 %v709, %v789
      %v812 = vadd.f32 %v710, %v794
      %v813 = vadd.f32 %v711, %v797
      %v814 = vadd.f32 %v712, %v802
      %v815 = vadd.f32 %v713, %v805
      %s816 = scalar_lea.vmem %s203, 16
      %v817 = vld [vmem:[%s816] sm:$0xff]
      %v818 = vld [vmem:[%s816 + $0x10] sm:$0xff]
      %v819 = vld [vmem:[%s816 + $0x20] sm:$0xff]
      %v820 = vld [vmem:[%s816 + $0x30] sm:$0xff]
      %v821 = vld [vmem:[%s816 + $0x40] sm:$0xff]
      %v822 = vld [vmem:[%s816 + $0x50] sm:$0xff]
      %v823 = vld [vmem:[%s816 + $0x60] sm:$0xff]
      %v824 = vld [vmem:[%s816 + $0x70] sm:$0xff]
      %v825 = vpack.c.bf16 %v818, %v817
      %v826 = vpack.c.bf16 %v820, %v819
      %v827 = vpack.c.bf16 %v822, %v821
      %v828 = vpack.c.bf16 %v824, %v823
      %s829 = scalar_lea.vmem %s1, 12
      %v830 = vld [vmem:[%s829] sm:$0x3]
      %v832 = vsel %vm244, %v825, 0
      %v835 = vsel %vm244, %v826, 0
      %v838 = vsel %vm244, %v827, 0
      %v841 = vsel %vm244, %v828, 0
      %v844 = vsel %vm257, %v830, 0
      %846 = vmatprep.subr.bf16.mxu0 0
      %847 = vmatpush1.bf16.msra.mxu0 %v844
      %848 = vmatprep.subr.bf16.mxu0 0
      %849 = vmatpush1.bf16.msra.mxu0 0
      %850 = vmatprep.subr.bf16.mxu0 0
      %851 = vmatpush1.bf16.msra.mxu0 0
      %852 = vmatprep.subr.bf16.mxu0 0
      %853 = vmatpush1.bf16.msra.mxu0 0
      %854 = vmatprep.subr.bf16.mxu0 0
      %855 = vmatpush1.bf16.msra.mxu0 0
      %856 = vmatprep.subr.bf16.mxu0 0
      %857 = vmatpush1.bf16.msra.mxu0 0
      %858 = vmatprep.subr.bf16.mxu0 0
      %859 = vmatpush1.bf16.msra.mxu0 0
      %860 = vmatprep.subr.bf16.mxu0 0
      %861 = vmatpush1.bf16.msra.mxu0 0
      %862 = vmatprep.subr.bf16.mxu0 0
      %863 = vmatpush1.bf16.msra.mxu0 0
      %864 = vmatprep.subr.bf16.mxu0 0
      %865 = vmatpush1.bf16.msra.mxu0 0
      %866 = vmatprep.subr.bf16.mxu0 0
      %867 = vmatpush1.bf16.msra.mxu0 0
      %868 = vmatprep.subr.bf16.mxu0 0
      %869 = vmatpush1.bf16.msra.mxu0 0
      %870 = vmatprep.subr.bf16.mxu0 0
      %871 = vmatpush1.bf16.msra.mxu0 0
      %872 = vmatprep.subr.bf16.mxu0 0
      %873 = vmatpush1.bf16.msra.mxu0 0
      %874 = vmatprep.subr.bf16.mxu0 0
      %875 = vmatpush1.bf16.msra.mxu0 0
      %876 = vmatprep.subr.bf16.mxu0 0
      %877 = vmatpush1.bf16.msra.mxu0 0
      %878 = vmatprep.mubr.bf16.mxu0 0
      %879 = vmatmul.mubr.bf16.gmra.mrb[0].mxu0 %v832
      %v880 = vpop.f32.mrb[0].mxu0
      %v881 = vadd.f32 0.0, %v880
      %v882 = vpop.f32.mrb[0].mxu0
      %v883 = vpop.f32.mrb[0].mxu0
      %v884 = vadd.f32 0.0, %v883
      %v885 = vpop.f32.mrb[0].mxu0
      %886 = vmatprep.mubr.bf16.mxu0 0
      %887 = vmatmul.mubr.bf16.gmra.mrb[0].mxu0 %v835
      %v888 = vpop.f32.mrb[0].mxu0
      %v889 = vadd.f32 0.0, %v888
      %v890 = vpop.f32.mrb[0].mxu0
      %v891 = vpop.f32.mrb[0].mxu0
      %v892 = vadd.f32 0.0, %v891
      %v893 = vpop.f32.mrb[0].mxu0
      %894 = vmatprep.mubr.bf16.mxu0 0
      %895 = vmatmul.mubr.bf16.gmra.mrb[0].mxu0 %v838
      %v896 = vpop.f32.mrb[0].mxu0
      %v897 = vadd.f32 0.0, %v896
      %v898 = vpop.f32.mrb[0].mxu0
      %v899 = vpop.f32.mrb[0].mxu0
      %v900 = vadd.f32 0.0, %v899
      %v901 = vpop.f32.mrb[0].mxu0
      %902 = vmatprep.mubr.bf16.mxu0 0
      %903 = vmatmul.mubr.bf16.gmra.mrb[0].mxu0 %v841
      %v904 = vpop.f32.mrb[0].mxu0
      %v905 = vadd.f32 0.0, %v904
      %v906 = vpop.f32.mrb[0].mxu0
      %v907 = vpop.f32.mrb[0].mxu0
      %v908 = vadd.f32 0.0, %v907
      %v909 = vpop.f32.mrb[0].mxu0
      %910 = vdwg.mxu0
      %v911 = vadd.f32 %v808, %v881
      %v912 = vadd.f32 %v809, %v884
      %v913 = vadd.f32 %v810, %v889
      %v914 = vadd.f32 %v811, %v892
      %v915 = vadd.f32 %v812, %v897
      %v916 = vadd.f32 %v813, %v900
      %v917 = vadd.f32 %v814, %v905
      %v918 = vadd.f32 %v815, %v908
      %s919 = scalar_lea.vmem %s203, 160
      %v920 = vld [vmem:[%s919] sm:$0xff]
      %v921 = vld [vmem:[%s919 + $0x10] sm:$0xff]
      %v922 = vld [vmem:[%s919 + $0x20] sm:$0xff]
      %v923 = vld [vmem:[%s919 + $0x30] sm:$0xff]
      %v924 = vld [vmem:[%s919 + $0x40] sm:$0xff]
      %v925 = vld [vmem:[%s919 + $0x50] sm:$0xff]
      %v926 = vld [vmem:[%s919 + $0x60] sm:$0xff]
      %v927 = vld [vmem:[%s919 + $0x70] sm:$0xff]
      %v928 = vpack.c.bf16 %v921, %v920
      %v929 = vpack.c.bf16 %v923, %v922
      %v930 = vpack.c.bf16 %v925, %v924
      %v931 = vpack.c.bf16 %v927, %v926
      %s932 = scalar_lea.vmem %s1, 14
      %v933 = vld [vmem:[%s932] sm:$0x3]
      %v935 = vsel %vm244, %v928, 0
      %v938 = vsel %vm244, %v929, 0
      %v941 = vsel %vm244, %v930, 0
      %v944 = vsel %vm244, %v931, 0
      %v947 = vsel %vm257, %v933, 0
      %949 = vmatprep.subr.bf16.mxu0 0
      %950 = vmatpush1.bf16.msra.mxu0 %v947
      %951 = vmatprep.subr.bf16.mxu0 0
      %952 = vmatpush1.bf16.msra.mxu0 0
      %953 = vmatprep.subr.bf16.mxu0 0
      %954 = vmatpush1.bf16.msra.mxu0 0
      %955 = vmatprep.subr.bf16.mxu0 0
      %956 = vmatpush1.bf16.msra.mxu0 0
      %957 = vmatprep.subr.bf16.mxu0 0
      %958 = vmatpush1.bf16.msra.mxu0 0
      %959 = vmatprep.subr.bf16.mxu0 0
      %960 = vmatpush1.bf16.msra.mxu0 0
      %961 = vmatprep.subr.bf16.mxu0 0
      %962 = vmatpush1.bf16.msra.mxu0 0
      %963 = vmatprep.subr.bf16.mxu0 0
      %964 = vmatpush1.bf16.msra.mxu0 0
      %965 = vmatprep.subr.bf16.mxu0 0
      %966 = vmatpush1.bf16.msra.mxu0 0
      %967 = vmatprep.subr.bf16.mxu0 0
      %968 = vmatpush1.bf16.msra.mxu0 0
      %969 = vmatprep.subr.bf16.mxu0 0
      %970 = vmatpush1.bf16.msra.mxu0 0
      %971 = vmatprep.subr.bf16.mxu0 0
      %972 = vmatpush1.bf16.msra.mxu0 0
      %973 = vmatprep.subr.bf16.mxu0 0
      %974 = vmatpush1.bf16.msra.mxu0 0
      %975 = vmatprep.subr.bf16.mxu0 0
      %976 = vmatpush1.bf16.msra.mxu0 0
      %977 = vmatprep.subr.bf16.mxu0 0
      %978 = vmatpush1.bf16.msra.mxu0 0
      %979 = vmatprep.subr.bf16.mxu0 0
      %980 = vmatpush1.bf16.msra.mxu0 0
      %981 = vmatprep.mubr.bf16.mxu0 0
      %982 = vmatmul.mubr.bf16.gmra.mrb[0].mxu0 %v935
      %v983 = vpop.f32.mrb[0].mxu0
      %v984 = vadd.f32 0.0, %v983
      %v985 = vpop.f32.mrb[0].mxu0
      %v986 = vpop.f32.mrb[0].mxu0
      %v987 = vadd.f32 0.0, %v986
      %v988 = vpop.f32.mrb[0].mxu0
      %989 = vmatprep.mubr.bf16.mxu0 0
      %990 = vmatmul.mubr.bf16.gmra.mrb[0].mxu0 %v938
      %v991 = vpop.f32.mrb[0].mxu0
      %v992 = vadd.f32 0.0, %v991
      %v993 = vpop.f32.mrb[0].mxu0
      %v994 = vpop.f32.mrb[0].mxu0
      %v995 = vadd.f32 0.0, %v994
      %v996 = vpop.f32.mrb[0].mxu0
      %997 = vmatprep.mubr.bf16.mxu0 0
      %998 = vmatmul.mubr.bf16.gmra.mrb[0].mxu0 %v941
      %v999 = vpop.f32.mrb[0].mxu0
      %v1000 = vadd.f32 0.0, %v999
      %v1001 = vpop.f32.mrb[0].mxu0
      %v1002 = vpop.f32.mrb[0].mxu0
      %v1003 = vadd.f32 0.0, %v1002
      %v1004 = vpop.f32.mrb[0].mxu0
      %1005 = vmatprep.mubr.bf16.mxu0 0
      %1006 = vmatmul.mubr.bf16.gmra.mrb[0].mxu0 %v944
      %v1007 = vpop.f32.mrb[0].mxu0
      %v1008 = vadd.f32 0.0, %v1007
      %v1009 = vpop.f32.mrb[0].mxu0
      %v1010 = vpop.f32.mrb[0].mxu0
      %v1011 = vadd.f32 0.0, %v1010
      %v1012 = vpop.f32.mrb[0].mxu0
      %1013 = vdwg.mxu0
      %v1014 = vadd.f32 %v911, %v984
      %v1015 = vadd.f32 %v912, %v987
      %v1016 = vadd.f32 %v913, %v992
      %v1017 = vadd.f32 %v914, %v995
      %v1018 = vadd.f32 %v915, %v1000
      %v1019 = vadd.f32 %v916, %v1003
      %v1020 = vadd.f32 %v917, %v1008
      %v1021 = vadd.f32 %v918, %v1011
      %v1022 = vld [vmem:[%s816 + $0x1] sm:$0xff]
      %v1023 = vld [vmem:[%s816 + $0x11] sm:$0xff]
      %v1024 = vld [vmem:[%s816 + $0x21] sm:$0xff]
      %v1025 = vld [vmem:[%s816 + $0x31] sm:$0xff]
      %v1026 = vld [vmem:[%s816 + $0x41] sm:$0xff]
      %v1027 = vld [vmem:[%s816 + $0x51] sm:$0xff]
      %v1028 = vld [vmem:[%s816 + $0x61] sm:$0xff]
      %v1029 = vld [vmem:[%s816 + $0x71] sm:$0xff]
      %v1030 = vpack.c.bf16 %v1023, %v1022
      %v1031 = vpack.c.bf16 %v1025, %v1024
      %v1032 = vpack.c.bf16 %v1027, %v1026
      %v1033 = vpack.c.bf16 %v1029, %v1028
      %s1034 = scalar_lea.vmem %s1, 16
      %v1035 = vld [vmem:[%s1034] sm:$0x3]
      %v1037 = vsel %vm244, %v1030, 0
      %v1040 = vsel %vm244, %v1031, 0
      %v1043 = vsel %vm244, %v1032, 0
      %v1046 = vsel %vm244, %v1033, 0
      %v1049 = vsel %vm257, %v1035, 0
      %1051 = vmatprep.subr.bf16.mxu0 0
      %1052 = vmatpush1.bf16.msra.mxu0 %v1049
      %1053 = vmatprep.subr.bf16.mxu0 0
      %1054 = vmatpush1.bf16.msra.mxu0 0
      %1055 = vmatprep.subr.bf16.mxu0 0
      %1056 = vmatpush1.bf16.msra.mxu0 0
      %1057 = vmatprep.subr.bf16.mxu0 0
      %1058 = vmatpush1.bf16.msra.mxu0 0
      %1059 = vmatprep.subr.bf16.mxu0 0
      %1060 = vmatpush1.bf16.msra.mxu0 0
      %1061 = vmatprep.subr.bf16.mxu0 0
      %1062 = vmatpush1.bf16.msra.mxu0 0
      %1063 = vmatprep.subr.bf16.mxu0 0
      %1064 = vmatpush1.bf16.msra.mxu0 0
      %1065 = vmatprep.subr.bf16.mxu0 0
      %1066 = vmatpush1.bf16.msra.mxu0 0
      %1067 = vmatprep.subr.bf16.mxu0 0
      %1068 = vmatpush1.bf16.msra.mxu0 0
      %1069 = vmatprep.subr.bf16.mxu0 0
      %1070 = vmatpush1.bf16.msra.mxu0 0
      %1071 = vmatprep.subr.bf16.mxu0 0
      %1072 = vmatpush1.bf16.msra.mxu0 0
      %1073 = vmatprep.subr.bf16.mxu0 0
      %1074 = vmatpush1.bf16.msra.mxu0 0
      %1075 = vmatprep.subr.bf16.mxu0 0
      %1076 = vmatpush1.bf16.msra.mxu0 0
      %1077 = vmatprep.subr.bf16.mxu0 0
      %1078 = vmatpush1.bf16.msra.mxu0 0
      %1079 = vmatprep.subr.bf16.mxu0 0
      %1080 = vmatpush1.bf16.msra.mxu0 0
      %1081 = vmatprep.subr.bf16.mxu0 0
      %1082 = vmatpush1.bf16.msra.mxu0 0
      %1083 = vmatprep.mubr.bf16.mxu0 0
      %1084 = vmatmul.mubr.bf16.gmra.mrb[0].mxu0 %v1037
      %v1085 = vpop.f32.mrb[0].mxu0
      %v1086 = vadd.f32 0.0, %v1085
      %v1087 = vpop.f32.mrb[0].mxu0
      %v1088 = vpop.f32.mrb[0].mxu0
      %v1089 = vadd.f32 0.0, %v1088
      %v1090 = vpop.f32.mrb[0].mxu0
      %1091 = vmatprep.mubr.bf16.mxu0 0
      %1092 = vmatmul.mubr.bf16.gmra.mrb[0].mxu0 %v1040
      %v1093 = vpop.f32.mrb[0].mxu0
      %v1094 = vadd.f32 0.0, %v1093
      %v1095 = vpop.f32.mrb[0].mxu0
      %v1096 = vpop.f32.mrb[0].mxu0
      %v1097 = vadd.f32 0.0, %v1096
      %v1098 = vpop.f32.mrb[0].mxu0
      %1099 = vmatprep.mubr.bf16.mxu0 0
      %1100 = vmatmul.mubr.bf16.gmra.mrb[0].mxu0 %v1043
      %v1101 = vpop.f32.mrb[0].mxu0
      %v1102 = vadd.f32 0.0, %v1101
      %v1103 = vpop.f32.mrb[0].mxu0
      %v1104 = vpop.f32.mrb[0].mxu0
      %v1105 = vadd.f32 0.0, %v1104
      %v1106 = vpop.f32.mrb[0].mxu0
      %1107 = vmatprep.mubr.bf16.mxu0 0
      %1108 = vmatmul.mubr.bf16.gmra.mrb[0].mxu0 %v1046
      %v1109 = vpop.f32.mrb[0].mxu0
      %v1110 = vadd.f32 0.0, %v1109
      %v1111 = vpop.f32.mrb[0].mxu0
      %v1112 = vpop.f32.mrb[0].mxu0
      %v1113 = vadd.f32 0.0, %v1112
      %v1114 = vpop.f32.mrb[0].mxu0
      %1115 = vdwg.mxu0
      %v1116 = vadd.f32 %v1014, %v1086
      %v1117 = vadd.f32 %v1015, %v1089
      %v1118 = vadd.f32 %v1016, %v1094
      %v1119 = vadd.f32 %v1017, %v1097
      %v1120 = vadd.f32 %v1018, %v1102
      %v1121 = vadd.f32 %v1019, %v1105
      %v1122 = vadd.f32 %v1020, %v1110
      %v1123 = vadd.f32 %v1021, %v1113
      %vm1124 = vcmask 64512
      %1125 = vst.msk [vmem:[%s208] sm:$0xff] %vm1124, %v1116
      %1126 = vst.msk [vmem:[%s208 + $0x8] sm:$0xff] %vm1124, %v1117
      %1127 = vst.msk [vmem:[%s208 + $0x10] sm:$0xff] %vm1124, %v1118
      %1128 = vst.msk [vmem:[%s208 + $0x18] sm:$0xff] %vm1124, %v1119
      %1129 = vst.msk [vmem:[%s208 + $0x20] sm:$0xff] %vm1124, %v1120
      %1130 = vst.msk [vmem:[%s208 + $0x28] sm:$0xff] %vm1124, %v1121
      %1131 = vst.msk [vmem:[%s208 + $0x30] sm:$0xff] %vm1124, %v1122
      %1132 = vst.msk [vmem:[%s208 + $0x38] sm:$0xff] %vm1124, %v1123
      %v1133 = vsel %vm1124, %v1116, 0.0
      %v1134 = vsel %vm1124, %v1117, 0.0
      %v1135 = vadd.f32 %v1133, %v1134
      %v1136 = vsel %vm1124, %v1118, 0.0
      %v1137 = vadd.f32 %v1135, %v1136
      %v1138 = vsel %vm1124, %v1119, 0.0
      %v1139 = vadd.f32 %v1137, %v1138
      %v1140 = vsel %vm1124, %v1120, 0.0
      %v1141 = vadd.f32 %v1139, %v1140
      %v1142 = vsel %vm1124, %v1121, 0.0
      %v1143 = vadd.f32 %v1141, %v1142
      %v1144 = vsel %vm1124, %v1122, 0.0
      %v1145 = vadd.f32 %v1143, %v1144
      %v1146 = vsel %vm1124, %v1123, 0.0
      %v1147 = vadd.f32 %v1145, %v1146
      %v1148 = vrot.slane %v1147, 4
      %v1149 = vadd.f32 %v1147, %v1148
      %v1150 = vrot.slane %v1149, 2
      %v1151 = vadd.f32 %v1149, %v1150
      %v1152 = vrot.slane %v1151, 1
      %v1153 = vadd.f32 %v1151, %v1152
      %vm1154 = vcmask 57344
      %1155 = vst.msk [vmem:[%s211] sm:$0x1] %vm1154, %v1153
      %v1156 = vmul.f32 %v1116, %v1116
      %v1157 = vmul.f32 %v1117, %v1117
      %v1158 = vmul.f32 %v1118, %v1118
      %v1159 = vmul.f32 %v1119, %v1119
      %v1160 = vmul.f32 %v1120, %v1120
      %v1161 = vmul.f32 %v1121, %v1121
      %v1162 = vmul.f32 %v1122, %v1122
      %v1163 = vmul.f32 %v1123, %v1123
      %v1164 = vsel %vm1124, %v1156, 0.0
      %v1165 = vsel %vm1124, %v1157, 0.0
      %v1166 = vadd.f32 %v1164, %v1165
      %v1167 = vsel %vm1124, %v1158, 0.0
      %v1168 = vadd.f32 %v1166, %v1167
      %v1169 = vsel %vm1124, %v1159, 0.0
      %v1170 = vadd.f32 %v1168, %v1169
      %v1171 = vsel %vm1124, %v1160, 0.0
      %v1172 = vadd.f32 %v1170, %v1171
      %v1173 = vsel %vm1124, %v1161, 0.0
      %v1174 = vadd.f32 %v1172, %v1173
      %v1175 = vsel %vm1124, %v1162, 0.0
      %v1176 = vadd.f32 %v1174, %v1175
      %v1177 = vsel %vm1124, %v1163, 0.0
      %v1178 = vadd.f32 %v1176, %v1177
      %v1179 = vrot.slane %v1178, 4
      %v1180 = vadd.f32 %v1178, %v1179
      %v1181 = vrot.slane %v1180, 2
      %v1182 = vadd.f32 %v1180, %v1181
      %v1183 = vrot.slane %v1182, 1
      %v1184 = vadd.f32 %v1182, %v1183
      %1185 = vst.msk [vmem:[%s214] sm:$0x1] %vm1154, %v1184
      %p1186 = scmp.lt.s32.totalorder %s16, 1
      %s1187 = scalar_select %p1186, %s16, 1
      %s1188 = smul.addr %s1187, 8
      %s1189 = smul.addr %s1188, 8
      %s1190 = scalar_lea.vmem %s2, %s1189
      %p1191 = scmp.lt.s32.totalorder %s16, 1
      %s1192 = scalar_select %p1191, %s16, 1
      %s1193 = scalar_lea.vmem %s3, %s1192
      %p1194 = scmp.lt.s32.totalorder %s16, 1
      %s1195 = scalar_select %p1194, %s16, 1
      %s1196 = scalar_lea.vmem %s4, %s1195
      // Predicated region
      $region29: #{res_block_forward.6} parent=27 // pred_check
        %p1197 = pneg %p81
      $region30: #{res_block_forward.6} parent=27 // pred_check_branch
        %1199 = sbr.rel (%p1197) target = $region32
      $region31: #{res_block_forward.6} parent=27 // pred_region
        _
      $region32: #{res_block_forward.6} parent=27 // pred_fallthru
        _
      // Predicated region
      $region33: #{res_block_forward.6} parent=27 // pred_check
        %p1200 = pneg %p107
      $region34: #{res_block_forward.6} parent=27 // pred_check_branch
        %1202 = sbr.rel (%p1200) target = $region36
      $region35: #{res_block_forward.6} parent=27 // pred_region
        _
      $region36: #{res_block_forward.6} parent=27 // pred_fallthru
        _
      // Predicated region
      $region37: #{res_block_forward.6} parent=27 // pred_check
        %p1203 = pneg %p133
      $region38: #{res_block_forward.6} parent=27 // pred_check_branch
        %1205 = sbr.rel (%p1203) target = $region40
      $region39: #{res_block_forward.6} parent=27 // pred_region
        _
      $region40: #{res_block_forward.6} parent=27 // pred_fallthru
        _
    $region28: #{res_block_forward.6} parent=5 // pred_fallthru
      _
    %p1206 = scmp.le.s32.totalorder 2, %s11
    // Predicated region
    $region41: #{res_block_forward.6} parent=5 // pred_check
      %p1207 = pneg %p1206
    $region42: #{res_block_forward.6} parent=5 // pred_check_branch
      %1209 = sbr.rel (%p1207) target = $region44
    $region43: #{res_block_forward.6} parent=5 // pred_region
      %s1210 = ssub.s32 %s11, 2
      // Predicated region
      $region45: #{res_block_forward.6} parent=43 // pred_check
        %p1211 = pneg %p87
      $region46: #{res_block_forward.6} parent=43 // pred_check_branch
        %1213 = sbr.rel (%p1211) target = $region48
      $region47: #{res_block_forward.6} parent=43 // pred_region
        %p1214 = scmp.lt.s32.totalorder %s17, 1
        %s1215 = scalar_select %p1214, %s17, 1
        %s1216 = smul.addr %s1215, 8
        %s1217 = smul.addr %s1216, 8
        %s1218 = scalar_lea.vmem %s2, %s1217
      $region48: #{res_block_forward.6} parent=43 // pred_fallthru
        _
      // Predicated region
      $region49: #{res_block_forward.6} parent=43 // pred_check
        %p1219 = pneg %p113
      $region50: #{res_block_forward.6} parent=43 // pred_check_branch
        %1221 = sbr.rel (%p1219) target = $region52
      $region51: #{res_block_forward.6} parent=43 // pred_region
        %p1222 = scmp.lt.s32.totalorder %s17, 1
        %s1223 = scalar_select %p1222, %s17, 1
        %s1224 = scalar_lea.vmem %s3, %s1223
      $region52: #{res_block_forward.6} parent=43 // pred_fallthru
        _
      // Predicated region
      $region53: #{res_block_forward.6} parent=43 // pred_check
        %p1225 = pneg %p139
      $region54: #{res_block_forward.6} parent=43 // pred_check_branch
        %1227 = sbr.rel (%p1225) target = $region56
      $region55: #{res_block_forward.6} parent=43 // pred_region
        %p1228 = scmp.lt.s32.totalorder %s17, 1
        %s1229 = scalar_select %p1228, %s17, 1
        %s1230 = scalar_lea.vmem %s4, %s1229
      $region56: #{res_block_forward.6} parent=43 // pred_fallthru
        _
    $region44: #{res_block_forward.6} parent=5 // pred_fallthru
      _
  $region6: #{res_block_forward.6} parent=0 // loop_footer
    %s15 = sadd.s32 1, %s11
  $region7: #{res_block_forward.6} parent=0 // loop_footer_branch
    %10 = sbr.rel target = $region3
  $region8: #{res_block_forward.6} parent=0 // loop_exit
    _

// kernel: res_block_forward.9
$region0: #{res_block_forward.9}
  #allocation0 [shape = 'u32[]', space=smem, size = 0x4, offset = 0x4, fixed_abs, tag = 'smem constant byte address 0x4 - core index']
  #allocation1 [shape = 'u32[144,128]{1,0:T(1,128)}', space=vmem, size = 0x12000, scoped, tag = 'internal scratch']
  %s0 = inlined_call_operand.vmem [shape: f32[2,64,8], index: 0, kind: input, shape index: {}]
  %s1 = inlined_call_operand.vmem [shape: f32[1,8], index: 1, kind: input, shape index: {}]
  %s2 = inlined_call_operand.vmem [shape: f32[1,8], index: 2, kind: input, shape index: {}]
  %s3 = inlined_call_operand.vmem [shape: bf16[2,64,4], index: 3, kind: input, shape index: {}]
  %s4 = inlined_call_operand.vmem [shape: bf16[4,8], index: 4, kind: input, shape index: {}]
  %s5 = inlined_call_operand.vmem [shape: f32[1,8], index: 5, kind: input, shape index: {}]
  %s6 = inlined_call_operand.hbm [shape: f32[2,64,8], index: 6, kind: output, shape index: {}]
  %s7 = sld [smem:[#allocation0]]
  $region57: #{res_block_forward.9} parent=0
    _
  %s9 = ssub.s32 1, %s7
  %s10 = scalar_select 0, %s9, %s7
  $region1: #{res_block_forward.9} parent=0
    #allocation2 [shape = 'u8[65536]{0}', space=vmem, size = 0x10000, scoped, tag = 'output window, operand 0']
    #allocation3 [shape = 's32[2]{0}', space=sflag, size = 0x8, scoped, tag = 'scoped memory for res_block_forward.9']
    %11 = vsyncpa [#allocation3], 0
    %s12 = scalar_lea.sflag [#allocation3], 1
    %13 = vsyncpa %s12, 0
    loop: start=0, step=1, limit=4
    $region2: #{res_block_forward.9} parent=1 // loop_pre_header
      _
    $region3: #{res_block_forward.9} parent=1 // loop_header
      %s15 = sphi 0, %s19
      %p16 = scmp.ge.s32.totalorder %s15, 4
      %s25 = sphi 0, %s27
      %s28 = sphi 0, %s25
      %s29 = sphi 0, %s28
      %s45 = sphi 0, %s29
      %s49 = sphi 0, %s49
      %s51 = sphi 0, %s49
      %s52 = sphi 0, %s51
      %s66 = sphi 0, %s52
      %s70 = sphi 0, %s70
      %s72 = sphi 0, %s70
      %s73 = sphi 0, %s72
      %s87 = sphi 0, %s73
      %s93 = sphi 0, %s95
      %s96 = sphi 0, %s93
      %s97 = sphi 0, %s96
      %s113 = sphi 0, %s97
      %s117 = sphi 0, %s117
      %s119 = sphi 0, %s117
      %s120 = sphi 0, %s119
      %s134 = sphi 0, %s120
      %s138 = sphi 0, %s138
      %s140 = sphi 0, %s138
      %s141 = sphi 0, %s140
      %s155 = sphi 0, %s141
      %s161 = sphi 0, %s163
      %s164 = sphi 0, %s161
      %s165 = sphi 0, %s164
      %s181 = sphi 0, %s165
    $region4: #{res_block_forward.9} parent=1 // loop_header_branch
      %18 = sbr.rel (%p16) target = $region8
    $region5: #{res_block_forward.9} parent=1 // loop_body
      %s20 = ssub.s32 %s15, 1
      %s21 = ssub.s32 %s15, 2
      %s22 = sadd.s32 %s15, 1
      %s23 = ssub.s32 %s15, %s22
      %p24 = scmp.eq.s32.totalorder %s23, 0
      %s26 = sadd.s32 %s25, 1
      %s27 = scalar_select %p24, %s25, %s26
      %p30 = pneg %p24
      %p31 = scmp.eq.s32.totalorder %s15, 1
      %p32 = por %p30, %p31
      %p33 = scmp.ne.s32.totalorder %s25, %s28
      %p34 = scmp.eq.s32.totalorder %s15, 0
      %p35 = por %p33, %p34
      %p36 = scmp.ne.s32.totalorder %s25, %s28
      %p37 = scmp.eq.s32.totalorder %s20, 1
      %p38 = por %p36, %p37
      %p39 = scmp.ne.s32.totalorder %s28, %s29
      %p40 = scmp.eq.s32.totalorder %s20, 0
      %p41 = por %p39, %p40
      %p42 = scmp.ne.s32.totalorder %s28, %s29
      %p43 = scmp.eq.s32.totalorder %s21, 1
      %p44 = por %p42, %p43
      %p46 = scmp.ne.s32.totalorder %s29, %s45
      %p47 = scmp.eq.s32.totalorder %s21, 0
      %p48 = por %p46, %p47
      %s50 = sadd.s32 %s49, 1
      %p53 = scmp.eq.s32.totalorder %s15, 1
      %p54 = scmp.ne.s32.totalorder %s49, %s51
      %p55 = scmp.eq.s32.totalorder %s15, 0
      %p56 = por %p54, %p55
      %p57 = scmp.ne.s32.totalorder %s49, %s51
      %p58 = scmp.eq.s32.totalorder %s20, 1
      %p59 = por %p57, %p58
      %p60 = scmp.ne.s32.totalorder %s51, %s52
      %p61 = scmp.eq.s32.totalorder %s20, 0
      %p62 = por %p60, %p61
      %p63 = scmp.ne.s32.totalorder %s51, %s52
      %p64 = scmp.eq.s32.totalorder %s21, 1
      %p65 = por %p63, %p64
      %p67 = scmp.ne.s32.totalorder %s52, %s66
      %p68 = scmp.eq.s32.totalorder %s21, 0
      %p69 = por %p67, %p68
      %s71 = sadd.s32 %s70, 1
      %p74 = scmp.eq.s32.totalorder %s15, 1
      %p75 = scmp.ne.s32.totalorder %s70, %s72
      %p76 = scmp.eq.s32.totalorder %s15, 0
      %p77 = por %p75, %p76
      %p78 = scmp.ne.s32.totalorder %s70, %s72
      %p79 = scmp.eq.s32.totalorder %s20, 1
      %p80 = por %p78, %p79
      %p81 = scmp.ne.s32.totalorder %s72, %s73
      %p82 = scmp.eq.s32.totalorder %s20, 0
      %p83 = por %p81, %p82
      %p84 = scmp.ne.s32.totalorder %s72, %s73
      %p85 = scmp.eq.s32.totalorder %s21, 1
      %p86 = por %p84, %p85
      %p88 = scmp.ne.s32.totalorder %s73, %s87
      %p89 = scmp.eq.s32.totalorder %s21, 0
      %p90 = por %p88, %p89
      %s91 = ssub.s32 %s15, %s22
      %p92 = scmp.eq.s32.totalorder %s91, 0
      %s94 = sadd.s32 %s93, 1
      %s95 = scalar_select %p92, %s93, %s94
      %p98 = pneg %p92
      %p99 = scmp.eq.s32.totalorder %s15, 1
      %p100 = por %p98, %p99
      %p101 = scmp.ne.s32.totalorder %s93, %s96
      %p102 = scmp.eq.s32.totalorder %s15, 0
      %p103 = por %p101, %p102
      %p104 = scmp.ne.s32.totalorder %s93, %s96
      %p105 = scmp.eq.s32.totalorder %s20, 1
      %p106 = por %p104, %p105
      %p107 = scmp.ne.s32.totalorder %s96, %s97
      %p108 = scmp.eq.s32.totalorder %s20, 0
      %p109 = por %p107, %p108
      %p110 = scmp.ne.s32.totalorder %s96, %s97
      %p111 = scmp.eq.s32.totalorder %s21, 1
      %p112 = por %p110, %p111
      %p114 = scmp.ne.s32.totalorder %s97, %s113
      %p115 = scmp.eq.s32.totalorder %s21, 0
      %p116 = por %p114, %p115
      %s118 = sadd.s32 %s117, 1
      %p121 = scmp.eq.s32.totalorder %s15, 1
      %p122 = scmp.ne.s32.totalorder %s117, %s119
      %p123 = scmp.eq.s32.totalorder %s15, 0
      %p124 = por %p122, %p123
      %p125 = scmp.ne.s32.totalorder %s117, %s119
      %p126 = scmp.eq.s32.totalorder %s20, 1
      %p127 = por %p125, %p126
      %p128 = scmp.ne.s32.totalorder %s119, %s120
      %p129 = scmp.eq.s32.totalorder %s20, 0
      %p130 = por %p128, %p129
      %p131 = scmp.ne.s32.totalorder %s119, %s120
      %p132 = scmp.eq.s32.totalorder %s21, 1
      %p133 = por %p131, %p132
      %p135 = scmp.ne.s32.totalorder %s120, %s134
      %p136 = scmp.eq.s32.totalorder %s21, 0
      %p137 = por %p135, %p136
      %s139 = sadd.s32 %s138, 1
      %p142 = scmp.eq.s32.totalorder %s15, 1
      %p143 = scmp.ne.s32.totalorder %s138, %s140
      %p144 = scmp.eq.s32.totalorder %s15, 0
      %p145 = por %p143, %p144
      %p146 = scmp.ne.s32.totalorder %s138, %s140
      %p147 = scmp.eq.s32.totalorder %s20, 1
      %p148 = por %p146, %p147
      %p149 = scmp.ne.s32.totalorder %s140, %s141
      %p150 = scmp.eq.s32.totalorder %s20, 0
      %p151 = por %p149, %p150
      %p152 = scmp.ne.s32.totalorder %s140, %s141
      %p153 = scmp.eq.s32.totalorder %s21, 1
      %p154 = por %p152, %p153
      %p156 = scmp.ne.s32.totalorder %s141, %s155
      %p157 = scmp.eq.s32.totalorder %s21, 0
      %p158 = por %p156, %p157
      %s159 = ssub.s32 %s15, %s22
      %p160 = scmp.eq.s32.totalorder %s159, 0
      %s162 = sadd.s32 %s161, 1
      %s163 = scalar_select %p160, %s161, %s162
      %p166 = pneg %p160
      %p167 = scmp.eq.s32.totalorder %s15, 1
      %p168 = por %p166, %p167
      %p169 = scmp.ne.s32.totalorder %s161, %s164
      %p170 = scmp.eq.s32.totalorder %s15, 0
      %p171 = por %p169, %p170
      %p172 = scmp.ne.s32.totalorder %s161, %s164
      %p173 = scmp.eq.s32.totalorder %s20, 1
      %p174 = por %p172, %p173
      %p175 = scmp.ne.s32.totalorder %s164, %s165
      %p176 = scmp.eq.s32.totalorder %s20, 0
      %p177 = por %p175, %p176
      %p178 = scmp.ne.s32.totalorder %s164, %s165
      %p179 = scmp.eq.s32.totalorder %s21, 1
      %p180 = por %p178, %p179
      %p182 = scmp.ne.s32.totalorder %s165, %s181
      %p183 = scmp.eq.s32.totalorder %s21, 0
      %p184 = por %p182, %p183
      %p185 = scmp.le.s32.totalorder 1, %s15
      %p186 = scmp.lt.s32.totalorder %s15, 3
      %p187 = pnand %p185, %p186
      %p188 = pneg %p187
      // Predicated region
      $region9: #{res_block_forward.9} parent=5 // pred_check
        _
      $region10: #{res_block_forward.9} parent=5 // pred_check_branch
        %190 = sbr.rel (%p187) target = $region12
      $region11: #{res_block_forward.9} parent=5 // pred_region
        %s191 = ssub.s32 %s15, 1
        // Predicated region
        $region13: #{res_block_forward.9} parent=11 // pred_check
          %p192 = pneg %p62
        $region14: #{res_block_forward.9} parent=11 // pred_check_branch
          %194 = sbr.rel (%p192) target = $region16
        $region15: #{res_block_forward.9} parent=11 // pred_region
          _
        $region16: #{res_block_forward.9} parent=11 // pred_fallthru
          _
        // Predicated region
        $region17: #{res_block_forward.9} parent=11 // pred_check
          %p195 = pneg %p83
        $region18: #{res_block_forward.9} parent=11 // pred_check_branch
          %197 = sbr.rel (%p195) target = $region20
        $region19: #{res_block_forward.9} parent=11 // pred_region
          _
        $region20: #{res_block_forward.9} parent=11 // pred_fallthru
          _
        // Predicated region
        $region21: #{res_block_forward.9} parent=11 // pred_check
          %p198 = pneg %p130
        $region22: #{res_block_forward.9} parent=11 // pred_check_branch
          %200 = sbr.rel (%p198) target = $region24
        $region23: #{res_block_forward.9} parent=11 // pred_region
          _
        $region24: #{res_block_forward.9} parent=11 // pred_fallthru
          _
        // Predicated region
        $region25: #{res_block_forward.9} parent=11 // pred_check
          %p201 = pneg %p151
        $region26: #{res_block_forward.9} parent=11 // pred_check_branch
          %203 = sbr.rel (%p201) target = $region28
        $region27: #{res_block_forward.9} parent=11 // pred_region
          _
        $region28: #{res_block_forward.9} parent=11 // pred_fallthru
          _
      $region12: #{res_block_forward.9} parent=5 // pred_fallthru
        _
      %p204 = scmp.lt.s32.totalorder %s15, 2
      // Predicated region
      $region29: #{res_block_forward.9} parent=5 // pred_check
        %p205 = pneg %p204
      $region30: #{res_block_forward.9} parent=5 // pred_check_branch
        %207 = sbr.rel (%p205) target = $region32
      $region31: #{res_block_forward.9} parent=5 // pred_region
        // Predicated region
        $region33: #{res_block_forward.9} parent=31 // pred_check
          %p208 = pneg %p35
        $region34: #{res_block_forward.9} parent=31 // pred_check_branch
          %210 = sbr.rel (%p208) target = $region36
        $region35: #{res_block_forward.9} parent=31 // pred_region
          %p211 = scmp.lt.s32.totalorder %s15, 1
          %s212 = scalar_select %p211, %s15, 1
          %s213 = smul.addr %s212, 8
          %s214 = smul.addr %s213, 8
          %s215 = scalar_lea.vmem %s0, %s214
        $region36: #{res_block_forward.9} parent=31 // pred_fallthru
          _
        // Predicated region
        $region37: #{res_block_forward.9} parent=31 // pred_check
          %p216 = pneg %p103
        $region38: #{res_block_forward.9} parent=31 // pred_check_branch
          %218 = sbr.rel (%p216) target = $region40
        $region39: #{res_block_forward.9} parent=31 // pred_region
          %p219 = scmp.lt.s32.totalorder %s15, 1
          %s220 = scalar_select %p219, %s15, 1
          %s221 = smul.addr %s220, 8
          %s222 = smul.addr %s221, 4
          %s223 = scalar_lea.vmem %s3, %s222
        $region40: #{res_block_forward.9} parent=31 // pred_fallthru
          _
      $region32: #{res_block_forward.9} parent=5 // pred_fallthru
        _
      %p224 = scmp.le.s32.totalorder 1, %s15
      %p225 = scmp.lt.s32.totalorder %s15, 3
      %p226 = pnand %p224, %p225
      %p227 = pneg %p226
      // Predicated region
      $region41: #{res_block_forward.9} parent=5 // pred_check
        _
      $region42: #{res_block_forward.9} parent=5 // pred_check_branch
        %229 = sbr.rel (%p226) target = $region44
      $region43: #{res_block_forward.9} parent=5 // pred_region
        %s230 = ssub.s32 %s15, 1
        %p231 = scmp.lt.s32.totalorder %s20, 1
        %s232 = scalar_select %p231, %s20, 1
        %s233 = smul.addr %s232, 8
        %s234 = smul.addr %s233, 8
        %s235 = scalar_lea.vmem %s0, %s234
        %p236 = pneg %p41
        %p237 = pneg %p38
        %p238 = pneg %p62
        %p239 = pneg %p59
        %p240 = pneg %p83
        %p241 = pneg %p80
        %p242 = scmp.lt.s32.totalorder %s20, 1
        %s243 = scalar_select %p242, %s20, 1
        %s244 = smul.addr %s243, 8
        %s245 = smul.addr %s244, 4
        %s246 = scalar_lea.vmem %s3, %s245
        %p247 = pneg %p109
        %p248 = pneg %p106
        %p249 = pneg %p130
        %p250 = pneg %p127
        %p251 = pneg %p151
        %p252 = pneg %p148
        %p253 = pneg %p177
        %p254 = pneg %p174
        %s255 = sand.u32 %s164, 1
        %s256 = scalar_lea.sflag [#allocation3], %s255
        %s257 = sand.u32 %s164, 1
        %s258 = smul.addr %s257, 64
        %s259 = scalar_lea.vmem [#allocation2], %s258
        %p260 = scmp.lt.s32.totalorder %s20, 1
        %s261 = scalar_select %p260, %s20, 1
        %s262 = smul.addr %s261, 8
        %s263 = smul.addr %s262, 8
        %s264 = scalar_lea.vmem %s0, %s263
        %p265 = scmp.lt.s32.totalorder %s20, 1
        %s266 = scalar_select %p265, %s20, 1
        %s267 = smul.addr %s266, 8
        %s268 = smul.addr %s267, 4
        %s269 = scalar_lea.vmem %s3, %s268
        %v271 = vld [vmem:[%s264] sm:$0xff]
        %v272 = vld [vmem:[%s264 + $0x8] sm:$0xff]
        %v273 = vld [vmem:[%s264 + $0x10] sm:$0xff]
        %v274 = vld [vmem:[%s264 + $0x18] sm:$0xff]
        %v275 = vld [vmem:[%s264 + $0x20] sm:$0xff]
        %v276 = vld [vmem:[%s264 + $0x28] sm:$0xff]
        %v277 = vld [vmem:[%s264 + $0x30] sm:$0xff]
        %v278 = vld [vmem:[%s264 + $0x38] sm:$0xff]
        %v279 = vld [vmem:[%s1] sm:$0x1]
        %v281 = vlaneseq
        %v282 = vshrl.u32 %v281, 7
        %v283 = vsub.s32 0, %v282
        %v284 = vrot.slane %v279, %v283
        %v286 = vmul.f32 %v271, %v284
        %v287 = vmul.f32 %v272, %v284
        %v288 = vmul.f32 %v273, %v284
        %v289 = vmul.f32 %v274, %v284
        %v290 = vmul.f32 %v275, %v284
        %v291 = vmul.f32 %v276, %v284
        %v292 = vmul.f32 %v277, %v284
        %v293 = vmul.f32 %v278, %v284
        %v294 = vld [vmem:[%s2] sm:$0x1]
        %v296 = vlaneseq
        %v297 = vshrl.u32 %v296, 7
        %v298 = vsub.s32 0, %v297
        %v299 = vrot.slane %v294, %v298
        %v301 = vadd.f32 %v286, %v299
        %v302 = vadd.f32 %v287, %v299
        %v303 = vadd.f32 %v288, %v299
        %v304 = vadd.f32 %v289, %v299
        %v305 = vadd.f32 %v290, %v299
        %v306 = vadd.f32 %v291, %v299
        %v307 = vadd.f32 %v292, %v299
        %v308 = vadd.f32 %v293, %v299
        %v309 = vmax.f32 %v301, 0.0
        %v310 = vmax.f32 %v302, 0.0
        %v311 = vmax.f32 %v303, 0.0
        %v312 = vmax.f32 %v304, 0.0
        %v313 = vmax.f32 %v305, 0.0
        %v314 = vmax.f32 %v306, 0.0
        %v315 = vmax.f32 %v307, 0.0
        %v316 = vmax.f32 %v308, 0.0
        %v317 = vld [vmem:[%s269] sm:$0xf]
        %v318 = vld [vmem:[%s269 + $0x4] sm:$0xf]
        %v319 = vld [vmem:[%s269 + $0x8] sm:$0xf]
        %v320 = vld [vmem:[%s269 + $0xc] sm:$0xf]
        %v321 = vld [vmem:[%s269 + $0x10] sm:$0xf]
        %v322 = vld [vmem:[%s269 + $0x14] sm:$0xf]
        %v323 = vld [vmem:[%s269 + $0x18] sm:$0xf]
        %v324 = vld [vmem:[%s269 + $0x1c] sm:$0xf]
        %v325 = vld [vmem:[%s4] sm:$0x3]
        %v334 = vunpack.c.l.b16 %v317
        %v335 = vunpack.c.l.b16 %v318
        %v336 = vunpack.c.l.b16 %v319
        %v337 = vunpack.c.l.b16 %v320
        %v338 = vunpack.c.l.b16 %v321
        %v339 = vunpack.c.l.b16 %v322
        %v340 = vunpack.c.l.b16 %v323
        %v341 = vunpack.c.l.b16 %v324
        %v342 = vpack.c.b16 %v335, %v334
        %v343 = vpack.c.b16 %v337, %v336
        %v344 = vpack.c.b16 %v339, %v338
        %v345 = vpack.c.b16 %v341, %v340
        %vm346 = vcmask 31744
        %v348 = vsel %vm346, %v342, 0
        %v351 = vsel %vm346, %v343, 0
        %v354 = vsel %vm346, %v344, 0
        %v357 = vsel %vm346, %v345, 0
        %vm359 = vcmask 1041408
        %v361 = vsel %vm359, %v325, 0
        %363 = vmatprep.subr.bf16.mxu0 0
        %364 = vmatpush1.bf16.msra.mxu0 %v361
        %365 = vmatprep.subr.bf16.mxu0 0
        %366 = vmatpush1.bf16.msra.mxu0 0
        %367 = vmatprep.subr.bf16.mxu0 0
        %368 = vmatpush1.bf16.msra.mxu0 0
        %369 = vmatprep.subr.bf16.mxu0 0
        %370 = vmatpush1.bf16.msra.mxu0 0
        %371 = vmatprep.subr.bf16.mxu0 0
        %372 = vmatpush1.bf16.msra.mxu0 0
        %373 = vmatprep.subr.bf16.mxu0 0
        %374 = vmatpush1.bf16.msra.mxu0 0
        %375 = vmatprep.subr.bf16.mxu0 0
        %376 = vmatpush1.bf16.msra.mxu0 0
        %377 = vmatprep.subr.bf16.mxu0 0
        %378 = vmatpush1.bf16.msra.mxu0 0
        %379 = vmatprep.subr.bf16.mxu0 0
        %380 = vmatpush1.bf16.msra.mxu0 0
        %381 = vmatprep.subr.bf16.mxu0 0
        %382 = vmatpush1.bf16.msra.mxu0 0
        %383 = vmatprep.subr.bf16.mxu0 0
        %384 = vmatpush1.bf16.msra.mxu0 0
        %385 = vmatprep.subr.bf16.mxu0 0
        %386 = vmatpush1.bf16.msra.mxu0 0
        %387 = vmatprep.subr.bf16.mxu0 0
        %388 = vmatpush1.bf16.msra.mxu0 0
        %389 = vmatprep.subr.bf16.mxu0 0
        %390 = vmatpush1.bf16.msra.mxu0 0
        %391 = vmatprep.subr.bf16.mxu0 0
        %392 = vmatpush1.bf16.msra.mxu0 0
        %393 = vmatprep.subr.bf16.mxu0 0
        %394 = vmatpush1.bf16.msra.mxu0 0
        %395 = vmatprep.mubr.bf16.mxu0 0
        %396 = vmatmul.mubr.bf16.gmra.mrb[0].mxu0 %v348
        %v397 = vpop.f32.mrb[0].mxu0
        %v398 = vadd.f32 0.0, %v397
        %v399 = vpop.f32.mrb[0].mxu0
        %v400 = vpop.f32.mrb[0].mxu0
        %v401 = vadd.f32 0.0, %v400
        %v402 = vpop.f32.mrb[0].mxu0
        %403 = vmatprep.mubr.bf16.mxu0 0
        %404 = vmatmul.mubr.bf16.gmra.mrb[0].mxu0 %v351
        %v405 = vpop.f32.mrb[0].mxu0
        %v406 = vadd.f32 0.0, %v405
        %v407 = vpop.f32.mrb[0].mxu0
        %v408 = vpop.f32.mrb[0].mxu0
        %v409 = vadd.f32 0.0, %v408
        %v410 = vpop.f32.mrb[0].mxu0
        %411 = vmatprep.mubr.bf16.mxu0 0
        %412 = vmatmul.mubr.bf16.gmra.mrb[0].mxu0 %v354
        %v413 = vpop.f32.mrb[0].mxu0
        %v414 = vadd.f32 0.0, %v413
        %v415 = vpop.f32.mrb[0].mxu0
        %v416 = vpop.f32.mrb[0].mxu0
        %v417 = vadd.f32 0.0, %v416
        %v418 = vpop.f32.mrb[0].mxu0
        %419 = vmatprep.mubr.bf16.mxu0 0
        %420 = vmatmul.mubr.bf16.gmra.mrb[0].mxu0 %v357
        %v421 = vpop.f32.mrb[0].mxu0
        %v422 = vadd.f32 0.0, %v421
        %v423 = vpop.f32.mrb[0].mxu0
        %v424 = vpop.f32.mrb[0].mxu0
        %v425 = vadd.f32 0.0, %v424
        %v426 = vpop.f32.mrb[0].mxu0
        %427 = vdwg.mxu0
        %v428 = vadd.f32 %v309, %v398
        %v429 = vadd.f32 %v310, %v401
        %v430 = vadd.f32 %v311, %v406
        %v431 = vadd.f32 %v312, %v409
        %v432 = vadd.f32 %v313, %v414
        %v433 = vadd.f32 %v314, %v417
        %v434 = vadd.f32 %v315, %v422
        %v435 = vadd.f32 %v316, %v425
        %v436 = vld [vmem:[%s5] sm:$0x1]
        %v438 = vlaneseq
        %v439 = vshrl.u32 %v438, 7
        %v440 = vsub.s32 0, %v439
        %v441 = vrot.slane %v436, %v440
        %v443 = vadd.f32 %v428, %v441
        %v444 = vadd.f32 %v429, %v441
        %v445 = vadd.f32 %v430, %v441
        %v446 = vadd.f32 %v431, %v441
        %v447 = vadd.f32 %v432, %v441
        %v448 = vadd.f32 %v433, %v441
        %v449 = vadd.f32 %v434, %v441
        %v450 = vadd.f32 %v435, %v441
        %vm451 = vcmask 64512
        %452 = vst.msk [vmem:[%s259] sm:$0xff] %vm451, %v443
        %453 = vst.msk [vmem:[%s259 + $0x8] sm:$0xff] %vm451, %v444
        %454 = vst.msk [vmem:[%s259 + $0x10] sm:$0xff] %vm451, %v445
        %455 = vst.msk [vmem:[%s259 + $0x18] sm:$0xff] %vm451, %v446
        %456 = vst.msk [vmem:[%s259 + $0x20] sm:$0xff] %vm451, %v447
        %457 = vst.msk [vmem:[%s259 + $0x28] sm:$0xff] %vm451, %v448
        %458 = vst.msk [vmem:[%s259 + $0x30] sm:$0xff] %vm451, %v449
        %459 = vst.msk [vmem:[%s259 + $0x38] sm:$0xff] %vm451, %v450
        %s460 = sand.u32 %s164, 1
        %s461 = scalar_lea.sflag [#allocation3], %s460
        %s462 = sand.u32 %s164, 1
        %s463 = smul.addr %s462, 64
        %s464 = scalar_lea.vmem [#allocation2], %s463
        // Predicated region
        $region45: #{res_block_forward.9} parent=43 // pred_check
          %p465 = pneg %p174
        $region46: #{res_block_forward.9} parent=43 // pred_check_branch
          %467 = sbr.rel (%p465) target = $region48
        $region47: #{res_block_forward.9} parent=43 // pred_region
          %s469 = ssub.s32 1024, 1024
          %470 = vsyncadd %s461, %s469
          %s471 = smul.addr %s20, 8
          %s472 = smul.addr %s471, 128
          %s473 = scalar_lea.hbm %s6, %s472
          %s474 = sshll.u32 %s464, 4
          %s475 = int_to_ptr.vmem [resolvable:$true] %s474
          %480 = dma.vmem_to_hbm [thread:$0]  %s475, 1024, %s473, %s461, 128, 128, 8
        $region48: #{res_block_forward.9} parent=43 // pred_fallthru
          _
      $region44: #{res_block_forward.9} parent=5 // pred_fallthru
        _
      %p481 = scmp.le.s32.totalorder 2, %s15
      // Predicated region
      $region49: #{res_block_forward.9} parent=5 // pred_check
        %p482 = pneg %p481
      $region50: #{res_block_forward.9} parent=5 // pred_check_branch
        %484 = sbr.rel (%p482) target = $region52
      $region51: #{res_block_forward.9} parent=5 // pred_region
        %s485 = ssub.s32 %s15, 2
        // Predicated region
        $region53: #{res_block_forward.9} parent=51 // pred_check
          %p486 = pneg %p180
        $region54: #{res_block_forward.9} parent=51 // pred_check_branch
          %488 = sbr.rel (%p486) target = $region56
        $region55: #{res_block_forward.9} parent=51 // pred_region
          %s489 = sand.u32 %s165, 1
          %s490 = scalar_lea.sflag [#allocation3], %s489
          %s491 = sand.u32 %s165, 1
          %s492 = smul.addr %s491, 64
          %s493 = scalar_lea.vmem [#allocation2], %s492
          %494 = dma.done %s490, 1024
        $region56: #{res_block_forward.9} parent=51 // pred_fallthru
          _
      $region52: #{res_block_forward.9} parent=5 // pred_fallthru
        _
    $region6: #{res_block_forward.9} parent=1 // loop_footer
      %s19 = sadd.s32 1, %s15
    $region7: #{res_block_forward.9} parent=1 // loop_footer_branch
      %14 = sbr.rel target = $region3
    $region8: #{res_block_forward.9} parent=1 // loop_exit
      _
    %495 = vsyncpa [#allocation3], 1
    %s496 = scalar_lea.sflag [#allocation3], 1
    %497 = vsyncpa %s496, 1

// kernel: res_block_forward.8
$region0: #{res_block_forward.8}
  #allocation0 [shape = 'u32[]', space=smem, size = 0x4, offset = 0x4, fixed_abs, tag = 'smem constant byte address 0x4 - core index']
  #allocation1 [shape = 'u32[144,128]{1,0:T(1,128)}', space=vmem, size = 0x12000, scoped, tag = 'internal scratch']
  %s0 = inlined_call_operand.vmem [shape: f32[2,1,1,10,10,8], index: 0, kind: input, shape index: {}]
  %s1 = inlined_call_operand.vmem [shape: bf16[9,8,8], index: 1, kind: input, shape index: {}]
  %s2 = inlined_call_operand.vmem [shape: f32[2,64,8], index: 2, kind: output, shape index: {0}]
  %s3 = inlined_call_operand.vmem [shape: f32[2,1,8], index: 3, kind: output, shape index: {1}]
  %s4 = inlined_call_operand.vmem [shape: f32[2,1,8], index: 4, kind: output, shape index: {2}]
  %5 = xla_tuple %s2, %s3, %s4
  %s6 = sld [smem:[#allocation0]]
  $region57: #{res_block_forward.8} parent=0
    _
  %s8 = ssub.s32 1, %s6
  %s9 = scalar_select 0, %s8, %s6
  loop: start=0, step=1, limit=4
  $region2: #{res_block_forward.8} parent=0 // loop_pre_header
    _
  $region3: #{res_block_forward.8} parent=0 // loop_header
    %s11 = sphi 0, %s15
    %p12 = scmp.ge.s32.totalorder %s11, 4
    %s21 = sphi 0, %s23
    %s24 = sphi 0, %s21
    %s25 = sphi 0, %s24
    %s41 = sphi 0, %s25
    %s45 = sphi 0, %s45
    %s47 = sphi 0, %s45
    %s48 = sphi 0, %s47
    %s62 = sphi 0, %s48
    %s68 = sphi 0, %s70
    %s71 = sphi 0, %s68
    %s72 = sphi 0, %s71
    %s88 = sphi 0, %s72
    %s94 = sphi 0, %s96
    %s97 = sphi 0, %s94
    %s98 = sphi 0, %s97
    %s114 = sphi 0, %s98
    %s120 = sphi 0, %s122
    %s123 = sphi 0, %s120
    %s124 = sphi 0, %s123
    %s140 = sphi 0, %s124
  $region4: #{res_block_forward.8} parent=0 // loop_header_branch
    %14 = sbr.rel (%p12) target = $region8
  $region5: #{res_block_forward.8} parent=0 // loop_body
    %s16 = ssub.s32 %s11, 1
    %s17 = ssub.s32 %s11, 2
    %s18 = sadd.s32 %s11, 1
    %s19 = ssub.s32 %s11, %s18
    %p20 = scmp.eq.s32.totalorder %s19, 0
    %s22 = sadd.s32 %s21, 1
    %s23 = scalar_select %p20, %s21, %s22
    %p26 = pneg %p20
    %p27 = scmp.eq.s32.totalorder %s11, 1
    %p28 = por %p26, %p27
    %p29 = scmp.ne.s32.totalorder %s21, %s24
    %p30 = scmp.eq.s32.totalorder %s11, 0
    %p31 = por %p29, %p30
    %p32 = scmp.ne.s32.totalorder %s21, %s24
    %p33 = scmp.eq.s32.totalorder %s16, 1
    %p34 = por %p32, %p33
    %p35 = scmp.ne.s32.totalorder %s24, %s25
    %p36 = scmp.eq.s32.totalorder %s16, 0
    %p37 = por %p35, %p36
    %p38 = scmp.ne.s32.totalorder %s24, %s25
    %p39 = scmp.eq.s32.totalorder %s17, 1
    %p40 = por %p38, %p39
    %p42 = scmp.ne.s32.totalorder %s25, %s41
    %p43 = scmp.eq.s32.totalorder %s17, 0
    %p44 = por %p42, %p43
    %s46 = sadd.s32 %s45, 1
    %p49 = scmp.eq.s32.totalorder %s11, 1
    %p50 = scmp.ne.s32.totalorder %s45, %s47
    %p51 = scmp.eq.s32.totalorder %s11, 0
    %p52 = por %p50, %p51
    %p53 = scmp.ne.s32.totalorder %s45, %s47
    %p54 = scmp.eq.s32.totalorder %s16, 1
    %p55 = por %p53, %p54
    %p56 = scmp.ne.s32.totalorder %s47, %s48
    %p57 = scmp.eq.s32.totalorder %s16, 0
    %p58 = por %p56, %p57
    %p59 = scmp.ne.s32.totalorder %s47, %s48
    %p60 = scmp.eq.s32.totalorder %s17, 1
    %p61 = por %p59, %p60
    %p63 = scmp.ne.s32.totalorder %s48, %s62
    %p64 = scmp.eq.s32.totalorder %s17, 0
    %p65 = por %p63, %p64
    %s66 = ssub.s32 %s11, %s18
    %p67 = scmp.eq.s32.totalorder %s66, 0
    %s69 = sadd.s32 %s68, 1
    %s70 = scalar_select %p67, %s68, %s69
    %p73 = pneg %p67
    %p74 = scmp.eq.s32.totalorder %s11, 1
    %p75 = por %p73, %p74
    %p76 = scmp.ne.s32.totalorder %s68, %s71
    %p77 = scmp.eq.s32.totalorder %s11, 0
    %p78 = por %p76, %p77
    %p79 = scmp.ne.s32.totalorder %s68, %s71
    %p80 = scmp.eq.s32.totalorder %s16, 1
    %p81 = por %p79, %p80
    %p82 = scmp.ne.s32.totalorder %s71, %s72
    %p83 = scmp.eq.s32.totalorder %s16, 0
    %p84 = por %p82, %p83
    %p85 = scmp.ne.s32.totalorder %s71, %s72
    %p86 = scmp.eq.s32.totalorder %s17, 1
    %p87 = por %p85, %p86
    %p89 = scmp.ne.s32.totalorder %s72, %s88
    %p90 = scmp.eq.s32.totalorder %s17, 0
    %p91 = por %p89, %p90
    %s92 = ssub.s32 %s11, %s18
    %p93 = scmp.eq.s32.totalorder %s92, 0
    %s95 = sadd.s32 %s94, 1
    %s96 = scalar_select %p93, %s94, %s95
    %p99 = pneg %p93
    %p100 = scmp.eq.s32.totalorder %s11, 1
    %p101 = por %p99, %p100
    %p102 = scmp.ne.s32.totalorder %s94, %s97
    %p103 = scmp.eq.s32.totalorder %s11, 0
    %p104 = por %p102, %p103
    %p105 = scmp.ne.s32.totalorder %s94, %s97
    %p106 = scmp.eq.s32.totalorder %s16, 1
    %p107 = por %p105, %p106
    %p108 = scmp.ne.s32.totalorder %s97, %s98
    %p109 = scmp.eq.s32.totalorder %s16, 0
    %p110 = por %p108, %p109
    %p111 = scmp.ne.s32.totalorder %s97, %s98
    %p112 = scmp.eq.s32.totalorder %s17, 1
    %p113 = por %p111, %p112
    %p115 = scmp.ne.s32.totalorder %s98, %s114
    %p116 = scmp.eq.s32.totalorder %s17, 0
    %p117 = por %p115, %p116
    %s118 = ssub.s32 %s11, %s18
    %p119 = scmp.eq.s32.totalorder %s118, 0
    %s121 = sadd.s32 %s120, 1
    %s122 = scalar_select %p119, %s120, %s121
    %p125 = pneg %p119
    %p126 = scmp.eq.s32.totalorder %s11, 1
    %p127 = por %p125, %p126
    %p128 = scmp.ne.s32.totalorder %s120, %s123
    %p129 = scmp.eq.s32.totalorder %s11, 0
    %p130 = por %p128, %p129
    %p131 = scmp.ne.s32.totalorder %s120, %s123
    %p132 = scmp.eq.s32.totalorder %s16, 1
    %p133 = por %p131, %p132
    %p134 = scmp.ne.s32.totalorder %s123, %s124
    %p135 = scmp.eq.s32.totalorder %s16, 0
    %p136 = por %p134, %p135
    %p137 = scmp.ne.s32.totalorder %s123, %s124
    %p138 = scmp.eq.s32.totalorder %s17, 1
    %p139 = por %p137, %p138
    %p141 = scmp.ne.s32.totalorder %s124, %s140
    %p142 = scmp.eq.s32.totalorder %s17, 0
    %p143 = por %p141, %p142
    %p144 = scmp.le.s32.totalorder 1, %s11
    %p145 = scmp.lt.s32.totalorder %s11, 3
    %p146 = pnand %p144, %p145
    %p147 = pneg %p146
    // Predicated region
    $region9: #{res_block_forward.8} parent=5 // pred_check
      _
    $region10: #{res_block_forward.8} parent=5 // pred_check_branch
      %149 = sbr.rel (%p146) target = $region12
    $region11: #{res_block_forward.8} parent=5 // pred_region
      %s150 = ssub.s32 %s11, 1
      // Predicated region
      $region13: #{res_block_forward.8} parent=11 // pred_check
        %p151 = pneg %p58
      $region14: #{res_block_forward.8} parent=11 // pred_check_branch
        %153 = sbr.rel (%p151) target = $region16
      $region15: #{res_block_forward.8} parent=11 // pred_region
        _
      $region16: #{res_block_forward.8} parent=11 // pred_fallthru
        _
    $region12: #{res_block_forward.8} parent=5 // pred_fallthru
      _
    %p154 = scmp.lt.s32.totalorder %s11, 2
    // Predicated region
    $region17: #{res_block_forward.8} parent=5 // pred_check
      %p155 = pneg %p154
    $region18: #{res_block_forward.8} parent=5 // pred_check_branch
      %157 = sbr.rel (%p155) target = $region20
    $region19: #{res_block_forward.8} parent=5 // pred_region
      // Predicated region
      $region21: #{res_block_forward.8} parent=19 // pred_check
        %p158 = pneg %p31
      $region22: #{res_block_forward.8} parent=19 // pred_check_branch
        %160 = sbr.rel (%p158) target = $region24
      $region23: #{res_block_forward.8} parent=19 // pred_region
        %p161 = scmp.lt.s32.totalorder %s11, 1
        %s162 = scalar_select %p161, %s11, 1
        %s163 = smul.addr %s162, 20
        %s164 = smul.addr %s163, 8
        %s165 = scalar_lea.vmem %s0, %s164
      $region24: #{res_block_forward.8} parent=19 // pred_fallthru
        _
    $region20: #{res_block_forward.8} parent=5 // pred_fallthru
      _
    %p166 = scmp.le.s32.totalorder 1, %s11
    %p167 = scmp.lt.s32.totalorder %s11, 3
    %p168 = pnand %p166, %p167
    %p169 = pneg %p168
    // Predicated region
    $region25: #{res_block_forward.8} parent=5 // pred_check
      _
    $region26: #{res_block_forward.8} parent=5 // pred_check_branch
      %171 = sbr.rel (%p168) target = $region28
    $region27: #{res_block_forward.8} parent=5 // pred_region
      %s172 = ssub.s32 %s11, 1
      %p173 = scmp.lt.s32.totalorder %s16, 1
      %s174 = scalar_select %p173, %s16, 1
      %s175 = smul.addr %s174, 20
      %s176 = smul.addr %s175, 8
      %s177 = scalar_lea.vmem %s0, %s176
      %p178 = pneg %p37
      %p179 = pneg %p34
      %p180 = pneg %p58
      %p181 = pneg %p55
      %p182 = pneg %p84
      %p183 = pneg %p81
      %p184 = scmp.lt.s32.totalorder %s16, 1
      %s185 = scalar_select %p184, %s16, 1
      %s186 = smul.addr %s185, 8
      %s187 = smul.addr %s186, 8
      %s188 = scalar_lea.vmem %s2, %s187
      %p189 = pneg %p110
      %p190 = pneg %p107
      %p191 = scmp.lt.s32.totalorder %s16, 1
      %s192 = scalar_select %p191, %s16, 1
      %s193 = scalar_lea.vmem %s3, %s192
      %p194 = pneg %p136
      %p195 = pneg %p133
      %p196 = scmp.lt.s32.totalorder %s16, 1
      %s197 = scalar_select %p196, %s16, 1
      %s198 = scalar_lea.vmem %s4, %s197
      %p199 = scmp.lt.s32.totalorder %s16, 1
      %s200 = scalar_select %p199, %s16, 1
      %s201 = smul.addr %s200, 20
      %s202 = smul.addr %s201, 8
      %s203 = scalar_lea.vmem %s0, %s202
      %p204 = scmp.lt.s32.totalorder %s16, 1
      %s205 = scalar_select %p204, %s16, 1
      %s206 = smul.addr %s205, 8
      %s207 = smul.addr %s206, 8
      %s208 = scalar_lea.vmem %s2, %s207
      %p209 = scmp.lt.s32.totalorder %s16, 1
      %s210 = scalar_select %p209, %s16, 1
      %s211 = scalar_lea.vmem %s3, %s210
      %p212 = scmp.lt.s32.totalorder %s16, 1
      %s213 = scalar_select %p212, %s16, 1
      %s214 = scalar_lea.vmem %s4, %s213
      %v216 = vld [vmem:[%s203] sm:$0xff]
      %v217 = vld [vmem:[%s203 + $0x10] sm:$0xff]
      %v218 = vld [vmem:[%s203 + $0x20] sm:$0xff]
      %v219 = vld [vmem:[%s203 + $0x30] sm:$0xff]
      %v220 = vld [vmem:[%s203 + $0x40] sm:$0xff]
      %v221 = vld [vmem:[%s203 + $0x50] sm:$0xff]
      %v222 = vld [vmem:[%s203 + $0x60] sm:$0xff]
      %v223 = vld [vmem:[%s203 + $0x70] sm:$0xff]
      %v224 = vpack.c.bf16 %v217, %v216
      %v225 = vpack.c.bf16 %v219, %v218
      %v226 = vpack.c.bf16 %v221, %v220
      %v227 = vpack.c.bf16 %v223, %v222
      %v228 = vld [vmem:[%s1] sm:$0xf]
      %v229 = vld [vmem:[%s203 + $0x1] sm:$0xff]
      %v230 = vld [vmem:[%s203 + $0x11] sm:$0xff]
      %v231 = vld [vmem:[%s203 + $0x21] sm:$0xff]
      %v232 = vld [vmem:[%s203 + $0x31] sm:$0xff]
      %v233 = vld [vmem:[%s203 + $0x41] sm:$0xff]
      %v234 = vld [vmem:[%s203 + $0x51] sm:$0xff]
      %v235 = vld [vmem:[%s203 + $0x61] sm:$0xff]
      %v236 = vld [vmem:[%s203 + $0x71] sm:$0xff]
      %v237 = vpack.c.bf16 %v230, %v229
      %v238 = vpack.c.bf16 %v232, %v231
      %v239 = vpack.c.bf16 %v234, %v233
      %v240 = vpack.c.bf16 %v236, %v235
      %s241 = scalar_lea.vmem %s1, 4
      %v242 = vld [vmem:[%s241] sm:$0xf]
      %vm243 = vcmask 64512
      %v245 = vsel %vm243, %v237, 0
      %v248 = vsel %vm243, %v238, 0
      %v251 = vsel %vm243, %v239, 0
      %v254 = vsel %vm243, %v240, 0
      %vm256 = vcmask 1043456
      %v258 = vsel %vm256, %v242, 0
      %260 = vmatprep.subr.bf16.mxu0 0
      %261 = vmatpush1.bf16.msra.mxu0 %v258
      %262 = vmatprep.subr.bf16.mxu0 0
      %263 = vmatpush1.bf16.msra.mxu0 0
      %264 = vmatprep.subr.bf16.mxu0 0
      %265 = vmatpush1.bf16.msra.mxu0 0
      %266 = vmatprep.subr.bf16.mxu0 0
      %267 = vmatpush1.bf16.msra.mxu0 0
      %268 = vmatprep.subr.bf16.mxu0 0
      %269 = vmatpush1.bf16.msra.mxu0 0
      %270 = vmatprep.subr.bf16.mxu0 0
      %271 = vmatpush1.bf16.msra.mxu0 0
      %272 = vmatprep.subr.bf16.mxu0 0
      %273 = vmatpush1.bf16.msra.mxu0 0
      %274 = vmatprep.subr.bf16.mxu0 0
      %275 = vmatpush1.bf16.msra.mxu0 0
      %276 = vmatprep.subr.bf16.mxu0 0
      %277 = vmatpush1.bf16.msra.mxu0 0
      %278 = vmatprep.subr.bf16.mxu0 0
      %279 = vmatpush1.bf16.msra.mxu0 0
      %280 = vmatprep.subr.bf16.mxu0 0
      %281 = vmatpush1.bf16.msra.mxu0 0
      %282 = vmatprep.subr.bf16.mxu0 0
      %283 = vmatpush1.bf16.msra.mxu0 0
      %284 = vmatprep.subr.bf16.mxu0 0
      %285 = vmatpush1.bf16.msra.mxu0 0
      %286 = vmatprep.subr.bf16.mxu0 0
      %287 = vmatpush1.bf16.msra.mxu0 0
      %288 = vmatprep.subr.bf16.mxu0 0
      %289 = vmatpush1.bf16.msra.mxu0 0
      %290 = vmatprep.subr.bf16.mxu0 0
      %291 = vmatpush1.bf16.msra.mxu0 0
      %292 = vmatprep.mubr.bf16.mxu0 0
      %293 = vmatmul.mubr.bf16.gmra.mrb[0].mxu0 %v245
      %v294 = vpop.f32.mrb[0].mxu0
      %v295 = vadd.f32 0.0, %v294
      %v296 = vpop.f32.mrb[0].mxu0
      %v297 = vpop.f32.mrb[0].mxu0
      %v298 = vadd.f32 0.0, %v297
      %v299 = vpop.f32.mrb[0].mxu0
      %300 = vmatprep.mubr.bf16.mxu0 0
      %301 = vmatmul.mubr.bf16.gmra.mrb[0].mxu0 %v248
      %v302 = vpop.f32.mrb[0].mxu0
      %v303 = vadd.f32 0.0, %v302
      %v304 = vpop.f32.mrb[0].mxu0
      %v305 = vpop.f32.mrb[0].mxu0
      %v306 = vadd.f32 0.0, %v305
      %v307 = vpop.f32.mrb[0].mxu0
      %308 = vmatprep.mubr.bf16.mxu0 0
      %309 = vmatmul.mubr.bf16.gmra.mrb[0].mxu0 %v251
      %v310 = vpop.f32.mrb[0].mxu0
      %v311 = vadd.f32 0.0, %v310
      %v312 = vpop.f32.mrb[0].mxu0
      %v313 = vpop.f32.mrb[0].mxu0
      %v314 = vadd.f32 0.0, %v313
      %v315 = vpop.f32.mrb[0].mxu0
      %316 = vmatprep.mubr.bf16.mxu0 0
      %317 = vmatmul.mubr.bf16.gmra.mrb[0].mxu0 %v254
      %v318 = vpop.f32.mrb[0].mxu0
      %v319 = vadd.f32 0.0, %v318
      %v320 = vpop.f32.mrb[0].mxu0
      %v321 = vpop.f32.mrb[0].mxu0
      %v322 = vadd.f32 0.0, %v321
      %v323 = vpop.f32.mrb[0].mxu0
      %324 = vdwg.mxu0
      %v326 = vsel %vm243, %v224, 0
      %v329 = vsel %vm243, %v225, 0
      %v332 = vsel %vm243, %v226, 0
      %v335 = vsel %vm243, %v227, 0
      %v338 = vsel %vm256, %v228, 0
      %340 = vmatprep.subr.bf16.mxu0 0
      %341 = vmatpush1.bf16.msra.mxu0 %v338
      %342 = vmatprep.subr.bf16.mxu0 0
      %343 = vmatpush1.bf16.msra.mxu0 0
      %344 = vmatprep.subr.bf16.mxu0 0
      %345 = vmatpush1.bf16.msra.mxu0 0
      %346 = vmatprep.subr.bf16.mxu0 0
      %347 = vmatpush1.bf16.msra.mxu0 0
      %348 = vmatprep.subr.bf16.mxu0 0
      %349 = vmatpush1.bf16.msra.mxu0 0
      %350 = vmatprep.subr.bf16.mxu0 0
      %351 = vmatpush1.bf16.msra.mxu0 0
      %352 = vmatprep.subr.bf16.mxu0 0
      %353 = vmatpush1.bf16.msra.mxu0 0
      %354 = vmatprep.subr.bf16.mxu0 0
      %355 = vmatpush1.bf16.msra.mxu0 0
      %356 = vmatprep.subr.bf16.mxu0 0
      %357 = vmatpush1.bf16.msra.mxu0 0
      %358 = vmatprep.subr.bf16.mxu0 0
      %359 = vmatpush1.bf16.msra.mxu0 0
      %360 = vmatprep.subr.bf16.mxu0 0
      %361 = vmatpush1.bf16.msra.mxu0 0
      %362 = vmatprep.subr.bf16.mxu0 0
      %363 = vmatpush1.bf16.msra.mxu0 0
      %364 = vmatprep.subr.bf16.mxu0 0
      %365 = vmatpush1.bf16.msra.mxu0 0
      %366 = vmatprep.subr.bf16.mxu0 0
      %367 = vmatpush1.bf16.msra.mxu0 0
      %368 = vmatprep.subr.bf16.mxu0 0
      %369 = vmatpush1.bf16.msra.mxu0 0
      %370 = vmatprep.subr.bf16.mxu0 0
      %371 = vmatpush1.bf16.msra.mxu0 0
      %372 = vmatprep.mubr.bf16.mxu0 0
      %373 = vmatmul.mubr.bf16.gmra.mrb[0].mxu0 %v326
      %v374 = vpop.f32.mrb[0].mxu0
      %v375 = vadd.f32 %v295, %v374
      %v376 = vpop.f32.mrb[0].mxu0
      %v377 = vpop.f32.mrb[0].mxu0
      %v378 = vadd.f32 %v298, %v377
      %v379 = vpop.f32.mrb[0].mxu0
      %380 = vmatprep.mubr.bf16.mxu0 0
      %381 = vmatmul.mubr.bf16.gmra.mrb[0].mxu0 %v329
      %v382 = vpop.f32.mrb[0].mxu0
      %v383 = vadd.f32 %v303, %v382
      %v384 = vpop.f32.mrb[0].mxu0
      %v385 = vpop.f32.mrb[0].mxu0
      %v386 = vadd.f32 %v306, %v385
      %v387 = vpop.f32.mrb[0].mxu0
      %388 = vmatprep.mubr.bf16.mxu0 0
      %389 = vmatmul.mubr.bf16.gmra.mrb[0].mxu0 %v332
      %v390 = vpop.f32.mrb[0].mxu0
      %v391 = vadd.f32 %v311, %v390
      %v392 = vpop.f32.mrb[0].mxu0
      %v393 = vpop.f32.mrb[0].mxu0
      %v394 = vadd.f32 %v314, %v393
      %v395 = vpop.f32.mrb[0].mxu0
      %396 = vmatprep.mubr.bf16.mxu0 0
      %397 = vmatmul.mubr.bf16.gmra.mrb[0].mxu0 %v335
      %v398 = vpop.f32.mrb[0].mxu0
      %v399 = vadd.f32 %v319, %v398
      %v400 = vpop.f32.mrb[0].mxu0
      %v401 = vpop.f32.mrb[0].mxu0
      %v402 = vadd.f32 %v322, %v401
      %v403 = vpop.f32.mrb[0].mxu0
      %404 = vdwg.mxu0
      %v405 = vld [vmem:[%s203 + $0x2] sm:$0xff]
      %v406 = vld [vmem:[%s203 + $0x12] sm:$0xff]
      %v407 = vld [vmem:[%s203 + $0x22] sm:$0xff]
      %v408 = vld [vmem:[%s203 + $0x32] sm:$0xff]
      %v409 = vld [vmem:[%s203 + $0x42] sm:$0xff]
      %v410 = vld [vmem:[%s203 + $0x52] sm:$0xff]
      %v411 = vld [vmem:[%s203 + $0x62] sm:$0xff]
      %v412 = vld [vmem:[%s203 + $0x72] sm:$0xff]
      %v413 = vpack.c.bf16 %v406, %v405
      %v414 = vpack.c.bf16 %v408, %v407
      %v415 = vpack.c.bf16 %v410, %v409
      %v416 = vpack.c.bf16 %v412, %v411
      %s417 = scalar_lea.vmem %s1, 8
      %v418 = vld [vmem:[%s417] sm:$0xf]
      %v420 = vsel %vm243, %v413, 0
      %v423 = vsel %vm243, %v414, 0
      %v426 = vsel %vm243, %v415, 0
      %v429 = vsel %vm243, %v416, 0
      %v432 = vsel %vm256, %v418, 0
      %434 = vmatprep.subr.bf16.mxu0 0
      %435 = vmatpush1.bf16.msra.mxu0 %v432
      %436 = vmatprep.subr.bf16.mxu0 0
      %437 = vmatpush1.bf16.msra.mxu0 0
      %438 = vmatprep.subr.bf16.mxu0 0
      %439 = vmatpush1.bf16.msra.mxu0 0
      %440 = vmatprep.subr.bf16.mxu0 0
      %441 = vmatpush1.bf16.msra.mxu0 0
      %442 = vmatprep.subr.bf16.mxu0 0
      %443 = vmatpush1.bf16.msra.mxu0 0
      %444 = vmatprep.subr.bf16.mxu0 0
      %445 = vmatpush1.bf16.msra.mxu0 0
      %446 = vmatprep.subr.bf16.mxu0 0
      %447 = vmatpush1.bf16.msra.mxu0 0
      %448 = vmatprep.subr.bf16.mxu0 0
      %449 = vmatpush1.bf16.msra.mxu0 0
      %450 = vmatprep.subr.bf16.mxu0 0
      %451 = vmatpush1.bf16.msra.mxu0 0
      %452 = vmatprep.subr.bf16.mxu0 0
      %453 = vmatpush1.bf16.msra.mxu0 0
      %454 = vmatprep.subr.bf16.mxu0 0
      %455 = vmatpush1.bf16.msra.mxu0 0
      %456 = vmatprep.subr.bf16.mxu0 0
      %457 = vmatpush1.bf16.msra.mxu0 0
      %458 = vmatprep.subr.bf16.mxu0 0
      %459 = vmatpush1.bf16.msra.mxu0 0
      %460 = vmatprep.subr.bf16.mxu0 0
      %461 = vmatpush1.bf16.msra.mxu0 0
      %462 = vmatprep.subr.bf16.mxu0 0
      %463 = vmatpush1.bf16.msra.mxu0 0
      %464 = vmatprep.subr.bf16.mxu0 0
      %465 = vmatpush1.bf16.msra.mxu0 0
      %466 = vmatprep.mubr.bf16.mxu0 0
      %467 = vmatmul.mubr.bf16.gmra.mrb[0].mxu0 %v420
      %v468 = vpop.f32.mrb[0].mxu0
      %v469 = vadd.f32 0.0, %v468
      %v470 = vpop.f32.mrb[0].mxu0
      %v471 = vpop.f32.mrb[0].mxu0
      %v472 = vadd.f32 0.0, %v471
      %v473 = vpop.f32.mrb[0].mxu0
      %474 = vmatprep.mubr.bf16.mxu0 0
      %475 = vmatmul.mubr.bf16.gmra.mrb[0].mxu0 %v423
      %v476 = vpop.f32.mrb[0].mxu0
      %v477 = vadd.f32 0.0, %v476
      %v478 = vpop.f32.mrb[0].mxu0
      %v479 = vpop.f32.mrb[0].mxu0
      %v480 = vadd.f32 0.0, %v479
      %v481 = vpop.f32.mrb[0].mxu0
      %482 = vmatprep.mubr.bf16.mxu0 0
      %483 = vmatmul.mubr.bf16.gmra.mrb[0].mxu0 %v426
      %v484 = vpop.f32.mrb[0].mxu0
      %v485 = vadd.f32 0.0, %v484
      %v486 = vpop.f32.mrb[0].mxu0
      %v487 = vpop.f32.mrb[0].mxu0
      %v488 = vadd.f32 0.0, %v487
      %v489 = vpop.f32.mrb[0].mxu0
      %490 = vmatprep.mubr.bf16.mxu0 0
      %491 = vmatmul.mubr.bf16.gmra.mrb[0].mxu0 %v429
      %v492 = vpop.f32.mrb[0].mxu0
      %v493 = vadd.f32 0.0, %v492
      %v494 = vpop.f32.mrb[0].mxu0
      %v495 = vpop.f32.mrb[0].mxu0
      %v496 = vadd.f32 0.0, %v495
      %v497 = vpop.f32.mrb[0].mxu0
      %498 = vdwg.mxu0
      %v499 = vadd.f32 %v375, %v469
      %v500 = vadd.f32 %v378, %v472
      %v501 = vadd.f32 %v383, %v477
      %v502 = vadd.f32 %v386, %v480
      %v503 = vadd.f32 %v391, %v485
      %v504 = vadd.f32 %v394, %v488
      %v505 = vadd.f32 %v399, %v493
      %v506 = vadd.f32 %v402, %v496
      %s507 = scalar_lea.vmem %s203, 16
      %v508 = vld [vmem:[%s507] sm:$0xff]
      %v509 = vld [vmem:[%s507 + $0x10] sm:$0xff]
      %v510 = vld [vmem:[%s507 + $0x20] sm:$0xff]
      %v511 = vld [vmem:[%s507 + $0x30] sm:$0xff]
      %v512 = vld [vmem:[%s507 + $0x40] sm:$0xff]
      %v513 = vld [vmem:[%s507 + $0x50] sm:$0xff]
      %v514 = vld [vmem:[%s507 + $0x60] sm:$0xff]
      %v515 = vld [vmem:[%s507 + $0x70] sm:$0xff]
      %v516 = vpack.c.bf16 %v509, %v508
      %v517 = vpack.c.bf16 %v511, %v510
      %v518 = vpack.c.bf16 %v513, %v512
      %v519 = vpack.c.bf16 %v515, %v514
      %s520 = scalar_lea.vmem %s1, 12
      %v521 = vld [vmem:[%s520] sm:$0xf]
      %v523 = vsel %vm243, %v516, 0
      %v526 = vsel %vm243, %v517, 0
      %v529 = vsel %vm243, %v518, 0
      %v532 = vsel %vm243, %v519, 0
      %v535 = vsel %vm256, %v521, 0
      %537 = vmatprep.subr.bf16.mxu0 0
      %538 = vmatpush1.bf16.msra.mxu0 %v535
      %539 = vmatprep.subr.bf16.mxu0 0
      %540 = vmatpush1.bf16.msra.mxu0 0
      %541 = vmatprep.subr.bf16.mxu0 0
      %542 = vmatpush1.bf16.msra.mxu0 0
      %543 = vmatprep.subr.bf16.mxu0 0
      %544 = vmatpush1.bf16.msra.mxu0 0
      %545 = vmatprep.subr.bf16.mxu0 0
      %546 = vmatpush1.bf16.msra.mxu0 0
      %547 = vmatprep.subr.bf16.mxu0 0
      %548 = vmatpush1.bf16.msra.mxu0 0
      %549 = vmatprep.subr.bf16.mxu0 0
      %550 = vmatpush1.bf16.msra.mxu0 0
      %551 = vmatprep.subr.bf16.mxu0 0
      %552 = vmatpush1.bf16.msra.mxu0 0
      %553 = vmatprep.subr.bf16.mxu0 0
      %554 = vmatpush1.bf16.msra.mxu0 0
      %555 = vmatprep.subr.bf16.mxu0 0
      %556 = vmatpush1.bf16.msra.mxu0 0
      %557 = vmatprep.subr.bf16.mxu0 0
      %558 = vmatpush1.bf16.msra.mxu0 0
      %559 = vmatprep.subr.bf16.mxu0 0
      %560 = vmatpush1.bf16.msra.mxu0 0
      %561 = vmatprep.subr.bf16.mxu0 0
      %562 = vmatpush1.bf16.msra.mxu0 0
      %563 = vmatprep.subr.bf16.mxu0 0
      %564 = vmatpush1.bf16.msra.mxu0 0
      %565 = vmatprep.subr.bf16.mxu0 0
      %566 = vmatpush1.bf16.msra.mxu0 0
      %567 = vmatprep.subr.bf16.mxu0 0
      %568 = vmatpush1.bf16.msra.mxu0 0
      %569 = vmatprep.mubr.bf16.mxu0 0
      %570 = vmatmul.mubr.bf16.gmra.mrb[0].mxu0 %v523
      %v571 = vpop.f32.mrb[0].mxu0
      %v572 = vadd.f32 0.0, %v571
      %v573 = vpop.f32.mrb[0].mxu0
      %v574 = vpop.f32.mrb[0].mxu0
      %v575 = vadd.f32 0.0, %v574
      %v576 = vpop.f32.mrb[0].mxu0
      %577 = vmatprep.mubr.bf16.mxu0 0
      %578 = vmatmul.mubr.bf16.gmra.mrb[0].mxu0 %v526
      %v579 = vpop.f32.mrb[0].mxu0
      %v580 = vadd.f32 0.0, %v579
      %v581 = vpop.f32.mrb[0].mxu0
      %v582 = vpop.f32.mrb[0].mxu0
      %v583 = vadd.f32 0.0, %v582
      %v584 = vpop.f32.mrb[0].mxu0
      %585 = vmatprep.mubr.bf16.mxu0 0
      %586 = vmatmul.mubr.bf16.gmra.mrb[0].mxu0 %v529
      %v587 = vpop.f32.mrb[0].mxu0
      %v588 = vadd.f32 0.0, %v587
      %v589 = vpop.f32.mrb[0].mxu0
      %v590 = vpop.f32.mrb[0].mxu0
      %v591 = vadd.f32 0.0, %v590
      %v592 = vpop.f32.mrb[0].mxu0
      %593 = vmatprep.mubr.bf16.mxu0 0
      %594 = vmatmul.mubr.bf16.gmra.mrb[0].mxu0 %v532
      %v595 = vpop.f32.mrb[0].mxu0
      %v596 = vadd.f32 0.0, %v595
      %v597 = vpop.f32.mrb[0].mxu0
      %v598 = vpop.f32.mrb[0].mxu0
      %v599 = vadd.f32 0.0, %v598
      %v600 = vpop.f32.mrb[0].mxu0
      %601 = vdwg.mxu0
      %v602 = vadd.f32 %v499, %v572
      %v603 = vadd.f32 %v500, %v575
      %v604 = vadd.f32 %v501, %v580
      %v605 = vadd.f32 %v502, %v583
      %v606 = vadd.f32 %v503, %v588
      %v607 = vadd.f32 %v504, %v591
      %v608 = vadd.f32 %v505, %v596
      %v609 = vadd.f32 %v506, %v599
      %v610 = vld [vmem:[%s507 + $0x1] sm:$0xff]
      %v611 = vld [vmem:[%s507 + $0x11] sm:$0xff]
      %v612 = vld [vmem:[%s507 + $0x21] sm:$0xff]
      %v613 = vld [vmem:[%s507 + $0x31] sm:$0xff]
      %v614 = vld [vmem:[%s507 + $0x41] sm:$0xff]
      %v615 = vld [vmem:[%s507 + $0x51] sm:$0xff]
      %v616 = vld [vmem:[%s507 + $0x61] sm:$0xff]
      %v617 = vld [vmem:[%s507 + $0x71] sm:$0xff]
      %v618 = vpack.c.bf16 %v611, %v610
      %v619 = vpack.c.bf16 %v613, %v612
      %v620 = vpack.c.bf16 %v615, %v614
      %v621 = vpack.c.bf16 %v617, %v616
      %s622 = scalar_lea.vmem %s1, 16
      %v623 = vld [vmem:[%s622] sm:$0xf]
      %v625 = vsel %vm243, %v618, 0
      %v628 = vsel %vm243, %v619, 0
      %v631 = vsel %vm243, %v620, 0
      %v634 = vsel %vm243, %v621, 0
      %v637 = vsel %vm256, %v623, 0
      %639 = vmatprep.subr.bf16.mxu0 0
      %640 = vmatpush1.bf16.msra.mxu0 %v637
      %641 = vmatprep.subr.bf16.mxu0 0
      %642 = vmatpush1.bf16.msra.mxu0 0
      %643 = vmatprep.subr.bf16.mxu0 0
      %644 = vmatpush1.bf16.msra.mxu0 0
      %645 = vmatprep.subr.bf16.mxu0 0
      %646 = vmatpush1.bf16.msra.mxu0 0
      %647 = vmatprep.subr.bf16.mxu0 0
      %648 = vmatpush1.bf16.msra.mxu0 0
      %649 = vmatprep.subr.bf16.mxu0 0
      %650 = vmatpush1.bf16.msra.mxu0 0
      %651 = vmatprep.subr.bf16.mxu0 0
      %652 = vmatpush1.bf16.msra.mxu0 0
      %653 = vmatprep.subr.bf16.mxu0 0
      %654 = vmatpush1.bf16.msra.mxu0 0
      %655 = vmatprep.subr.bf16.mxu0 0
      %656 = vmatpush1.bf16.msra.mxu0 0
      %657 = vmatprep.subr.bf16.mxu0 0
      %658 = vmatpush1.bf16.msra.mxu0 0
      %659 = vmatprep.subr.bf16.mxu0 0
      %660 = vmatpush1.bf16.msra.mxu0 0
      %661 = vmatprep.subr.bf16.mxu0 0
      %662 = vmatpush1.bf16.msra.mxu0 0
      %663 = vmatprep.subr.bf16.mxu0 0
      %664 = vmatpush1.bf16.msra.mxu0 0
      %665 = vmatprep.subr.bf16.mxu0 0
      %666 = vmatpush1.bf16.msra.mxu0 0
      %667 = vmatprep.subr.bf16.mxu0 0
      %668 = vmatpush1.bf16.msra.mxu0 0
      %669 = vmatprep.subr.bf16.mxu0 0
      %670 = vmatpush1.bf16.msra.mxu0 0
      %671 = vmatprep.mubr.bf16.mxu0 0
      %672 = vmatmul.mubr.bf16.gmra.mrb[0].mxu0 %v625
      %v673 = vpop.f32.mrb[0].mxu0
      %v674 = vadd.f32 0.0, %v673
      %v675 = vpop.f32.mrb[0].mxu0
      %v676 = vpop.f32.mrb[0].mxu0
      %v677 = vadd.f32 0.0, %v676
      %v678 = vpop.f32.mrb[0].mxu0
      %679 = vmatprep.mubr.bf16.mxu0 0
      %680 = vmatmul.mubr.bf16.gmra.mrb[0].mxu0 %v628
      %v681 = vpop.f32.mrb[0].mxu0
      %v682 = vadd.f32 0.0, %v681
      %v683 = vpop.f32.mrb[0].mxu0
      %v684 = vpop.f32.mrb[0].mxu0
      %v685 = vadd.f32 0.0, %v684
      %v686 = vpop.f32.mrb[0].mxu0
      %687 = vmatprep.mubr.bf16.mxu0 0
      %688 = vmatmul.mubr.bf16.gmra.mrb[0].mxu0 %v631
      %v689 = vpop.f32.mrb[0].mxu0
      %v690 = vadd.f32 0.0, %v689
      %v691 = vpop.f32.mrb[0].mxu0
      %v692 = vpop.f32.mrb[0].mxu0
      %v693 = vadd.f32 0.0, %v692
      %v694 = vpop.f32.mrb[0].mxu0
      %695 = vmatprep.mubr.bf16.mxu0 0
      %696 = vmatmul.mubr.bf16.gmra.mrb[0].mxu0 %v634
      %v697 = vpop.f32.mrb[0].mxu0
      %v698 = vadd.f32 0.0, %v697
      %v699 = vpop.f32.mrb[0].mxu0
      %v700 = vpop.f32.mrb[0].mxu0
      %v701 = vadd.f32 0.0, %v700
      %v702 = vpop.f32.mrb[0].mxu0
      %703 = vdwg.mxu0
      %v704 = vadd.f32 %v602, %v674
      %v705 = vadd.f32 %v603, %v677
      %v706 = vadd.f32 %v604, %v682
      %v707 = vadd.f32 %v605, %v685
      %v708 = vadd.f32 %v606, %v690
      %v709 = vadd.f32 %v607, %v693
      %v710 = vadd.f32 %v608, %v698
      %v711 = vadd.f32 %v609, %v701
      %v712 = vld [vmem:[%s507 + $0x2] sm:$0xff]
      %v713 = vld [vmem:[%s507 + $0x12] sm:$0xff]
      %v714 = vld [vmem:[%s507 + $0x22] sm:$0xff]
      %v715 = vld [vmem:[%s507 + $0x32] sm:$0xff]
      %v716 = vld [vmem:[%s507 + $0x42] sm:$0xff]
      %v717 = vld [vmem:[%s507 + $0x52] sm:$0xff]
      %v718 = vld [vmem:[%s507 + $0x62] sm:$0xff]
      %v719 = vld [vmem:[%s507 + $0x72] sm:$0xff]
      %v720 = vpack.c.bf16 %v713, %v712
      %v721 = vpack.c.bf16 %v715, %v714
      %v722 = vpack.c.bf16 %v717, %v716
      %v723 = vpack.c.bf16 %v719, %v718
      %s724 = scalar_lea.vmem %s1, 20
      %v725 = vld [vmem:[%s724] sm:$0xf]
      %v727 = vsel %vm243, %v720, 0
      %v730 = vsel %vm243, %v721, 0
      %v733 = vsel %vm243, %v722, 0
      %v736 = vsel %vm243, %v723, 0
      %v739 = vsel %vm256, %v725, 0
      %741 = vmatprep.subr.bf16.mxu0 0
      %742 = vmatpush1.bf16.msra.mxu0 %v739
      %743 = vmatprep.subr.bf16.mxu0 0
      %744 = vmatpush1.bf16.msra.mxu0 0
      %745 = vmatprep.subr.bf16.mxu0 0
      %746 = vmatpush1.bf16.msra.mxu0 0
      %747 = vmatprep.subr.bf16.mxu0 0
      %748 = vmatpush1.bf16.msra.mxu0 0
      %749 = vmatprep.subr.bf16.mxu0 0
      %750 = vmatpush1.bf16.msra.mxu0 0
      %751 = vmatprep.subr.bf16.mxu0 0
      %752 = vmatpush1.bf16.msra.mxu0 0
      %753 = vmatprep.subr.bf16.mxu0 0
      %754 = vmatpush1.bf16.msra.mxu0 0
      %755 = vmatprep.subr.bf16.mxu0 0
      %756 = vmatpush1.bf16.msra.mxu0 0
      %757 = vmatprep.subr.bf16.mxu0 0
      %758 = vmatpush1.bf16.msra.mxu0 0
      %759 = vmatprep.subr.bf16.mxu0 0
      %760 = vmatpush1.bf16.msra.mxu0 0
      %761 = vmatprep.subr.bf16.mxu0 0
      %762 = vmatpush1.bf16.msra.mxu0 0
      %763 = vmatprep.subr.bf16.mxu0 0
      %764 = vmatpush1.bf16.msra.mxu0 0
      %765 = vmatprep.subr.bf16.mxu0 0
      %766 = vmatpush1.bf16.msra.mxu0 0
      %767 = vmatprep.subr.bf16.mxu0 0
      %768 = vmatpush1.bf16.msra.mxu0 0
      %769 = vmatprep.subr.bf16.mxu0 0
      %770 = vmatpush1.bf16.msra.mxu0 0
      %771 = vmatprep.subr.bf16.mxu0 0
      %772 = vmatpush1.bf16.msra.mxu0 0
      %773 = vmatprep.mubr.bf16.mxu0 0
      %774 = vmatmul.mubr.bf16.gmra.mrb[0].mxu0 %v727
      %v775 = vpop.f32.mrb[0].mxu0
      %v776 = vadd.f32 0.0, %v775
      %v777 = vpop.f32.mrb[0].mxu0
      %v778 = vpop.f32.mrb[0].mxu0
      %v779 = vadd.f32 0.0, %v778
      %v780 = vpop.f32.mrb[0].mxu0
      %781 = vmatprep.mubr.bf16.mxu0 0
      %782 = vmatmul.mubr.bf16.gmra.mrb[0].mxu0 %v730
      %v783 = vpop.f32.mrb[0].mxu0
      %v784 = vadd.f32 0.0, %v783
      %v785 = vpop.f32.mrb[0].mxu0
      %v786 = vpop.f32.mrb[0].mxu0
      %v787 = vadd.f32 0.0, %v786
      %v788 = vpop.f32.mrb[0].mxu0
      %789 = vmatprep.mubr.bf16.mxu0 0
      %790 = vmatmul.mubr.bf16.gmra.mrb[0].mxu0 %v733
      %v791 = vpop.f32.mrb[0].mxu0
      %v792 = vadd.f32 0.0, %v791
      %v793 = vpop.f32.mrb[0].mxu0
      %v794 = vpop.f32.mrb[0].mxu0
      %v795 = vadd.f32 0.0, %v794
      %v796 = vpop.f32.mrb[0].mxu0
      %797 = vmatprep.mubr.bf16.mxu0 0
      %798 = vmatmul.mubr.bf16.gmra.mrb[0].mxu0 %v736
      %v799 = vpop.f32.mrb[0].mxu0
      %v800 = vadd.f32 0.0, %v799
      %v801 = vpop.f32.mrb[0].mxu0
      %v802 = vpop.f32.mrb[0].mxu0
      %v803 = vadd.f32 0.0, %v802
      %v804 = vpop.f32.mrb[0].mxu0
      %805 = vdwg.mxu0
      %v806 = vadd.f32 %v704, %v776
      %v807 = vadd.f32 %v705, %v779
      %v808 = vadd.f32 %v706, %v784
      %v809 = vadd.f32 %v707, %v787
      %v810 = vadd.f32 %v708, %v792
      %v811 = vadd.f32 %v709, %v795
      %v812 = vadd.f32 %v710, %v800
      %v813 = vadd.f32 %v711, %v803
      %s814 = scalar_lea.vmem %s203, 32
      %v815 = vld [vmem:[%s814] sm:$0xff]
      %v816 = vld [vmem:[%s814 + $0x10] sm:$0xff]
      %v817 = vld [vmem:[%s814 + $0x20] sm:$0xff]
      %v818 = vld [vmem:[%s814 + $0x30] sm:$0xff]
      %v819 = vld [vmem:[%s814 + $0x40] sm:$0xff]
      %v820 = vld [vmem:[%s814 + $0x50] sm:$0xff]
      %v821 = vld [vmem:[%s814 + $0x60] sm:$0xff]
      %v822 = vld [vmem:[%s814 + $0x70] sm:$0xff]
      %v823 = vpack.c.bf16 %v816, %v815
      %v824 = vpack.c.bf16 %v818, %v817
      %v825 = vpack.c.bf16 %v820, %v819
      %v826 = vpack.c.bf16 %v822, %v821
      %s827 = scalar_lea.vmem %s1, 24
      %v828 = vld [vmem:[%s827] sm:$0xf]
      %v830 = vsel %vm243, %v823, 0
      %v833 = vsel %vm243, %v824, 0
      %v836 = vsel %vm243, %v825, 0
      %v839 = vsel %vm243, %v826, 0
      %v842 = vsel %vm256, %v828, 0
      %844 = vmatprep.subr.bf16.mxu0 0
      %845 = vmatpush1.bf16.msra.mxu0 %v842
      %846 = vmatprep.subr.bf16.mxu0 0
      %847 = vmatpush1.bf16.msra.mxu0 0
      %848 = vmatprep.subr.bf16.mxu0 0
      %849 = vmatpush1.bf16.msra.mxu0 0
      %850 = vmatprep.subr.bf16.mxu0 0
      %851 = vmatpush1.bf16.msra.mxu0 0
      %852 = vmatprep.subr.bf16.mxu0 0
      %853 = vmatpush1.bf16.msra.mxu0 0
      %854 = vmatprep.subr.bf16.mxu0 0
      %855 = vmatpush1.bf16.msra.mxu0 0
      %856 = vmatprep.subr.bf16.mxu0 0
      %857 = vmatpush1.bf16.msra.mxu0 0
      %858 = vmatprep.subr.bf16.mxu0 0
      %859 = vmatpush1.bf16.msra.mxu0 0
      %860 = vmatprep.subr.bf16.mxu0 0
      %861 = vmatpush1.bf16.msra.mxu0 0
      %862 = vmatprep.subr.bf16.mxu0 0
      %863 = vmatpush1.bf16.msra.mxu0 0
      %864 = vmatprep.subr.bf16.mxu0 0
      %865 = vmatpush1.bf16.msra.mxu0 0
      %866 = vmatprep.subr.bf16.mxu0 0
      %867 = vmatpush1.bf16.msra.mxu0 0
      %868 = vmatprep.subr.bf16.mxu0 0
      %869 = vmatpush1.bf16.msra.mxu0 0
      %870 = vmatprep.subr.bf16.mxu0 0
      %871 = vmatpush1.bf16.msra.mxu0 0
      %872 = vmatprep.subr.bf16.mxu0 0
      %873 = vmatpush1.bf16.msra.mxu0 0
      %874 = vmatprep.subr.bf16.mxu0 0
      %875 = vmatpush1.bf16.msra.mxu0 0
      %876 = vmatprep.mubr.bf16.mxu0 0
      %877 = vmatmul.mubr.bf16.gmra.mrb[0].mxu0 %v830
      %v878 = vpop.f32.mrb[0].mxu0
      %v879 = vadd.f32 0.0, %v878
      %v880 = vpop.f32.mrb[0].mxu0
      %v881 = vpop.f32.mrb[0].mxu0
      %v882 = vadd.f32 0.0, %v881
      %v883 = vpop.f32.mrb[0].mxu0
      %884 = vmatprep.mubr.bf16.mxu0 0
      %885 = vmatmul.mubr.bf16.gmra.mrb[0].mxu0 %v833
      %v886 = vpop.f32.mrb[0].mxu0
      %v887 = vadd.f32 0.0, %v886
      %v888 = vpop.f32.mrb[0].mxu0
      %v889 = vpop.f32.mrb[0].mxu0
      %v890 = vadd.f32 0.0, %v889
      %v891 = vpop.f32.mrb[0].mxu0
      %892 = vmatprep.mubr.bf16.mxu0 0
      %893 = vmatmul.mubr.bf16.gmra.mrb[0].mxu0 %v836
      %v894 = vpop.f32.mrb[0].mxu0
      %v895 = vadd.f32 0.0, %v894
      %v896 = vpop.f32.mrb[0].mxu0
      %v897 = vpop.f32.mrb[0].mxu0
      %v898 = vadd.f32 0.0, %v897
      %v899 = vpop.f32.mrb[0].mxu0
      %900 = vmatprep.mubr.bf16.mxu0 0
      %901 = vmatmul.mubr.bf16.gmra.mrb[0].mxu0 %v839
      %v902 = vpop.f32.mrb[0].mxu0
      %v903 = vadd.f32 0.0, %v902
      %v904 = vpop.f32.mrb[0].mxu0
      %v905 = vpop.f32.mrb[0].mxu0
      %v906 = vadd.f32 0.0, %v905
      %v907 = vpop.f32.mrb[0].mxu0
      %908 = vdwg.mxu0
      %v909 = vadd.f32 %v806, %v879
      %v910 = vadd.f32 %v807, %v882
      %v911 = vadd.f32 %v808, %v887
      %v912 = vadd.f32 %v809, %v890
      %v913 = vadd.f32 %v810, %v895
      %v914 = vadd.f32 %v811, %v898
      %v915 = vadd.f32 %v812, %v903
      %v916 = vadd.f32 %v813, %v906
      %v917 = vld [vmem:[%s814 + $0x1] sm:$0xff]
      %v918 = vld [vmem:[%s814 + $0x11] sm:$0xff]
      %v919 = vld [vmem:[%s814 + $0x21] sm:$0xff]
      %v920 = vld [vmem:[%s814 + $0x31] sm:$0xff]
      %v921 = vld [vmem:[%s814 + $0x41] sm:$0xff]
      %v922 = vld [vmem:[%s814 + $0x51] sm:$0xff]
      %v923 = vld [vmem:[%s814 + $0x61] sm:$0xff]
      %v924 = vld [vmem:[%s814 + $0x71] sm:$0xff]
      %v925 = vpack.c.bf16 %v918, %v917
      %v926 = vpack.c.bf16 %v920, %v919
      %v927 = vpack.c.bf16 %v922, %v921
      %v928 = vpack.c.bf16 %v924, %v923
      %s929 = scalar_lea.vmem %s1, 28
      %v930 = vld [vmem:[%s929] sm:$0xf]
      %v932 = vsel %vm243, %v925, 0
      %v935 = vsel %vm243, %v926, 0
      %v938 = vsel %vm243, %v927, 0
      %v941 = vsel %vm243, %v928, 0
      %v944 = vsel %vm256, %v930, 0
      %946 = vmatprep.subr.bf16.mxu0 0
      %947 = vmatpush1.bf16.msra.mxu0 %v944
      %948 = vmatprep.subr.bf16.mxu0 0
      %949 = vmatpush1.bf16.msra.mxu0 0
      %950 = vmatprep.subr.bf16.mxu0 0
      %951 = vmatpush1.bf16.msra.mxu0 0
      %952 = vmatprep.subr.bf16.mxu0 0
      %953 = vmatpush1.bf16.msra.mxu0 0
      %954 = vmatprep.subr.bf16.mxu0 0
      %955 = vmatpush1.bf16.msra.mxu0 0
      %956 = vmatprep.subr.bf16.mxu0 0
      %957 = vmatpush1.bf16.msra.mxu0 0
      %958 = vmatprep.subr.bf16.mxu0 0
      %959 = vmatpush1.bf16.msra.mxu0 0
      %960 = vmatprep.subr.bf16.mxu0 0
      %961 = vmatpush1.bf16.msra.mxu0 0
      %962 = vmatprep.subr.bf16.mxu0 0
      %963 = vmatpush1.bf16.msra.mxu0 0
      %964 = vmatprep.subr.bf16.mxu0 0
      %965 = vmatpush1.bf16.msra.mxu0 0
      %966 = vmatprep.subr.bf16.mxu0 0
      %967 = vmatpush1.bf16.msra.mxu0 0
      %968 = vmatprep.subr.bf16.mxu0 0
      %969 = vmatpush1.bf16.msra.mxu0 0
      %970 = vmatprep.subr.bf16.mxu0 0
      %971 = vmatpush1.bf16.msra.mxu0 0
      %972 = vmatprep.subr.bf16.mxu0 0
      %973 = vmatpush1.bf16.msra.mxu0 0
      %974 = vmatprep.subr.bf16.mxu0 0
      %975 = vmatpush1.bf16.msra.mxu0 0
      %976 = vmatprep.subr.bf16.mxu0 0
      %977 = vmatpush1.bf16.msra.mxu0 0
      %978 = vmatprep.mubr.bf16.mxu0 0
      %979 = vmatmul.mubr.bf16.gmra.mrb[0].mxu0 %v932
      %v980 = vpop.f32.mrb[0].mxu0
      %v981 = vadd.f32 0.0, %v980
      %v982 = vpop.f32.mrb[0].mxu0
      %v983 = vpop.f32.mrb[0].mxu0
      %v984 = vadd.f32 0.0, %v983
      %v985 = vpop.f32.mrb[0].mxu0
      %986 = vmatprep.mubr.bf16.mxu0 0
      %987 = vmatmul.mubr.bf16.gmra.mrb[0].mxu0 %v935
      %v988 = vpop.f32.mrb[0].mxu0
      %v989 = vadd.f32 0.0, %v988
      %v990 = vpop.f32.mrb[0].mxu0
      %v991 = vpop.f32.mrb[0].mxu0
      %v992 = vadd.f32 0.0, %v991
      %v993 = vpop.f32.mrb[0].mxu0
      %994 = vmatprep.mubr.bf16.mxu0 0
      %995 = vmatmul.mubr.bf16.gmra.mrb[0].mxu0 %v938
      %v996 = vpop.f32.mrb[0].mxu0
      %v997 = vadd.f32 0.0, %v996
      %v998 = vpop.f32.mrb[0].mxu0
      %v999 = vpop.f32.mrb[0].mxu0
      %v1000 = vadd.f32 0.0, %v999
      %v1001 = vpop.f32.mrb[0].mxu0
      %1002 = vmatprep.mubr.bf16.mxu0 0
      %1003 = vmatmul.mubr.bf16.gmra.mrb[0].mxu0 %v941
      %v1004 = vpop.f32.mrb[0].mxu0
      %v1005 = vadd.f32 0.0, %v1004
      %v1006 = vpop.f32.mrb[0].mxu0
      %v1007 = vpop.f32.mrb[0].mxu0
      %v1008 = vadd.f32 0.0, %v1007
      %v1009 = vpop.f32.mrb[0].mxu0
      %1010 = vdwg.mxu0
      %v1011 = vadd.f32 %v909, %v981
      %v1012 = vadd.f32 %v910, %v984
      %v1013 = vadd.f32 %v911, %v989
      %v1014 = vadd.f32 %v912, %v992
      %v1015 = vadd.f32 %v913, %v997
      %v1016 = vadd.f32 %v914, %v1000
      %v1017 = vadd.f32 %v915, %v1005
      %v1018 = vadd.f32 %v916, %v1008
      %v1019 = vld [vmem:[%s814 + $0x2] sm:$0xff]
      %v1020 = vld [vmem:[%s814 + $0x12] sm:$0xff]
      %v1021 = vld [vmem:[%s814 + $0x22] sm:$0xff]
      %v1022 = vld [vmem:[%s814 + $0x32] sm:$0xff]
      %v1023 = vld [vmem:[%s814 + $0x42] sm:$0xff]
      %v1024 = vld [vmem:[%s814 + $0x52] sm:$0xff]
      %v1025 = vld [vmem:[%s814 + $0x62] sm:$0xff]
      %v1026 = vld [vmem:[%s814 + $0x72] sm:$0xff]
      %v1027 = vpack.c.bf16 %v1020, %v1019
      %v1028 = vpack.c.bf16 %v1022, %v1021
      %v1029 = vpack.c.bf16 %v1024, %v1023
      %v1030 = vpack.c.bf16 %v1026, %v1025
      %s1031 = scalar_lea.vmem %s1, 32
      %v1032 = vld [vmem:[%s1031] sm:$0xf]
      %v1034 = vsel %vm243, %v1027, 0
      %v1037 = vsel %vm243, %v1028, 0
      %v1040 = vsel %vm243, %v1029, 0
      %v1043 = vsel %vm243, %v1030, 0
      %v1046 = vsel %vm256, %v1032, 0
      %1048 = vmatprep.subr.bf16.mxu0 0
      %1049 = vmatpush1.bf16.msra.mxu0 %v1046
      %1050 = vmatprep.subr.bf16.mxu0 0
      %1051 = vmatpush1.bf16.msra.mxu0 0
      %1052 = vmatprep.subr.bf16.mxu0 0
      %1053 = vmatpush1.bf16.msra.mxu0 0
      %1054 = vmatprep.subr.bf16.mxu0 0
      %1055 = vmatpush1.bf16.msra.mxu0 0
      %1056 = vmatprep.subr.bf16.mxu0 0
      %1057 = vmatpush1.bf16.msra.mxu0 0
      %1058 = vmatprep.subr.bf16.mxu0 0
      %1059 = vmatpush1.bf16.msra.mxu0 0
      %1060 = vmatprep.subr.bf16.mxu0 0
      %1061 = vmatpush1.bf16.msra.mxu0 0
      %1062 = vmatprep.subr.bf16.mxu0 0
      %1063 = vmatpush1.bf16.msra.mxu0 0
      %1064 = vmatprep.subr.bf16.mxu0 0
      %1065 = vmatpush1.bf16.msra.mxu0 0
      %1066 = vmatprep.subr.bf16.mxu0 0
      %1067 = vmatpush1.bf16.msra.mxu0 0
      %1068 = vmatprep.subr.bf16.mxu0 0
      %1069 = vmatpush1.bf16.msra.mxu0 0
      %1070 = vmatprep.subr.bf16.mxu0 0
      %1071 = vmatpush1.bf16.msra.mxu0 0
      %1072 = vmatprep.subr.bf16.mxu0 0
      %1073 = vmatpush1.bf16.msra.mxu0 0
      %1074 = vmatprep.subr.bf16.mxu0 0
      %1075 = vmatpush1.bf16.msra.mxu0 0
      %1076 = vmatprep.subr.bf16.mxu0 0
      %1077 = vmatpush1.bf16.msra.mxu0 0
      %1078 = vmatprep.subr.bf16.mxu0 0
      %1079 = vmatpush1.bf16.msra.mxu0 0
      %1080 = vmatprep.mubr.bf16.mxu0 0
      %1081 = vmatmul.mubr.bf16.gmra.mrb[0].mxu0 %v1034
      %v1082 = vpop.f32.mrb[0].mxu0
      %v1083 = vadd.f32 0.0, %v1082
      %v1084 = vpop.f32.mrb[0].mxu0
      %v1085 = vpop.f32.mrb[0].mxu0
      %v1086 = vadd.f32 0.0, %v1085
      %v1087 = vpop.f32.mrb[0].mxu0
      %1088 = vmatprep.mubr.bf16.mxu0 0
      %1089 = vmatmul.mubr.bf16.gmra.mrb[0].mxu0 %v1037
      %v1090 = vpop.f32.mrb[0].mxu0
      %v1091 = vadd.f32 0.0, %v1090
      %v1092 = vpop.f32.mrb[0].mxu0
      %v1093 = vpop.f32.mrb[0].mxu0
      %v1094 = vadd.f32 0.0, %v1093
      %v1095 = vpop.f32.mrb[0].mxu0
      %1096 = vmatprep.mubr.bf16.mxu0 0
      %1097 = vmatmul.mubr.bf16.gmra.mrb[0].mxu0 %v1040
      %v1098 = vpop.f32.mrb[0].mxu0
      %v1099 = vadd.f32 0.0, %v1098
      %v1100 = vpop.f32.mrb[0].mxu0
      %v1101 = vpop.f32.mrb[0].mxu0
      %v1102 = vadd.f32 0.0, %v1101
      %v1103 = vpop.f32.mrb[0].mxu0
      %1104 = vmatprep.mubr.bf16.mxu0 0
      %1105 = vmatmul.mubr.bf16.gmra.mrb[0].mxu0 %v1043
      %v1106 = vpop.f32.mrb[0].mxu0
      %v1107 = vadd.f32 0.0, %v1106
      %v1108 = vpop.f32.mrb[0].mxu0
      %v1109 = vpop.f32.mrb[0].mxu0
      %v1110 = vadd.f32 0.0, %v1109
      %v1111 = vpop.f32.mrb[0].mxu0
      %1112 = vdwg.mxu0
      %v1113 = vadd.f32 %v1011, %v1083
      %v1114 = vadd.f32 %v1012, %v1086
      %v1115 = vadd.f32 %v1013, %v1091
      %v1116 = vadd.f32 %v1014, %v1094
      %v1117 = vadd.f32 %v1015, %v1099
      %v1118 = vadd.f32 %v1016, %v1102
      %v1119 = vadd.f32 %v1017, %v1107
      %v1120 = vadd.f32 %v1018, %v1110
      %1121 = vst.msk [vmem:[%s208] sm:$0xff] %vm243, %v1113
      %1122 = vst.msk [vmem:[%s208 + $0x8] sm:$0xff] %vm243, %v1114
      %1123 = vst.msk [vmem:[%s208 + $0x10] sm:$0xff] %vm243, %v1115
      %1124 = vst.msk [vmem:[%s208 + $0x18] sm:$0xff] %vm243, %v1116
      %1125 = vst.msk [vmem:[%s208 + $0x20] sm:$0xff] %vm243, %v1117
      %1126 = vst.msk [vmem:[%s208 + $0x28] sm:$0xff] %vm243, %v1118
      %1127 = vst.msk [vmem:[%s208 + $0x30] sm:$0xff] %vm243, %v1119
      %1128 = vst.msk [vmem:[%s208 + $0x38] sm:$0xff] %vm243, %v1120
      %v1129 = vsel %vm243, %v1113, 0.0
      %v1130 = vsel %vm243, %v1114, 0.0
      %v1131 = vadd.f32 %v1129, %v1130
      %v1132 = vsel %vm243, %v1115, 0.0
      %v1133 = vadd.f32 %v1131, %v1132
      %v1134 = vsel %vm243, %v1116, 0.0
      %v1135 = vadd.f32 %v1133, %v1134
      %v1136 = vsel %vm243, %v1117, 0.0
      %v1137 = vadd.f32 %v1135, %v1136
      %v1138 = vsel %vm243, %v1118, 0.0
      %v1139 = vadd.f32 %v1137, %v1138
      %v1140 = vsel %vm243, %v1119, 0.0
      %v1141 = vadd.f32 %v1139, %v1140
      %v1142 = vsel %vm243, %v1120, 0.0
      %v1143 = vadd.f32 %v1141, %v1142
      %v1144 = vrot.slane %v1143, 4
      %v1145 = vadd.f32 %v1143, %v1144
      %v1146 = vrot.slane %v1145, 2
      %v1147 = vadd.f32 %v1145, %v1146
      %v1148 = vrot.slane %v1147, 1
      %v1149 = vadd.f32 %v1147, %v1148
      %vm1150 = vcmask 57344
      %1151 = vst.msk [vmem:[%s211] sm:$0x1] %vm1150, %v1149
      %v1152 = vmul.f32 %v1113, %v1113
      %v1153 = vmul.f32 %v1114, %v1114
      %v1154 = vmul.f32 %v1115, %v1115
      %v1155 = vmul.f32 %v1116, %v1116
      %v1156 = vmul.f32 %v1117, %v1117
      %v1157 = vmul.f32 %v1118, %v1118
      %v1158 = vmul.f32 %v1119, %v1119
      %v1159 = vmul.f32 %v1120, %v1120
      %v1160 = vsel %vm243, %v1152, 0.0
      %v1161 = vsel %vm243, %v1153, 0.0
      %v1162 = vadd.f32 %v1160, %v1161
      %v1163 = vsel %vm243, %v1154, 0.0
      %v1164 = vadd.f32 %v1162, %v1163
      %v1165 = vsel %vm243, %v1155, 0.0
      %v1166 = vadd.f32 %v1164, %v1165
      %v1167 = vsel %vm243, %v1156, 0.0
      %v1168 = vadd.f32 %v1166, %v1167
      %v1169 = vsel %vm243, %v1157, 0.0
      %v1170 = vadd.f32 %v1168, %v1169
      %v1171 = vsel %vm243, %v1158, 0.0
      %v1172 = vadd.f32 %v1170, %v1171
      %v1173 = vsel %vm243, %v1159, 0.0
      %v1174 = vadd.f32 %v1172, %v1173
      %v1175 = vrot.slane %v1174, 4
      %v1176 = vadd.f32 %v1174, %v1175
      %v1177 = vrot.slane %v1176, 2
      %v1178 = vadd.f32 %v1176, %v1177
      %v1179 = vrot.slane %v1178, 1
      %v1180 = vadd.f32 %v1178, %v1179
      %1181 = vst.msk [vmem:[%s214] sm:$0x1] %vm1150, %v1180
      %p1182 = scmp.lt.s32.totalorder %s16, 1
      %s1183 = scalar_select %p1182, %s16, 1
      %s1184 = smul.addr %s1183, 8
      %s1185 = smul.addr %s1184, 8
      %s1186 = scalar_lea.vmem %s2, %s1185
      %p1187 = scmp.lt.s32.totalorder %s16, 1
      %s1188 = scalar_select %p1187, %s16, 1
      %s1189 = scalar_lea.vmem %s3, %s1188
      %p1190 = scmp.lt.s32.totalorder %s16, 1
      %s1191 = scalar_select %p1190, %s16, 1
      %s1192 = scalar_lea.vmem %s4, %s1191
      // Predicated region
      $region29: #{res_block_forward.8} parent=27 // pred_check
        %p1193 = pneg %p81
      $region30: #{res_block_forward.8} parent=27 // pred_check_branch
        %1195 = sbr.rel (%p1193) target = $region32
      $region31: #{res_block_forward.8} parent=27 // pred_region
        _
      $region32: #{res_block_forward.8} parent=27 // pred_fallthru
        _
      // Predicated region
      $region33: #{res_block_forward.8} parent=27 // pred_check
        %p1196 = pneg %p107
      $region34: #{res_block_forward.8} parent=27 // pred_check_branch
        %1198 = sbr.rel (%p1196) target = $region36
      $region35: #{res_block_forward.8} parent=27 // pred_region
        _
      $region36: #{res_block_forward.8} parent=27 // pred_fallthru
        _
      // Predicated region
      $region37: #{res_block_forward.8} parent=27 // pred_check
        %p1199 = pneg %p133
      $region38: #{res_block_forward.8} parent=27 // pred_check_branch
        %1201 = sbr.rel (%p1199) target = $region40
      $region39: #{res_block_forward.8} parent=27 // pred_region
        _
      $region40: #{res_block_forward.8} parent=27 // pred_fallthru
        _
    $region28: #{res_block_forward.8} parent=5 // pred_fallthru
      _
    %p1202 = scmp.le.s32.totalorder 2, %s11
    // Predicated region
    $region41: #{res_block_forward.8} parent=5 // pred_check
      %p1203 = pneg %p1202
    $region42: #{res_block_forward.8} parent=5 // pred_check_branch
      %1205 = sbr.rel (%p1203) target = $region44
    $region43: #{res_block_forward.8} parent=5 // pred_region
      %s1206 = ssub.s32 %s11, 2
      // Predicated region
      $region45: #{res_block_forward.8} parent=43 // pred_check
        %p1207 = pneg %p87
      $region46: #{res_block_forward.8} parent=43 // pred_check_branch
        %1209 = sbr.rel (%p1207) target = $region48
      $region47: #{res_block_forward.8} parent=43 // pred_region
        %p1210 = scmp.lt.s32.totalorder %s17, 1
        %s1211 = scalar_select %p1210, %s17, 1
        %s1212 = smul.addr %s1211, 8
        %s1213 = smul.addr %s1212, 8
        %s1214 = scalar_lea.vmem %s2, %s1213
      $region48: #{res_block_forward.8} parent=43 // pred_fallthru
        _
      // Predicated region
      $region49: #{res_block_forward.8} parent=43 // pred_check
        %p1215 = pneg %p113
      $region50: #{res_block_forward.8} parent=43 // pred_check_branch
        %1217 = sbr.rel (%p1215) target = $region52
      $region51: #{res_block_forward.8} parent=43 // pred_region
        %p1218 = scmp.lt.s32.totalorder %s17, 1
        %s1219 = scalar_select %p1218, %s17, 1
        %s1220 = scalar_lea.vmem %s3, %s1219
      $region52: #{res_block_forward.8} parent=43 // pred_fallthru
        _
      // Predicated region
      $region53: #{res_block_forward.8} parent=43 // pred_check
        %p1221 = pneg %p139
      $region54: #{res_block_forward.8} parent=43 // pred_check_branch
        %1223 = sbr.rel (%p1221) target = $region56
      $region55: #{res_block_forward.8} parent=43 // pred_region
        %p1224 = scmp.lt.s32.totalorder %s17, 1
        %s1225 = scalar_select %p1224, %s17, 1
        %s1226 = scalar_lea.vmem %s4, %s1225
      $region56: #{res_block_forward.8} parent=43 // pred_fallthru
        _
    $region44: #{res_block_forward.8} parent=5 // pred_fallthru
      _
  $region6: #{res_block_forward.8} parent=0 // loop_footer
    %s15 = sadd.s32 1, %s11
  $region7: #{res_block_forward.8} parent=0 // loop_footer_branch
    %10 = sbr.rel target = $region3
  $region8: #{res_block_forward.8} parent=0 // loop_exit
    _

</llo_original>
